<compile_context>
chip_gen: v7x
topology: tpu7x:2x2x1
jax: 0.10.0
libtpu: 0.0.40
codegen_flags: <defaults>
</compile_context>

<pallas_src>
import numpy as np
import jax
import jax.numpy as jnp
from jax import lax
from jax.experimental import pallas as pl
from jax.experimental.pallas import tpu as pltpu


def attention_lstm_kernel(x_ref, w_ih_ref, w_hh_ref, b_ref,
                          w_att_ref, b_att_ref, w_fc_ref, b_fc_ref,
                          out_ref, hs_ref):
    """Feature-major layout (features on sublanes, batch/time on lanes).

       x_ref     : (IN, T*B)   time-major-flattened input, column = t*B + b
       w_ih_ref  : (4H, IN)    torch lstm.weight_ih_l0, gate row blocks [i|f|g|o]
       w_hh_ref  : (4H, H)     torch lstm.weight_hh_l0
       b_ref     : (4H, 1)     b_ih + b_hh
       w_att_ref : (H, H)      torch attention.weight
       b_att_ref : (H, 1)
       w_fc_ref  : (OUT, H)    torch fc.weight
       b_fc_ref  : (OUT, 1)
       out_ref   : (OUT, B)
       hs_ref    : (H, T*B)    VMEM scratch holding every h_t for the stacked
                               attention matmul."""
    TB = x_ref.shape[1]
    H = w_hh_ref.shape[1]
    B = out_ref.shape[1]
    T = TB // B

    # ---- hoisted input projection: one MXU matmul for all timesteps ----
    xproj = (jnp.dot(w_ih_ref[...], x_ref[...],
                     preferred_element_type=jnp.float32)
             + b_ref[...])                                    # (4H, T*B)

    # Per-step column blocks.  These do NOT depend on h, so they sit off the
    # recurrent critical path (the scheduler overlaps them with the chain).
    xs = [xproj[:, t * B:(t + 1) * B] for t in range(T)]      # each (4H, B)

    w_hh = w_hh_ref[...]

    # ---- recurrence, fully unrolled (T is a static Python int) ----
    # Gate extraction = sublane slices at multiples of H -> tile-aligned, free.
    # t = 0: h0 = c0 = 0, so the recurrent dot and the f*c term vanish.
    g0 = xs[0]
    i_g = jax.nn.sigmoid(g0[0:H, :])
    g_g = jnp.tanh(g0[2 * H:3 * H, :])
    o_g = jax.nn.sigmoid(g0[3 * H:4 * H, :])
    c = i_g * g_g
    h = o_g * jnp.tanh(c)
    hs = [h]
    hs_ref[:, 0:B] = h

    for t in range(1, T):
        gates = (jnp.dot(w_hh, h, preferred_element_type=jnp.float32)
                 + xs[t])                                     # (4H, B): one fused dot/step
        i_g = jax.nn.sigmoid(gates[0:H, :])
        f_g = jax.nn.sigmoid(gates[H:2 * H, :])
        g_g = jnp.tanh(gates[2 * H:3 * H, :])
        o_g = jax.nn.sigmoid(gates[3 * H:4 * H, :])
        c = f_g * c + i_g * g_g
        h = o_g * jnp.tanh(c)
        hs.append(h)
        hs_ref[:, t * B:(t + 1) * B] = h                      # stash for stacked att

    # ---- attention projection: ONE stacked MXU matmul over all timesteps ----
    att_all = (jnp.dot(w_att_ref[...], hs_ref[...],
                       preferred_element_type=jnp.float32)
               + b_att_ref[...])                              # (H, T*B), single bias add

    # ---- softmax over time (torch dim=1 for batch_first) ----
    atts = [att_all[:, t * B:(t + 1) * B] for t in range(T)]  # off the critical path
    m = atts[0]
    for t in range(1, T):
        m = jnp.maximum(m, atts[t])
    es = [jnp.exp(atts[t] - m) for t in range(T)]
    denom = es[0]
    for t in range(1, T):
        denom = denom + es[t]
    # Exact reciprocal: the approximate EUP one sat close to the 1e-3 tolerance.
    inv = pl.reciprocal(denom, approx=False)

    applied = es[0] * hs[0]
    for t in range(1, T):
        applied = applied + es[t] * hs[t]
    applied = applied * inv                                   # (H, B)

    out_ref[...] = (jnp.dot(w_fc_ref[...], applied,
                            preferred_element_type=jnp.float32)
                    + b_fc_ref[...])                          # (OUT, B)


def attention_lstm(x, params):
    """x: (B, T, IN) float32 -> (B, OUT) float32."""
    B, T, IN = x.shape
    H = params['w_hh'].shape[1]
    OUT = params['w_fc'].shape[0]

    # Feature-major, time-flattened input: column index = t*B + b.
    # (At production sizes fold this transpose into the kernel via a BlockSpec
    #  index_map over T instead of paying an extra HBM pass here.)
    x_t = jnp.transpose(x, (2, 1, 0)).reshape(IN, T * B).astype(jnp.float32)

    vmem = pl.BlockSpec(memory_space=pltpu.MemorySpace.VMEM)
    out_t = pl.pallas_call(
        attention_lstm_kernel,
        out_shape=jax.ShapeDtypeStruct((OUT, B), jnp.float32),
        in_specs=[vmem] * 8,
        out_specs=vmem,
        scratch_shapes=[pltpu.VMEM((H, T * B), jnp.float32)],
    )(x_t, params['w_ih'], params['w_hh'], params['b'],
      params['w_att'], params['b_att'], params['w_fc'], params['b_fc'])
    return out_t.T                                            # (B, OUT)


def init_params(key, n_hidden, n_in=3, n_out=6):
    """Deterministic synthetic init (uniform(-1/sqrt(H), 1/sqrt(H)), like torch)."""
    H = n_hidden
    bound = 1.0 / np.sqrt(H)
    keys = jax.random.split(key, 8)
    u = lambda kk, shape: jax.random.uniform(kk, shape, jnp.float32, -bound, bound)

    w_ih = u(keys[0], (4 * H, n_in))      # torch lstm.weight_ih_l0, gate rows i,f,g,o
    w_hh = u(keys[1], (4 * H, H))         # torch lstm.weight_hh_l0
    b_ih = u(keys[2], (4 * H,))
    b_hh = u(keys[3], (4 * H,))
    w_att = u(keys[4], (H, H))            # torch attention.weight
    b_att = u(keys[5], (H,))
    w_fc = u(keys[6], (n_out, H))         # torch fc.weight
    b_fc = u(keys[7], (n_out,))

    # Kernel consumes the weights in native torch (out, in) orientation; only the
    # biases are fused/reshaped to column vectors.
    kernel_params = dict(
        w_ih=w_ih,                                # (4H, IN)
        w_hh=w_hh,                                # (4H, H)
        b=(b_ih + b_hh).reshape(4 * H, 1),        # (4H, 1)
        w_att=w_att,                              # (H, H)
        b_att=b_att.reshape(H, 1),                # (H, 1)
        w_fc=w_fc,                                # (OUT, H)
        b_fc=b_fc.reshape(n_out, 1),              # (OUT, 1)
    )
    raw = dict(w_ih=w_ih, w_hh=w_hh, b_ih=b_ih, b_hh=b_hh,
               w_att=w_att, b_att=b_att, w_fc=w_fc, b_fc=b_fc)
    return kernel_params, raw


def reference_forward(x, raw):
    """Plain-JAX reference replicating the PyTorch forward."""
    B, T, IN = x.shape
    H = raw['w_hh'].shape[1]

    def cell(carry, x_t):
        h, c = carry
        gates = (x_t @ raw['w_ih'].T + raw['b_ih']
                 + h @ raw['w_hh'].T + raw['b_hh'])
        i, f, g, o = jnp.split(gates, 4, axis=-1)
        c = jax.nn.sigmoid(f) * c + jax.nn.sigmoid(i) * jnp.tanh(g)
        h = jax.nn.sigmoid(o) * jnp.tanh(c)
        return (h, c), h

    h0 = jnp.zeros((B, H), jnp.float32)
    c0 = jnp.zeros((B, H), jnp.float32)
    _, hs = lax.scan(cell, (h0, c0), jnp.transpose(x, (1, 0, 2)))
    lstm_out = jnp.transpose(hs, (1, 0, 2))                  # (B, T, H)
    att = lstm_out @ raw['w_att'].T + raw['b_att']
    aw = jax.nn.softmax(att, axis=1)
    applied = jnp.sum(aw * lstm_out, axis=1)
    return applied @ raw['w_fc'].T + raw['b_fc']


if __name__ == "__main__":
    B, T, IN, H, OUT = 2, 8, 3, 32, 6

    key = jax.random.PRNGKey(0)
    k_x, k_p = jax.random.split(key)
    x = jax.random.normal(k_x, (B, T, IN), dtype=jnp.float32)
    params, raw = init_params(k_p, H, IN, OUT)

    out = attention_lstm(x, params)
    out = jax.block_until_ready(out)
    assert out.shape == (B, OUT)

    ref = jax.block_until_ready(reference_forward(x, raw))
    np.testing.assert_allclose(np.asarray(out), np.asarray(ref),
                               rtol=1e-3, atol=1e-3)
    print("KERNEL_OK")
</pallas_src>

<mosaic_0001>
module attributes {stable_mosaic.version = 11 : i64} {
  func.func @attention_lstm_kernel(%arg0: memref<3x16xf32, #tpu.memory_space<vmem>>, %arg1: memref<128x3xf32, #tpu.memory_space<vmem>>, %arg2: memref<128x32xf32, #tpu.memory_space<vmem>>, %arg3: memref<128x1xf32, #tpu.memory_space<vmem>>, %arg4: memref<32x32xf32, #tpu.memory_space<vmem>>, %arg5: memref<32x1xf32, #tpu.memory_space<vmem>>, %arg6: memref<6x32xf32, #tpu.memory_space<vmem>>, %arg7: memref<6x1xf32, #tpu.memory_space<vmem>>, %arg8: memref<6x2xf32, #tpu.memory_space<vmem>>, %arg9: memref<32x16xf32, #tpu.memory_space<vmem>>) attributes {dimension_semantics = [], scalar_prefetch = 0 : i64, scratch_operands = 1 : i64, tpu.core_type = #tpu.core_type<tc>} {
    %c0 = arith.constant 0 : index
    %c0_0 = arith.constant 0 : index
    %0 = vector.load %arg1[%c0, %c0_0] : memref<128x3xf32, #tpu.memory_space<vmem>>, vector<128x3xf32>
    %c0_1 = arith.constant 0 : index
    %c0_2 = arith.constant 0 : index
    %1 = vector.load %arg0[%c0_1, %c0_2] : memref<3x16xf32, #tpu.memory_space<vmem>>, vector<3x16xf32>
    %cst = arith.constant dense<0.000000e+00> : vector<128x16xf32>
    %2 = tpu.matmul %0, %1, %cst {dimension_numbers = #tpu.dot_dimension_numbers<[1], [0], [0], [1], [0, 0, 1, 1], [], []>} : vector<128x3xf32>, vector<3x16xf32>, vector<128x16xf32> -> vector<128x16xf32>
    %c0_3 = arith.constant 0 : index
    %c0_4 = arith.constant 0 : index
    %3 = vector.load %arg3[%c0_3, %c0_4] : memref<128x1xf32, #tpu.memory_space<vmem>>, vector<128x1xf32>
    %4 = vector.broadcast %3 : vector<128x1xf32> to vector<128x16xf32>
    %5 = arith.addf %2, %4 : vector<128x16xf32>
    %6 = vector.extract_strided_slice %5 {offsets = [0, 0], sizes = [128, 2], strides = [1, 1]} : vector<128x16xf32> to vector<128x2xf32>
    %7 = vector.extract_strided_slice %5 {offsets = [0, 2], sizes = [128, 2], strides = [1, 1]} : vector<128x16xf32> to vector<128x2xf32>
    %8 = vector.extract_strided_slice %5 {offsets = [0, 4], sizes = [128, 2], strides = [1, 1]} : vector<128x16xf32> to vector<128x2xf32>
    %9 = vector.extract_strided_slice %5 {offsets = [0, 6], sizes = [128, 2], strides = [1, 1]} : vector<128x16xf32> to vector<128x2xf32>
    %10 = vector.extract_strided_slice %5 {offsets = [0, 8], sizes = [128, 2], strides = [1, 1]} : vector<128x16xf32> to vector<128x2xf32>
    %11 = vector.extract_strided_slice %5 {offsets = [0, 10], sizes = [128, 2], strides = [1, 1]} : vector<128x16xf32> to vector<128x2xf32>
    %12 = vector.extract_strided_slice %5 {offsets = [0, 12], sizes = [128, 2], strides = [1, 1]} : vector<128x16xf32> to vector<128x2xf32>
    %13 = vector.extract_strided_slice %5 {offsets = [0, 14], sizes = [128, 2], strides = [1, 1]} : vector<128x16xf32> to vector<128x2xf32>
    %c0_5 = arith.constant 0 : index
    %c0_6 = arith.constant 0 : index
    %14 = vector.load %arg2[%c0_5, %c0_6] : memref<128x32xf32, #tpu.memory_space<vmem>>, vector<128x32xf32>
    %15 = vector.extract_strided_slice %6 {offsets = [0, 0], sizes = [32, 2], strides = [1, 1]} : vector<128x2xf32> to vector<32x2xf32>
    %16 = arith.negf %15 : vector<32x2xf32>
    %17 = math.exp %16 : vector<32x2xf32>
    %cst_7 = arith.constant 1.000000e+00 : f32
    %18 = vector.broadcast %cst_7 : f32 to vector<32x2xf32>
    %19 = arith.addf %18, %17 : vector<32x2xf32>
    %20 = arith.divf %18, %19 : vector<32x2xf32>
    %21 = vector.extract_strided_slice %6 {offsets = [64, 0], sizes = [32, 2], strides = [1, 1]} : vector<128x2xf32> to vector<32x2xf32>
    %22 = math.tanh %21 : vector<32x2xf32>
    %23 = vector.extract_strided_slice %6 {offsets = [96, 0], sizes = [32, 2], strides = [1, 1]} : vector<128x2xf32> to vector<32x2xf32>
    %24 = arith.negf %23 : vector<32x2xf32>
    %25 = math.exp %24 : vector<32x2xf32>
    %cst_8 = arith.constant 1.000000e+00 : f32
    %26 = vector.broadcast %cst_8 : f32 to vector<32x2xf32>
    %27 = arith.addf %26, %25 : vector<32x2xf32>
    %28 = arith.divf %26, %27 : vector<32x2xf32>
    %29 = arith.mulf %20, %22 : vector<32x2xf32>
    %30 = math.tanh %29 : vector<32x2xf32>
    %31 = arith.mulf %28, %30 : vector<32x2xf32>
    %c0_9 = arith.constant 0 : index
    %c0_10 = arith.constant 0 : index
    %32 = vector.load %arg9[%c0_9, %c0_10] : memref<32x16xf32, #tpu.memory_space<vmem>>, vector<32x2xf32>
    tpu.vector_store %arg9[%c0_9, %c0_10], %31 {strides = array<i32>} : memref<32x16xf32, #tpu.memory_space<vmem>>, vector<32x2xf32>,
    %cst_11 = arith.constant dense<0.000000e+00> : vector<128x2xf32>
    %33 = tpu.matmul %14, %31, %cst_11 {dimension_numbers = #tpu.dot_dimension_numbers<[1], [0], [0], [1], [0, 0, 1, 1], [], []>} : vector<128x32xf32>, vector<32x2xf32>, vector<128x2xf32> -> vector<128x2xf32>
    %34 = arith.addf %33, %7 : vector<128x2xf32>
    %35 = vector.extract_strided_slice %34 {offsets = [0, 0], sizes = [32, 2], strides = [1, 1]} : vector<128x2xf32> to vector<32x2xf32>
    %36 = arith.negf %35 : vector<32x2xf32>
    %37 = math.exp %36 : vector<32x2xf32>
    %cst_12 = arith.constant 1.000000e+00 : f32
    %38 = vector.broadcast %cst_12 : f32 to vector<32x2xf32>
    %39 = arith.addf %38, %37 : vector<32x2xf32>
    %40 = arith.divf %38, %39 : vector<32x2xf32>
    %41 = vector.extract_strided_slice %34 {offsets = [32, 0], sizes = [32, 2], strides = [1, 1]} : vector<128x2xf32> to vector<32x2xf32>
    %42 = arith.negf %41 : vector<32x2xf32>
    %43 = math.exp %42 : vector<32x2xf32>
    %cst_13 = arith.constant 1.000000e+00 : f32
    %44 = vector.broadcast %cst_13 : f32 to vector<32x2xf32>
    %45 = arith.addf %44, %43 : vector<32x2xf32>
    %46 = arith.divf %44, %45 : vector<32x2xf32>
    %47 = vector.extract_strided_slice %34 {offsets = [64, 0], sizes = [32, 2], strides = [1, 1]} : vector<128x2xf32> to vector<32x2xf32>
    %48 = math.tanh %47 : vector<32x2xf32>
    %49 = vector.extract_strided_slice %34 {offsets = [96, 0], sizes = [32, 2], strides = [1, 1]} : vector<128x2xf32> to vector<32x2xf32>
    %50 = arith.negf %49 : vector<32x2xf32>
    %51 = math.exp %50 : vector<32x2xf32>
    %cst_14 = arith.constant 1.000000e+00 : f32
    %52 = vector.broadcast %cst_14 : f32 to vector<32x2xf32>
    %53 = arith.addf %52, %51 : vector<32x2xf32>
    %54 = arith.divf %52, %53 : vector<32x2xf32>
    %55 = arith.mulf %46, %29 : vector<32x2xf32>
    %56 = arith.mulf %40, %48 : vector<32x2xf32>
    %57 = arith.addf %55, %56 : vector<32x2xf32>
    %58 = math.tanh %57 : vector<32x2xf32>
    %59 = arith.mulf %54, %58 : vector<32x2xf32>
    %c0_15 = arith.constant 0 : index
    %c2 = arith.constant 2 : index
    %60 = vector.load %arg9[%c0_15, %c2] : memref<32x16xf32, #tpu.memory_space<vmem>>, vector<32x2xf32>
    tpu.vector_store %arg9[%c0_15, %c2], %59 {strides = array<i32>} : memref<32x16xf32, #tpu.memory_space<vmem>>, vector<32x2xf32>,
    %cst_16 = arith.constant dense<0.000000e+00> : vector<128x2xf32>
    %61 = tpu.matmul %14, %59, %cst_16 {dimension_numbers = #tpu.dot_dimension_numbers<[1], [0], [0], [1], [0, 0, 1, 1], [], []>} : vector<128x32xf32>, vector<32x2xf32>, vector<128x2xf32> -> vector<128x2xf32>
    %62 = arith.addf %61, %8 : vector<128x2xf32>
    %63 = vector.extract_strided_slice %62 {offsets = [0, 0], sizes = [32, 2], strides = [1, 1]} : vector<128x2xf32> to vector<32x2xf32>
    %64 = arith.negf %63 : vector<32x2xf32>
    %65 = math.exp %64 : vector<32x2xf32>
    %cst_17 = arith.constant 1.000000e+00 : f32
    %66 = vector.broadcast %cst_17 : f32 to vector<32x2xf32>
    %67 = arith.addf %66, %65 : vector<32x2xf32>
    %68 = arith.divf %66, %67 : vector<32x2xf32>
    %69 = vector.extract_strided_slice %62 {offsets = [32, 0], sizes = [32, 2], strides = [1, 1]} : vector<128x2xf32> to vector<32x2xf32>
    %70 = arith.negf %69 : vector<32x2xf32>
    %71 = math.exp %70 : vector<32x2xf32>
    %cst_18 = arith.constant 1.000000e+00 : f32
    %72 = vector.broadcast %cst_18 : f32 to vector<32x2xf32>
    %73 = arith.addf %72, %71 : vector<32x2xf32>
    %74 = arith.divf %72, %73 : vector<32x2xf32>
    %75 = vector.extract_strided_slice %62 {offsets = [64, 0], sizes = [32, 2], strides = [1, 1]} : vector<128x2xf32> to vector<32x2xf32>
    %76 = math.tanh %75 : vector<32x2xf32>
    %77 = vector.extract_strided_slice %62 {offsets = [96, 0], sizes = [32, 2], strides = [1, 1]} : vector<128x2xf32> to vector<32x2xf32>
    %78 = arith.negf %77 : vector<32x2xf32>
    %79 = math.exp %78 : vector<32x2xf32>
    %cst_19 = arith.constant 1.000000e+00 : f32
    %80 = vector.broadcast %cst_19 : f32 to vector<32x2xf32>
    %81 = arith.addf %80, %79 : vector<32x2xf32>
    %82 = arith.divf %80, %81 : vector<32x2xf32>
    %83 = arith.mulf %74, %57 : vector<32x2xf32>
    %84 = arith.mulf %68, %76 : vector<32x2xf32>
    %85 = arith.addf %83, %84 : vector<32x2xf32>
    %86 = math.tanh %85 : vector<32x2xf32>
    %87 = arith.mulf %82, %86 : vector<32x2xf32>
    %c0_20 = arith.constant 0 : index
    %c4 = arith.constant 4 : index
    %88 = vector.load %arg9[%c0_20, %c4] : memref<32x16xf32, #tpu.memory_space<vmem>>, vector<32x2xf32>
    tpu.vector_store %arg9[%c0_20, %c4], %87 {strides = array<i32>} : memref<32x16xf32, #tpu.memory_space<vmem>>, vector<32x2xf32>,
    %cst_21 = arith.constant dense<0.000000e+00> : vector<128x2xf32>
    %89 = tpu.matmul %14, %87, %cst_21 {dimension_numbers = #tpu.dot_dimension_numbers<[1], [0], [0], [1], [0, 0, 1, 1], [], []>} : vector<128x32xf32>, vector<32x2xf32>, vector<128x2xf32> -> vector<128x2xf32>
    %90 = arith.addf %89, %9 : vector<128x2xf32>
    %91 = vector.extract_strided_slice %90 {offsets = [0, 0], sizes = [32, 2], strides = [1, 1]} : vector<128x2xf32> to vector<32x2xf32>
    %92 = arith.negf %91 : vector<32x2xf32>
    %93 = math.exp %92 : vector<32x2xf32>
    %cst_22 = arith.constant 1.000000e+00 : f32
    %94 = vector.broadcast %cst_22 : f32 to vector<32x2xf32>
    %95 = arith.addf %94, %93 : vector<32x2xf32>
    %96 = arith.divf %94, %95 : vector<32x2xf32>
    %97 = vector.extract_strided_slice %90 {offsets = [32, 0], sizes = [32, 2], strides = [1, 1]} : vector<128x2xf32> to vector<32x2xf32>
    %98 = arith.negf %97 : vector<32x2xf32>
    %99 = math.exp %98 : vector<32x2xf32>
    %cst_23 = arith.constant 1.000000e+00 : f32
    %100 = vector.broadcast %cst_23 : f32 to vector<32x2xf32>
    %101 = arith.addf %100, %99 : vector<32x2xf32>
    %102 = arith.divf %100, %101 : vector<32x2xf32>
    %103 = vector.extract_strided_slice %90 {offsets = [64, 0], sizes = [32, 2], strides = [1, 1]} : vector<128x2xf32> to vector<32x2xf32>
    %104 = math.tanh %103 : vector<32x2xf32>
    %105 = vector.extract_strided_slice %90 {offsets = [96, 0], sizes = [32, 2], strides = [1, 1]} : vector<128x2xf32> to vector<32x2xf32>
    %106 = arith.negf %105 : vector<32x2xf32>
    %107 = math.exp %106 : vector<32x2xf32>
    %cst_24 = arith.constant 1.000000e+00 : f32
    %108 = vector.broadcast %cst_24 : f32 to vector<32x2xf32>
    %109 = arith.addf %108, %107 : vector<32x2xf32>
    %110 = arith.divf %108, %109 : vector<32x2xf32>
    %111 = arith.mulf %102, %85 : vector<32x2xf32>
    %112 = arith.mulf %96, %104 : vector<32x2xf32>
    %113 = arith.addf %111, %112 : vector<32x2xf32>
    %114 = math.tanh %113 : vector<32x2xf32>
    %115 = arith.mulf %110, %114 : vector<32x2xf32>
    %c0_25 = arith.constant 0 : index
    %c6 = arith.constant 6 : index
    %116 = vector.load %arg9[%c0_25, %c6] : memref<32x16xf32, #tpu.memory_space<vmem>>, vector<32x2xf32>
    tpu.vector_store %arg9[%c0_25, %c6], %115 {strides = array<i32>} : memref<32x16xf32, #tpu.memory_space<vmem>>, vector<32x2xf32>,
    %cst_26 = arith.constant dense<0.000000e+00> : vector<128x2xf32>
    %117 = tpu.matmul %14, %115, %cst_26 {dimension_numbers = #tpu.dot_dimension_numbers<[1], [0], [0], [1], [0, 0, 1, 1], [], []>} : vector<128x32xf32>, vector<32x2xf32>, vector<128x2xf32> -> vector<128x2xf32>
    %118 = arith.addf %117, %10 : vector<128x2xf32>
    %119 = vector.extract_strided_slice %118 {offsets = [0, 0], sizes = [32, 2], strides = [1, 1]} : vector<128x2xf32> to vector<32x2xf32>
    %120 = arith.negf %119 : vector<32x2xf32>
    %121 = math.exp %120 : vector<32x2xf32>
    %cst_27 = arith.constant 1.000000e+00 : f32
    %122 = vector.broadcast %cst_27 : f32 to vector<32x2xf32>
    %123 = arith.addf %122, %121 : vector<32x2xf32>
    %124 = arith.divf %122, %123 : vector<32x2xf32>
    %125 = vector.extract_strided_slice %118 {offsets = [32, 0], sizes = [32, 2], strides = [1, 1]} : vector<128x2xf32> to vector<32x2xf32>
    %126 = arith.negf %125 : vector<32x2xf32>
    %127 = math.exp %126 : vector<32x2xf32>
    %cst_28 = arith.constant 1.000000e+00 : f32
    %128 = vector.broadcast %cst_28 : f32 to vector<32x2xf32>
    %129 = arith.addf %128, %127 : vector<32x2xf32>
    %130 = arith.divf %128, %129 : vector<32x2xf32>
    %131 = vector.extract_strided_slice %118 {offsets = [64, 0], sizes = [32, 2], strides = [1, 1]} : vector<128x2xf32> to vector<32x2xf32>
    %132 = math.tanh %131 : vector<32x2xf32>
    %133 = vector.extract_strided_slice %118 {offsets = [96, 0], sizes = [32, 2], strides = [1, 1]} : vector<128x2xf32> to vector<32x2xf32>
    %134 = arith.negf %133 : vector<32x2xf32>
    %135 = math.exp %134 : vector<32x2xf32>
    %cst_29 = arith.constant 1.000000e+00 : f32
    %136 = vector.broadcast %cst_29 : f32 to vector<32x2xf32>
    %137 = arith.addf %136, %135 : vector<32x2xf32>
    %138 = arith.divf %136, %137 : vector<32x2xf32>
    %139 = arith.mulf %130, %113 : vector<32x2xf32>
    %140 = arith.mulf %124, %132 : vector<32x2xf32>
    %141 = arith.addf %139, %140 : vector<32x2xf32>
    %142 = math.tanh %141 : vector<32x2xf32>
    %143 = arith.mulf %138, %142 : vector<32x2xf32>
    %c0_30 = arith.constant 0 : index
    %c8 = arith.constant 8 : index
    %144 = vector.load %arg9[%c0_30, %c8] : memref<32x16xf32, #tpu.memory_space<vmem>>, vector<32x2xf32>
    tpu.vector_store %arg9[%c0_30, %c8], %143 {strides = array<i32>} : memref<32x16xf32, #tpu.memory_space<vmem>>, vector<32x2xf32>,
    %cst_31 = arith.constant dense<0.000000e+00> : vector<128x2xf32>
    %145 = tpu.matmul %14, %143, %cst_31 {dimension_numbers = #tpu.dot_dimension_numbers<[1], [0], [0], [1], [0, 0, 1, 1], [], []>} : vector<128x32xf32>, vector<32x2xf32>, vector<128x2xf32> -> vector<128x2xf32>
    %146 = arith.addf %145, %11 : vector<128x2xf32>
    %147 = vector.extract_strided_slice %146 {offsets = [0, 0], sizes = [32, 2], strides = [1, 1]} : vector<128x2xf32> to vector<32x2xf32>
    %148 = arith.negf %147 : vector<32x2xf32>
    %149 = math.exp %148 : vector<32x2xf32>
    %cst_32 = arith.constant 1.000000e+00 : f32
    %150 = vector.broadcast %cst_32 : f32 to vector<32x2xf32>
    %151 = arith.addf %150, %149 : vector<32x2xf32>
    %152 = arith.divf %150, %151 : vector<32x2xf32>
    %153 = vector.extract_strided_slice %146 {offsets = [32, 0], sizes = [32, 2], strides = [1, 1]} : vector<128x2xf32> to vector<32x2xf32>
    %154 = arith.negf %153 : vector<32x2xf32>
    %155 = math.exp %154 : vector<32x2xf32>
    %cst_33 = arith.constant 1.000000e+00 : f32
    %156 = vector.broadcast %cst_33 : f32 to vector<32x2xf32>
    %157 = arith.addf %156, %155 : vector<32x2xf32>
    %158 = arith.divf %156, %157 : vector<32x2xf32>
    %159 = vector.extract_strided_slice %146 {offsets = [64, 0], sizes = [32, 2], strides = [1, 1]} : vector<128x2xf32> to vector<32x2xf32>
    %160 = math.tanh %159 : vector<32x2xf32>
    %161 = vector.extract_strided_slice %146 {offsets = [96, 0], sizes = [32, 2], strides = [1, 1]} : vector<128x2xf32> to vector<32x2xf32>
    %162 = arith.negf %161 : vector<32x2xf32>
    %163 = math.exp %162 : vector<32x2xf32>
    %cst_34 = arith.constant 1.000000e+00 : f32
    %164 = vector.broadcast %cst_34 : f32 to vector<32x2xf32>
    %165 = arith.addf %164, %163 : vector<32x2xf32>
    %166 = arith.divf %164, %165 : vector<32x2xf32>
    %167 = arith.mulf %158, %141 : vector<32x2xf32>
    %168 = arith.mulf %152, %160 : vector<32x2xf32>
    %169 = arith.addf %167, %168 : vector<32x2xf32>
    %170 = math.tanh %169 : vector<32x2xf32>
    %171 = arith.mulf %166, %170 : vector<32x2xf32>
    %c0_35 = arith.constant 0 : index
    %c10 = arith.constant 10 : index
    %172 = vector.load %arg9[%c0_35, %c10] : memref<32x16xf32, #tpu.memory_space<vmem>>, vector<32x2xf32>
    tpu.vector_store %arg9[%c0_35, %c10], %171 {strides = array<i32>} : memref<32x16xf32, #tpu.memory_space<vmem>>, vector<32x2xf32>,
    %cst_36 = arith.constant dense<0.000000e+00> : vector<128x2xf32>
    %173 = tpu.matmul %14, %171, %cst_36 {dimension_numbers = #tpu.dot_dimension_numbers<[1], [0], [0], [1], [0, 0, 1, 1], [], []>} : vector<128x32xf32>, vector<32x2xf32>, vector<128x2xf32> -> vector<128x2xf32>
    %174 = arith.addf %173, %12 : vector<128x2xf32>
    %175 = vector.extract_strided_slice %174 {offsets = [0, 0], sizes = [32, 2], strides = [1, 1]} : vector<128x2xf32> to vector<32x2xf32>
    %176 = arith.negf %175 : vector<32x2xf32>
    %177 = math.exp %176 : vector<32x2xf32>
    %cst_37 = arith.constant 1.000000e+00 : f32
    %178 = vector.broadcast %cst_37 : f32 to vector<32x2xf32>
    %179 = arith.addf %178, %177 : vector<32x2xf32>
    %180 = arith.divf %178, %179 : vector<32x2xf32>
    %181 = vector.extract_strided_slice %174 {offsets = [32, 0], sizes = [32, 2], strides = [1, 1]} : vector<128x2xf32> to vector<32x2xf32>
    %182 = arith.negf %181 : vector<32x2xf32>
    %183 = math.exp %182 : vector<32x2xf32>
    %cst_38 = arith.constant 1.000000e+00 : f32
    %184 = vector.broadcast %cst_38 : f32 to vector<32x2xf32>
    %185 = arith.addf %184, %183 : vector<32x2xf32>
    %186 = arith.divf %184, %185 : vector<32x2xf32>
    %187 = vector.extract_strided_slice %174 {offsets = [64, 0], sizes = [32, 2], strides = [1, 1]} : vector<128x2xf32> to vector<32x2xf32>
    %188 = math.tanh %187 : vector<32x2xf32>
    %189 = vector.extract_strided_slice %174 {offsets = [96, 0], sizes = [32, 2], strides = [1, 1]} : vector<128x2xf32> to vector<32x2xf32>
    %190 = arith.negf %189 : vector<32x2xf32>
    %191 = math.exp %190 : vector<32x2xf32>
    %cst_39 = arith.constant 1.000000e+00 : f32
    %192 = vector.broadcast %cst_39 : f32 to vector<32x2xf32>
    %193 = arith.addf %192, %191 : vector<32x2xf32>
    %194 = arith.divf %192, %193 : vector<32x2xf32>
    %195 = arith.mulf %186, %169 : vector<32x2xf32>
    %196 = arith.mulf %180, %188 : vector<32x2xf32>
    %197 = arith.addf %195, %196 : vector<32x2xf32>
    %198 = math.tanh %197 : vector<32x2xf32>
    %199 = arith.mulf %194, %198 : vector<32x2xf32>
    %c0_40 = arith.constant 0 : index
    %c12 = arith.constant 12 : index
    %200 = vector.load %arg9[%c0_40, %c12] : memref<32x16xf32, #tpu.memory_space<vmem>>, vector<32x2xf32>
    tpu.vector_store %arg9[%c0_40, %c12], %199 {strides = array<i32>} : memref<32x16xf32, #tpu.memory_space<vmem>>, vector<32x2xf32>,
    %cst_41 = arith.constant dense<0.000000e+00> : vector<128x2xf32>
    %201 = tpu.matmul %14, %199, %cst_41 {dimension_numbers = #tpu.dot_dimension_numbers<[1], [0], [0], [1], [0, 0, 1, 1], [], []>} : vector<128x32xf32>, vector<32x2xf32>, vector<128x2xf32> -> vector<128x2xf32>
    %202 = arith.addf %201, %13 : vector<128x2xf32>
    %203 = vector.extract_strided_slice %202 {offsets = [0, 0], sizes = [32, 2], strides = [1, 1]} : vector<128x2xf32> to vector<32x2xf32>
    %204 = arith.negf %203 : vector<32x2xf32>
    %205 = math.exp %204 : vector<32x2xf32>
    %cst_42 = arith.constant 1.000000e+00 : f32
    %206 = vector.broadcast %cst_42 : f32 to vector<32x2xf32>
    %207 = arith.addf %206, %205 : vector<32x2xf32>
    %208 = arith.divf %206, %207 : vector<32x2xf32>
    %209 = vector.extract_strided_slice %202 {offsets = [32, 0], sizes = [32, 2], strides = [1, 1]} : vector<128x2xf32> to vector<32x2xf32>
    %210 = arith.negf %209 : vector<32x2xf32>
    %211 = math.exp %210 : vector<32x2xf32>
    %cst_43 = arith.constant 1.000000e+00 : f32
    %212 = vector.broadcast %cst_43 : f32 to vector<32x2xf32>
    %213 = arith.addf %212, %211 : vector<32x2xf32>
    %214 = arith.divf %212, %213 : vector<32x2xf32>
    %215 = vector.extract_strided_slice %202 {offsets = [64, 0], sizes = [32, 2], strides = [1, 1]} : vector<128x2xf32> to vector<32x2xf32>
    %216 = math.tanh %215 : vector<32x2xf32>
    %217 = vector.extract_strided_slice %202 {offsets = [96, 0], sizes = [32, 2], strides = [1, 1]} : vector<128x2xf32> to vector<32x2xf32>
    %218 = arith.negf %217 : vector<32x2xf32>
    %219 = math.exp %218 : vector<32x2xf32>
    %cst_44 = arith.constant 1.000000e+00 : f32
    %220 = vector.broadcast %cst_44 : f32 to vector<32x2xf32>
    %221 = arith.addf %220, %219 : vector<32x2xf32>
    %222 = arith.divf %220, %221 : vector<32x2xf32>
    %223 = arith.mulf %214, %197 : vector<32x2xf32>
    %224 = arith.mulf %208, %216 : vector<32x2xf32>
    %225 = arith.addf %223, %224 : vector<32x2xf32>
    %226 = math.tanh %225 : vector<32x2xf32>
    %227 = arith.mulf %222, %226 : vector<32x2xf32>
    %c0_45 = arith.constant 0 : index
    %c14 = arith.constant 14 : index
    %228 = vector.load %arg9[%c0_45, %c14] : memref<32x16xf32, #tpu.memory_space<vmem>>, vector<32x2xf32>
    tpu.vector_store %arg9[%c0_45, %c14], %227 {strides = array<i32>} : memref<32x16xf32, #tpu.memory_space<vmem>>, vector<32x2xf32>,
    %c0_46 = arith.constant 0 : index
    %c0_47 = arith.constant 0 : index
    %229 = vector.load %arg4[%c0_46, %c0_47] : memref<32x32xf32, #tpu.memory_space<vmem>>, vector<32x32xf32>
    %c0_48 = arith.constant 0 : index
    %c0_49 = arith.constant 0 : index
    %230 = vector.load %arg9[%c0_48, %c0_49] : memref<32x16xf32, #tpu.memory_space<vmem>>, vector<32x16xf32>
    %cst_50 = arith.constant dense<0.000000e+00> : vector<32x16xf32>
    %231 = tpu.matmul %229, %230, %cst_50 {dimension_numbers = #tpu.dot_dimension_numbers<[1], [0], [0], [1], [0, 0, 1, 1], [], []>} : vector<32x32xf32>, vector<32x16xf32>, vector<32x16xf32> -> vector<32x16xf32>
    %c0_51 = arith.constant 0 : index
    %c0_52 = arith.constant 0 : index
    %232 = vector.load %arg5[%c0_51, %c0_52] : memref<32x1xf32, #tpu.memory_space<vmem>>, vector<32x1xf32>
    %233 = vector.broadcast %232 : vector<32x1xf32> to vector<32x16xf32>
    %234 = arith.addf %231, %233 : vector<32x16xf32>
    %235 = vector.extract_strided_slice %234 {offsets = [0, 0], sizes = [32, 2], strides = [1, 1]} : vector<32x16xf32> to vector<32x2xf32>
    %236 = vector.extract_strided_slice %234 {offsets = [0, 2], sizes = [32, 2], strides = [1, 1]} : vector<32x16xf32> to vector<32x2xf32>
    %237 = vector.extract_strided_slice %234 {offsets = [0, 4], sizes = [32, 2], strides = [1, 1]} : vector<32x16xf32> to vector<32x2xf32>
    %238 = vector.extract_strided_slice %234 {offsets = [0, 6], sizes = [32, 2], strides = [1, 1]} : vector<32x16xf32> to vector<32x2xf32>
    %239 = vector.extract_strided_slice %234 {offsets = [0, 8], sizes = [32, 2], strides = [1, 1]} : vector<32x16xf32> to vector<32x2xf32>
    %240 = vector.extract_strided_slice %234 {offsets = [0, 10], sizes = [32, 2], strides = [1, 1]} : vector<32x16xf32> to vector<32x2xf32>
    %241 = vector.extract_strided_slice %234 {offsets = [0, 12], sizes = [32, 2], strides = [1, 1]} : vector<32x16xf32> to vector<32x2xf32>
    %242 = vector.extract_strided_slice %234 {offsets = [0, 14], sizes = [32, 2], strides = [1, 1]} : vector<32x16xf32> to vector<32x2xf32>
    %243 = arith.maximumf %235, %236 : vector<32x2xf32>
    %244 = arith.maximumf %243, %237 : vector<32x2xf32>
    %245 = arith.maximumf %244, %238 : vector<32x2xf32>
    %246 = arith.maximumf %245, %239 : vector<32x2xf32>
    %247 = arith.maximumf %246, %240 : vector<32x2xf32>
    %248 = arith.maximumf %247, %241 : vector<32x2xf32>
    %249 = arith.maximumf %248, %242 : vector<32x2xf32>
    %250 = arith.subf %235, %249 : vector<32x2xf32>
    %251 = math.exp %250 : vector<32x2xf32>
    %252 = arith.subf %236, %249 : vector<32x2xf32>
    %253 = math.exp %252 : vector<32x2xf32>
    %254 = arith.subf %237, %249 : vector<32x2xf32>
    %255 = math.exp %254 : vector<32x2xf32>
    %256 = arith.subf %238, %249 : vector<32x2xf32>
    %257 = math.exp %256 : vector<32x2xf32>
    %258 = arith.subf %239, %249 : vector<32x2xf32>
    %259 = math.exp %258 : vector<32x2xf32>
    %260 = arith.subf %240, %249 : vector<32x2xf32>
    %261 = math.exp %260 : vector<32x2xf32>
    %262 = arith.subf %241, %249 : vector<32x2xf32>
    %263 = math.exp %262 : vector<32x2xf32>
    %264 = arith.subf %242, %249 : vector<32x2xf32>
    %265 = math.exp %264 : vector<32x2xf32>
    %266 = arith.addf %251, %253 : vector<32x2xf32>
    %267 = arith.addf %266, %255 : vector<32x2xf32>
    %268 = arith.addf %267, %257 : vector<32x2xf32>
    %269 = arith.addf %268, %259 : vector<32x2xf32>
    %270 = arith.addf %269, %261 : vector<32x2xf32>
    %271 = arith.addf %270, %263 : vector<32x2xf32>
    %272 = arith.addf %271, %265 : vector<32x2xf32>
    %273 = tpu.reciprocal %272 : vector<32x2xf32> -> vector<32x2xf32>
    %274 = arith.mulf %251, %31 : vector<32x2xf32>
    %275 = arith.mulf %253, %59 : vector<32x2xf32>
    %276 = arith.addf %274, %275 : vector<32x2xf32>
    %277 = arith.mulf %255, %87 : vector<32x2xf32>
    %278 = arith.addf %276, %277 : vector<32x2xf32>
    %279 = arith.mulf %257, %115 : vector<32x2xf32>
    %280 = arith.addf %278, %279 : vector<32x2xf32>
    %281 = arith.mulf %259, %143 : vector<32x2xf32>
    %282 = arith.addf %280, %281 : vector<32x2xf32>
    %283 = arith.mulf %261, %171 : vector<32x2xf32>
    %284 = arith.addf %282, %283 : vector<32x2xf32>
    %285 = arith.mulf %263, %199 : vector<32x2xf32>
    %286 = arith.addf %284, %285 : vector<32x2xf32>
    %287 = arith.mulf %265, %227 : vector<32x2xf32>
    %288 = arith.addf %286, %287 : vector<32x2xf32>
    %289 = arith.mulf %288, %273 : vector<32x2xf32>
    %c0_53 = arith.constant 0 : index
    %c0_54 = arith.constant 0 : index
    %290 = vector.load %arg6[%c0_53, %c0_54] : memref<6x32xf32, #tpu.memory_space<vmem>>, vector<6x32xf32>
    %cst_55 = arith.constant dense<0.000000e+00> : vector<6x2xf32>
    %291 = tpu.matmul %290, %289, %cst_55 {dimension_numbers = #tpu.dot_dimension_numbers<[1], [0], [0], [1], [0, 0, 1, 1], [], []>} : vector<6x32xf32>, vector<32x2xf32>, vector<6x2xf32> -> vector<6x2xf32>
    %c0_56 = arith.constant 0 : index
    %c0_57 = arith.constant 0 : index
    %292 = vector.load %arg7[%c0_56, %c0_57] : memref<6x1xf32, #tpu.memory_space<vmem>>, vector<6x1xf32>
    %293 = vector.broadcast %292 : vector<6x1xf32> to vector<6x2xf32>
    %294 = arith.addf %291, %293 : vector<6x2xf32>
    %c0_58 = arith.constant 0 : index
    %c0_59 = arith.constant 0 : index
    %295 = vector.load %arg8[%c0_58, %c0_59] : memref<6x2xf32, #tpu.memory_space<vmem>>, vector<6x2xf32>
    tpu.vector_store %arg8[%c0_58, %c0_59], %294 {strides = array<i32>} : memref<6x2xf32, #tpu.memory_space<vmem>>, vector<6x2xf32>,
    return
  }
}

</mosaic_0001>

<llo_original>
// kernel: tpu_custom_call.1
$region0: #{tpu_custom_call.1}
  #allocation0 [shape = 'u32[]', space=smem, size = 0x4, offset = 0x4, fixed_abs, tag = 'smem constant byte address 0x4 - core index']
  #allocation1 [shape = 'u32[144,128]{1,0:T(1,128)}', space=vmem, size = 0x12000, scoped, tag = 'internal scratch']
  #allocation2 [shape = 'f32[32,16]{1,0:T(8,128)}', space=vmem, size = 0x4000, scoped, tag = 'scratch operand']
  %s0 = inlined_call_operand.vmem [shape: f32[3,16], index: 0, kind: input, shape index: {}]
  %s1 = inlined_call_operand.vmem [shape: f32[128,3], index: 1, kind: input, shape index: {}]
  %s2 = inlined_call_operand.vmem [shape: f32[128,32], index: 2, kind: input, shape index: {}]
  %s3 = inlined_call_operand.vmem [shape: f32[128,1], index: 3, kind: input, shape index: {}]
  %s4 = inlined_call_operand.vmem [shape: f32[32,32], index: 4, kind: input, shape index: {}]
  %s5 = inlined_call_operand.vmem [shape: f32[32,1], index: 5, kind: input, shape index: {}]
  %s6 = inlined_call_operand.vmem [shape: f32[6,32], index: 6, kind: input, shape index: {}]
  %s7 = inlined_call_operand.vmem [shape: f32[6,1], index: 7, kind: input, shape index: {}]
  %s8 = inlined_call_operand.vmem [shape: f32[6,2], index: 8, kind: output, shape index: {}]
  %s9 = sld [smem:[#allocation0]]
  $region42: #{tpu_custom_call.1} parent=0
    _
  %s11 = ssub.s32 1, %s9
  %s12 = scalar_select 0, %s11, %s9
  // Predicated region
  $region2: #{tpu_custom_call.1} parent=0 // pred_check
    _
  $region3: #{tpu_custom_call.1} parent=0 // pred_check_branch
    %14 = sbr.rel (0) target = $region5
  $region4: #{tpu_custom_call.1} parent=0 // pred_region
    _
  $region5: #{tpu_custom_call.1} parent=0 // pred_fallthru
    _
  // Predicated region
  $region6: #{tpu_custom_call.1} parent=0 // pred_check
    _
  $region7: #{tpu_custom_call.1} parent=0 // pred_check_branch
    %16 = sbr.rel (0) target = $region9
  $region8: #{tpu_custom_call.1} parent=0 // pred_region
    _
  $region9: #{tpu_custom_call.1} parent=0 // pred_fallthru
    _
  // Predicated region
  $region10: #{tpu_custom_call.1} parent=0 // pred_check
    _
  $region11: #{tpu_custom_call.1} parent=0 // pred_check_branch
    %18 = sbr.rel (0) target = $region13
  $region12: #{tpu_custom_call.1} parent=0 // pred_region
    _
  $region13: #{tpu_custom_call.1} parent=0 // pred_fallthru
    _
  // Predicated region
  $region14: #{tpu_custom_call.1} parent=0 // pred_check
    _
  $region15: #{tpu_custom_call.1} parent=0 // pred_check_branch
    %20 = sbr.rel (0) target = $region17
  $region16: #{tpu_custom_call.1} parent=0 // pred_region
    _
  $region17: #{tpu_custom_call.1} parent=0 // pred_fallthru
    _
  // Predicated region
  $region18: #{tpu_custom_call.1} parent=0 // pred_check
    _
  $region19: #{tpu_custom_call.1} parent=0 // pred_check_branch
    %22 = sbr.rel (0) target = $region21
  $region20: #{tpu_custom_call.1} parent=0 // pred_region
    _
  $region21: #{tpu_custom_call.1} parent=0 // pred_fallthru
    _
  // Predicated region
  $region22: #{tpu_custom_call.1} parent=0 // pred_check
    _
  $region23: #{tpu_custom_call.1} parent=0 // pred_check_branch
    %24 = sbr.rel (0) target = $region25
  $region24: #{tpu_custom_call.1} parent=0 // pred_region
    _
  $region25: #{tpu_custom_call.1} parent=0 // pred_fallthru
    _
  // Predicated region
  $region26: #{tpu_custom_call.1} parent=0 // pred_check
    _
  $region27: #{tpu_custom_call.1} parent=0 // pred_check_branch
    %26 = sbr.rel (0) target = $region29
  $region28: #{tpu_custom_call.1} parent=0 // pred_region
    _
  $region29: #{tpu_custom_call.1} parent=0 // pred_fallthru
    _
  // Predicated region
  $region30: #{tpu_custom_call.1} parent=0 // pred_check
    _
  $region31: #{tpu_custom_call.1} parent=0 // pred_check_branch
    %28 = sbr.rel (0) target = $region33
  $region32: #{tpu_custom_call.1} parent=0 // pred_region
    _
  $region33: #{tpu_custom_call.1} parent=0 // pred_fallthru
    _
  %v29 = vld [vmem:[%s1] sm:$0xff]
  %v30 = vld [vmem:[%s1 + $0x8] sm:$0xff]
  %v31 = vld [vmem:[%s1 + $0x10] sm:$0xff]
  %v32 = vld [vmem:[%s1 + $0x18] sm:$0xff]
  %v33 = vld [vmem:[%s1 + $0x20] sm:$0xff]
  %v34 = vld [vmem:[%s1 + $0x28] sm:$0xff]
  %v35 = vld [vmem:[%s1 + $0x30] sm:$0xff]
  %v36 = vld [vmem:[%s1 + $0x38] sm:$0xff]
  %v37 = vld [vmem:[%s1 + $0x40] sm:$0xff]
  %v38 = vld [vmem:[%s1 + $0x48] sm:$0xff]
  %v39 = vld [vmem:[%s1 + $0x50] sm:$0xff]
  %v40 = vld [vmem:[%s1 + $0x58] sm:$0xff]
  %v41 = vld [vmem:[%s1 + $0x60] sm:$0xff]
  %v42 = vld [vmem:[%s1 + $0x68] sm:$0xff]
  %v43 = vld [vmem:[%s1 + $0x70] sm:$0xff]
  %v44 = vld [vmem:[%s1 + $0x78] sm:$0xff]
  %v45 = vld [vmem:[%s0] sm:$0x7]
  %v46 = vld [vmem:[%s3] sm:$0xff]
  %v47 = vld [vmem:[%s3 + $0x8] sm:$0xff]
  %v48 = vld [vmem:[%s3 + $0x10] sm:$0xff]
  %v49 = vld [vmem:[%s3 + $0x18] sm:$0xff]
  %v50 = vld [vmem:[%s3 + $0x20] sm:$0xff]
  %v51 = vld [vmem:[%s3 + $0x28] sm:$0xff]
  %v52 = vld [vmem:[%s3 + $0x30] sm:$0xff]
  %v53 = vld [vmem:[%s3 + $0x38] sm:$0xff]
  %v54 = vld [vmem:[%s3 + $0x40] sm:$0xff]
  %v55 = vld [vmem:[%s3 + $0x48] sm:$0xff]
  %v56 = vld [vmem:[%s3 + $0x50] sm:$0xff]
  %v57 = vld [vmem:[%s3 + $0x58] sm:$0xff]
  %v58 = vld [vmem:[%s3 + $0x60] sm:$0xff]
  %v59 = vld [vmem:[%s3 + $0x68] sm:$0xff]
  %v60 = vld [vmem:[%s3 + $0x70] sm:$0xff]
  %v61 = vld [vmem:[%s3 + $0x78] sm:$0xff]
  %63 = vset.pattern.permute.xlu0 0
  %64 = vperm.xlu0 %63, %v46
  %v65 = vpop.permute.xlu0 %64
  %68 = vset.pattern.permute.xlu0 0
  %69 = vperm.xlu0 %68, %v47
  %v70 = vpop.permute.xlu0 %69
  %73 = vset.pattern.permute.xlu0 0
  %74 = vperm.xlu0 %73, %v48
  %v75 = vpop.permute.xlu0 %74
  %78 = vset.pattern.permute.xlu0 0
  %79 = vperm.xlu0 %78, %v49
  %v80 = vpop.permute.xlu0 %79
  %83 = vset.pattern.permute.xlu0 0
  %84 = vperm.xlu0 %83, %v50
  %v85 = vpop.permute.xlu0 %84
  %88 = vset.pattern.permute.xlu0 0
  %89 = vperm.xlu0 %88, %v51
  %v90 = vpop.permute.xlu0 %89
  %93 = vset.pattern.permute.xlu0 0
  %94 = vperm.xlu0 %93, %v52
  %v95 = vpop.permute.xlu0 %94
  %98 = vset.pattern.permute.xlu0 0
  %99 = vperm.xlu0 %98, %v53
  %v100 = vpop.permute.xlu0 %99
  %103 = vset.pattern.permute.xlu0 0
  %104 = vperm.xlu0 %103, %v54
  %v105 = vpop.permute.xlu0 %104
  %108 = vset.pattern.permute.xlu0 0
  %109 = vperm.xlu0 %108, %v55
  %v110 = vpop.permute.xlu0 %109
  %113 = vset.pattern.permute.xlu0 0
  %114 = vperm.xlu0 %113, %v56
  %v115 = vpop.permute.xlu0 %114
  %118 = vset.pattern.permute.xlu0 0
  %119 = vperm.xlu0 %118, %v57
  %v120 = vpop.permute.xlu0 %119
  %123 = vset.pattern.permute.xlu0 0
  %124 = vperm.xlu0 %123, %v58
  %v125 = vpop.permute.xlu0 %124
  %128 = vset.pattern.permute.xlu0 0
  %129 = vperm.xlu0 %128, %v59
  %v130 = vpop.permute.xlu0 %129
  %133 = vset.pattern.permute.xlu0 0
  %134 = vperm.xlu0 %133, %v60
  %v135 = vpop.permute.xlu0 %134
  %138 = vset.pattern.permute.xlu0 0
  %139 = vperm.xlu0 %138, %v61
  %v140 = vpop.permute.xlu0 %139
  %vm142 = vcmask 23552
  %v144 = vsel %vm142, %v29, 0
  %v147 = vsel %vm142, %v30, 0
  %v150 = vsel %vm142, %v31, 0
  %v153 = vsel %vm142, %v32, 0
  %v156 = vsel %vm142, %v33, 0
  %v159 = vsel %vm142, %v34, 0
  %v162 = vsel %vm142, %v35, 0
  %v165 = vsel %vm142, %v36, 0
  %v168 = vsel %vm142, %v37, 0
  %v171 = vsel %vm142, %v38, 0
  %v174 = vsel %vm142, %v39, 0
  %v177 = vsel %vm142, %v40, 0
  %v180 = vsel %vm142, %v41, 0
  %v183 = vsel %vm142, %v42, 0
  %v186 = vsel %vm142, %v43, 0
  %v189 = vsel %vm142, %v44, 0
  %vm191 = vcmask 1042432
  %v193 = vsel %vm191, %v45, 0
  %195 = vmatprep.subr.mxu0 0.0
  %196 = vmatpush1.msra.mxu0 %v193
  %197 = vmatprep.subr.mxu0 0.0
  %198 = vmatpush1.msra.mxu0 0.0
  %199 = vmatprep.subr.mxu0 0.0
  %200 = vmatpush1.msra.mxu0 0.0
  %201 = vmatprep.subr.mxu0 0.0
  %202 = vmatpush1.msra.mxu0 0.0
  %203 = vmatprep.subr.mxu0 0.0
  %204 = vmatpush1.msra.mxu0 0.0
  %205 = vmatprep.subr.mxu0 0.0
  %206 = vmatpush1.msra.mxu0 0.0
  %207 = vmatprep.subr.mxu0 0.0
  %208 = vmatpush1.msra.mxu0 0.0
  %209 = vmatprep.subr.mxu0 0.0
  %210 = vmatpush1.msra.mxu0 0.0
  %211 = vmatprep.subr.mxu0 0.0
  %212 = vmatpush1.msra.mxu0 0.0
  %213 = vmatprep.subr.mxu0 0.0
  %214 = vmatpush1.msra.mxu0 0.0
  %215 = vmatprep.subr.mxu0 0.0
  %216 = vmatpush1.msra.mxu0 0.0
  %217 = vmatprep.subr.mxu0 0.0
  %218 = vmatpush1.msra.mxu0 0.0
  %219 = vmatprep.subr.mxu0 0.0
  %220 = vmatpush1.msra.mxu0 0.0
  %221 = vmatprep.subr.mxu0 0.0
  %222 = vmatpush1.msra.mxu0 0.0
  %223 = vmatprep.subr.mxu0 0.0
  %224 = vmatpush1.msra.mxu0 0.0
  %225 = vmatprep.subr.mxu0 0.0
  %226 = vmatpush1.msra.mxu0 0.0
  %227 = vmatprep.subr.mxu0 0.0
  %228 = vmatpush1.msra.mxu0 0.0
  %229 = vmatprep.subr.mxu0 0.0
  %230 = vmatpush1.msra.mxu0 0.0
  %231 = vmatprep.subr.mxu0 0.0
  %232 = vmatpush1.msra.mxu0 0.0
  %233 = vmatprep.subr.mxu0 0.0
  %234 = vmatpush1.msra.mxu0 0.0
  %235 = vmatprep.subr.mxu0 0.0
  %236 = vmatpush1.msra.mxu0 0.0
  %237 = vmatprep.subr.mxu0 0.0
  %238 = vmatpush1.msra.mxu0 0.0
  %239 = vmatprep.subr.mxu0 0.0
  %240 = vmatpush1.msra.mxu0 0.0
  %241 = vmatprep.subr.mxu0 0.0
  %242 = vmatpush1.msra.mxu0 0.0
  %243 = vmatprep.subr.mxu0 0.0
  %244 = vmatpush1.msra.mxu0 0.0
  %245 = vmatprep.subr.mxu0 0.0
  %246 = vmatpush1.msra.mxu0 0.0
  %247 = vmatprep.subr.mxu0 0.0
  %248 = vmatpush1.msra.mxu0 0.0
  %249 = vmatprep.subr.mxu0 0.0
  %250 = vmatpush1.msra.mxu0 0.0
  %251 = vmatprep.subr.mxu0 0.0
  %252 = vmatpush1.msra.mxu0 0.0
  %253 = vmatprep.subr.mxu0 0.0
  %254 = vmatpush1.msra.mxu0 0.0
  %255 = vmatprep.subr.mxu0 0.0
  %256 = vmatpush1.msra.mxu0 0.0
  %257 = vmatprep.subr.mxu0 0.0
  %258 = vmatpush1.msra.mxu0 0.0
  %259 = vmatprep.mubr.f32.mxu0 0.0
  %260 = vmatmul.mubr.f32.gmra.mrb[0].mxu0 %v144
  %v261 = vpop.f32.mrb[0].mxu0
  %v262 = vadd.f32 %v65, %v261
  %v263 = vpop.f32.mrb[0].mxu0
  %264 = vmatprep.mubr.f32.mxu0 0.0
  %265 = vmatmul.mubr.f32.gmra.mrb[0].mxu0 %v147
  %v266 = vpop.f32.mrb[0].mxu0
  %v267 = vadd.f32 %v70, %v266
  %v268 = vpop.f32.mrb[0].mxu0
  %269 = vmatprep.mubr.f32.mxu0 0.0
  %270 = vmatmul.mubr.f32.gmra.mrb[0].mxu0 %v150
  %v271 = vpop.f32.mrb[0].mxu0
  %v272 = vadd.f32 %v75, %v271
  %v273 = vpop.f32.mrb[0].mxu0
  %274 = vmatprep.mubr.f32.mxu0 0.0
  %275 = vmatmul.mubr.f32.gmra.mrb[0].mxu0 %v153
  %v276 = vpop.f32.mrb[0].mxu0
  %v277 = vadd.f32 %v80, %v276
  %v278 = vpop.f32.mrb[0].mxu0
  %279 = vmatprep.mubr.f32.mxu0 0.0
  %280 = vmatmul.mubr.f32.gmra.mrb[0].mxu0 %v156
  %v281 = vpop.f32.mrb[0].mxu0
  %v282 = vadd.f32 %v85, %v281
  %v283 = vpop.f32.mrb[0].mxu0
  %284 = vmatprep.mubr.f32.mxu0 0.0
  %285 = vmatmul.mubr.f32.gmra.mrb[0].mxu0 %v159
  %v286 = vpop.f32.mrb[0].mxu0
  %v287 = vadd.f32 %v90, %v286
  %v288 = vpop.f32.mrb[0].mxu0
  %289 = vmatprep.mubr.f32.mxu0 0.0
  %290 = vmatmul.mubr.f32.gmra.mrb[0].mxu0 %v162
  %v291 = vpop.f32.mrb[0].mxu0
  %v292 = vadd.f32 %v95, %v291
  %v293 = vpop.f32.mrb[0].mxu0
  %294 = vmatprep.mubr.f32.mxu0 0.0
  %295 = vmatmul.mubr.f32.gmra.mrb[0].mxu0 %v165
  %v296 = vpop.f32.mrb[0].mxu0
  %v297 = vadd.f32 %v100, %v296
  %v298 = vpop.f32.mrb[0].mxu0
  %299 = vmatprep.mubr.f32.mxu0 0.0
  %300 = vmatmul.mubr.f32.gmra.mrb[0].mxu0 %v168
  %v301 = vpop.f32.mrb[0].mxu0
  %v302 = vadd.f32 %v105, %v301
  %v303 = vpop.f32.mrb[0].mxu0
  %304 = vmatprep.mubr.f32.mxu0 0.0
  %305 = vmatmul.mubr.f32.gmra.mrb[0].mxu0 %v171
  %v306 = vpop.f32.mrb[0].mxu0
  %v307 = vadd.f32 %v110, %v306
  %v308 = vpop.f32.mrb[0].mxu0
  %309 = vmatprep.mubr.f32.mxu0 0.0
  %310 = vmatmul.mubr.f32.gmra.mrb[0].mxu0 %v174
  %v311 = vpop.f32.mrb[0].mxu0
  %v312 = vadd.f32 %v115, %v311
  %v313 = vpop.f32.mrb[0].mxu0
  %314 = vmatprep.mubr.f32.mxu0 0.0
  %315 = vmatmul.mubr.f32.gmra.mrb[0].mxu0 %v177
  %v316 = vpop.f32.mrb[0].mxu0
  %v317 = vadd.f32 %v120, %v316
  %v318 = vpop.f32.mrb[0].mxu0
  %319 = vmatprep.mubr.f32.mxu0 0.0
  %320 = vmatmul.mubr.f32.gmra.mrb[0].mxu0 %v180
  %v321 = vpop.f32.mrb[0].mxu0
  %v322 = vadd.f32 %v125, %v321
  %v323 = vpop.f32.mrb[0].mxu0
  %324 = vmatprep.mubr.f32.mxu0 0.0
  %325 = vmatmul.mubr.f32.gmra.mrb[0].mxu0 %v183
  %v326 = vpop.f32.mrb[0].mxu0
  %v327 = vadd.f32 %v130, %v326
  %v328 = vpop.f32.mrb[0].mxu0
  %329 = vmatprep.mubr.f32.mxu0 0.0
  %330 = vmatmul.mubr.f32.gmra.mrb[0].mxu0 %v186
  %v331 = vpop.f32.mrb[0].mxu0
  %v332 = vadd.f32 %v135, %v331
  %v333 = vpop.f32.mrb[0].mxu0
  %334 = vmatprep.mubr.f32.mxu0 0.0
  %335 = vmatmul.mubr.f32.gmra.mrb[0].mxu0 %v189
  %v336 = vpop.f32.mrb[0].mxu0
  %v337 = vadd.f32 %v140, %v336
  %v338 = vpop.f32.mrb[0].mxu0
  %339 = vdwg.mxu0
  %v340 = vld [vmem:[%s2] sm:$0xff]
  %v341 = vld [vmem:[%s2 + $0x8] sm:$0xff]
  %v342 = vld [vmem:[%s2 + $0x10] sm:$0xff]
  %v343 = vld [vmem:[%s2 + $0x18] sm:$0xff]
  %v344 = vld [vmem:[%s2 + $0x20] sm:$0xff]
  %v345 = vld [vmem:[%s2 + $0x28] sm:$0xff]
  %v346 = vld [vmem:[%s2 + $0x30] sm:$0xff]
  %v347 = vld [vmem:[%s2 + $0x38] sm:$0xff]
  %v348 = vld [vmem:[%s2 + $0x40] sm:$0xff]
  %v349 = vld [vmem:[%s2 + $0x48] sm:$0xff]
  %v350 = vld [vmem:[%s2 + $0x50] sm:$0xff]
  %v351 = vld [vmem:[%s2 + $0x58] sm:$0xff]
  %v352 = vld [vmem:[%s2 + $0x60] sm:$0xff]
  %v353 = vld [vmem:[%s2 + $0x68] sm:$0xff]
  %v354 = vld [vmem:[%s2 + $0x70] sm:$0xff]
  %v355 = vld [vmem:[%s2 + $0x78] sm:$0xff]
  %v356 = vxor.u32 %v262, 2147483648
  %v357 = vxor.u32 %v267, 2147483648
  %v358 = vxor.u32 %v272, 2147483648
  %v359 = vxor.u32 %v277, 2147483648
  %v360 = vmul.f32 %v356, 1.442695
  %v361 = vpow.pop %v360
  %v362 = vmul.f32 %v357, 1.442695
  %v363 = vpow.pop %v362
  %v364 = vmul.f32 %v358, 1.442695
  %v365 = vpow.pop %v364
  %v366 = vmul.f32 %v359, 1.442695
  %v367 = vpow.pop %v366
  %v368 = vadd.f32 %v361, 1.0
  %v369 = vadd.f32 %v363, 1.0
  %v370 = vadd.f32 %v365, 1.0
  %v371 = vadd.f32 %v367, 1.0
  %v372 = vrcp.pop %v368
  %v373 = vmul.f32 1.0, %v372
  %v374 = vrcp.pop %v369
  %v375 = vmul.f32 1.0, %v374
  %v376 = vrcp.pop %v370
  %v377 = vmul.f32 1.0, %v376
  %v378 = vrcp.pop %v371
  %v379 = vmul.f32 1.0, %v378
  %v380 = vtanh.pop %v302
  %v381 = vtanh.pop %v307
  %v382 = vtanh.pop %v312
  %v383 = vtanh.pop %v317
  %v384 = vxor.u32 %v322, 2147483648
  %v385 = vxor.u32 %v327, 2147483648
  %v386 = vxor.u32 %v332, 2147483648
  %v387 = vxor.u32 %v337, 2147483648
  %v388 = vmul.f32 %v384, 1.442695
  %v389 = vpow.pop %v388
  %v390 = vmul.f32 %v385, 1.442695
  %v391 = vpow.pop %v390
  %v392 = vmul.f32 %v386, 1.442695
  %v393 = vpow.pop %v392
  %v394 = vmul.f32 %v387, 1.442695
  %v395 = vpow.pop %v394
  %v396 = vadd.f32 %v389, 1.0
  %v397 = vadd.f32 %v391, 1.0
  %v398 = vadd.f32 %v393, 1.0
  %v399 = vadd.f32 %v395, 1.0
  %v400 = vrcp.pop %v396
  %v401 = vmul.f32 1.0, %v400
  %v402 = vrcp.pop %v397
  %v403 = vmul.f32 1.0, %v402
  %v404 = vrcp.pop %v398
  %v405 = vmul.f32 1.0, %v404
  %v406 = vrcp.pop %v399
  %v407 = vmul.f32 1.0, %v406
  %v408 = vmul.f32 %v373, %v380
  %v409 = vmul.f32 %v375, %v381
  %v410 = vmul.f32 %v377, %v382
  %v411 = vmul.f32 %v379, %v383
  %v412 = vtanh.pop %v408
  %v413 = vtanh.pop %v409
  %v414 = vtanh.pop %v410
  %v415 = vtanh.pop %v411
  %v416 = vmul.f32 %v401, %v412
  %v417 = vmul.f32 %v403, %v413
  %v418 = vmul.f32 %v405, %v414
  %v419 = vmul.f32 %v407, %v415
  %vm420 = vcmask 15360
  %421 = vst.msk [vmem:[#allocation2] sm:$0xff] %vm420, %v416
  %422 = vst.msk [vmem:[#allocation2 + $0x8] sm:$0xff] %vm420, %v417
  %423 = vst.msk [vmem:[#allocation2 + $0x10] sm:$0xff] %vm420, %v418
  %424 = vst.msk [vmem:[#allocation2 + $0x18] sm:$0xff] %vm420, %v419
  %441 = vrot.lane.b32.xlu0 %v262, 126
  %v442 = vpop.permute.xlu0 %441
  %443 = vrot.lane.b32.xlu0 %v267, 126
  %v444 = vpop.permute.xlu0 %443
  %445 = vrot.lane.b32.xlu0 %v272, 126
  %v446 = vpop.permute.xlu0 %445
  %447 = vrot.lane.b32.xlu0 %v277, 126
  %v448 = vpop.permute.xlu0 %447
  %449 = vrot.lane.b32.xlu0 %v282, 126
  %v450 = vpop.permute.xlu0 %449
  %451 = vrot.lane.b32.xlu0 %v287, 126
  %v452 = vpop.permute.xlu0 %451
  %453 = vrot.lane.b32.xlu0 %v292, 126
  %v454 = vpop.permute.xlu0 %453
  %455 = vrot.lane.b32.xlu0 %v297, 126
  %v456 = vpop.permute.xlu0 %455
  %457 = vrot.lane.b32.xlu0 %v302, 126
  %v458 = vpop.permute.xlu0 %457
  %459 = vrot.lane.b32.xlu0 %v307, 126
  %v460 = vpop.permute.xlu0 %459
  %461 = vrot.lane.b32.xlu0 %v312, 126
  %v462 = vpop.permute.xlu0 %461
  %463 = vrot.lane.b32.xlu0 %v317, 126
  %v464 = vpop.permute.xlu0 %463
  %465 = vrot.lane.b32.xlu0 %v322, 126
  %v466 = vpop.permute.xlu0 %465
  %467 = vrot.lane.b32.xlu0 %v327, 126
  %v468 = vpop.permute.xlu0 %467
  %469 = vrot.lane.b32.xlu0 %v332, 126
  %v470 = vpop.permute.xlu0 %469
  %471 = vrot.lane.b32.xlu0 %v337, 126
  %v472 = vpop.permute.xlu0 %471
  %vm489 = vcmask 261120
  %v491 = vsel %vm489, %v340, 0
  %v494 = vsel %vm489, %v341, 0
  %v497 = vsel %vm489, %v342, 0
  %v500 = vsel %vm489, %v343, 0
  %v503 = vsel %vm489, %v344, 0
  %v506 = vsel %vm489, %v345, 0
  %v509 = vsel %vm489, %v346, 0
  %v512 = vsel %vm489, %v347, 0
  %v515 = vsel %vm489, %v348, 0
  %v518 = vsel %vm489, %v349, 0
  %v521 = vsel %vm489, %v350, 0
  %v524 = vsel %vm489, %v351, 0
  %v527 = vsel %vm489, %v352, 0
  %v530 = vsel %vm489, %v353, 0
  %v533 = vsel %vm489, %v354, 0
  %v536 = vsel %vm489, %v355, 0
  %538 = vmatprep.subr.mxu0 0.0
  %539 = vmatpush1.msra.mxu0 %v416
  %540 = vmatprep.subr.mxu0 0.0
  %541 = vmatpush1.msra.mxu0 %v417
  %542 = vmatprep.subr.mxu0 0.0
  %543 = vmatpush1.msra.mxu0 %v418
  %544 = vmatprep.subr.mxu0 0.0
  %545 = vmatpush1.msra.mxu0 %v419
  %546 = vmatprep.subr.mxu0 0.0
  %547 = vmatpush1.msra.mxu0 0.0
  %548 = vmatprep.subr.mxu0 0.0
  %549 = vmatpush1.msra.mxu0 0.0
  %550 = vmatprep.subr.mxu0 0.0
  %551 = vmatpush1.msra.mxu0 0.0
  %552 = vmatprep.subr.mxu0 0.0
  %553 = vmatpush1.msra.mxu0 0.0
  %554 = vmatprep.subr.mxu0 0.0
  %555 = vmatpush1.msra.mxu0 0.0
  %556 = vmatprep.subr.mxu0 0.0
  %557 = vmatpush1.msra.mxu0 0.0
  %558 = vmatprep.subr.mxu0 0.0
  %559 = vmatpush1.msra.mxu0 0.0
  %560 = vmatprep.subr.mxu0 0.0
  %561 = vmatpush1.msra.mxu0 0.0
  %562 = vmatprep.subr.mxu0 0.0
  %563 = vmatpush1.msra.mxu0 0.0
  %564 = vmatprep.subr.mxu0 0.0
  %565 = vmatpush1.msra.mxu0 0.0
  %566 = vmatprep.subr.mxu0 0.0
  %567 = vmatpush1.msra.mxu0 0.0
  %568 = vmatprep.subr.mxu0 0.0
  %569 = vmatpush1.msra.mxu0 0.0
  %570 = vmatprep.subr.mxu0 0.0
  %571 = vmatpush1.msra.mxu0 0.0
  %572 = vmatprep.subr.mxu0 0.0
  %573 = vmatpush1.msra.mxu0 0.0
  %574 = vmatprep.subr.mxu0 0.0
  %575 = vmatpush1.msra.mxu0 0.0
  %576 = vmatprep.subr.mxu0 0.0
  %577 = vmatpush1.msra.mxu0 0.0
  %578 = vmatprep.subr.mxu0 0.0
  %579 = vmatpush1.msra.mxu0 0.0
  %580 = vmatprep.subr.mxu0 0.0
  %581 = vmatpush1.msra.mxu0 0.0
  %582 = vmatprep.subr.mxu0 0.0
  %583 = vmatpush1.msra.mxu0 0.0
  %584 = vmatprep.subr.mxu0 0.0
  %585 = vmatpush1.msra.mxu0 0.0
  %586 = vmatprep.subr.mxu0 0.0
  %587 = vmatpush1.msra.mxu0 0.0
  %588 = vmatprep.subr.mxu0 0.0
  %589 = vmatpush1.msra.mxu0 0.0
  %590 = vmatprep.subr.mxu0 0.0
  %591 = vmatpush1.msra.mxu0 0.0
  %592 = vmatprep.subr.mxu0 0.0
  %593 = vmatpush1.msra.mxu0 0.0
  %594 = vmatprep.subr.mxu0 0.0
  %595 = vmatpush1.msra.mxu0 0.0
  %596 = vmatprep.subr.mxu0 0.0
  %597 = vmatpush1.msra.mxu0 0.0
  %598 = vmatprep.subr.mxu0 0.0
  %599 = vmatpush1.msra.mxu0 0.0
  %600 = vmatprep.subr.mxu0 0.0
  %601 = vmatpush1.msra.mxu0 0.0
  %602 = vmatprep.mubr.f32.mxu0 0.0
  %603 = vmatmul.mubr.f32.gmra.mrb[0].mxu0 %v491
  %v604 = vpop.f32.mrb[0].mxu0
  %v605 = vadd.f32 %v442, %v604
  %v606 = vpop.f32.mrb[0].mxu0
  %607 = vmatprep.mubr.f32.mxu0 0.0
  %608 = vmatmul.mubr.f32.gmra.mrb[0].mxu0 %v494
  %v609 = vpop.f32.mrb[0].mxu0
  %v610 = vadd.f32 %v444, %v609
  %v611 = vpop.f32.mrb[0].mxu0
  %612 = vmatprep.mubr.f32.mxu0 0.0
  %613 = vmatmul.mubr.f32.gmra.mrb[0].mxu0 %v497
  %v614 = vpop.f32.mrb[0].mxu0
  %v615 = vadd.f32 %v446, %v614
  %v616 = vpop.f32.mrb[0].mxu0
  %617 = vmatprep.mubr.f32.mxu0 0.0
  %618 = vmatmul.mubr.f32.gmra.mrb[0].mxu0 %v500
  %v619 = vpop.f32.mrb[0].mxu0
  %v620 = vadd.f32 %v448, %v619
  %v621 = vpop.f32.mrb[0].mxu0
  %622 = vmatprep.mubr.f32.mxu0 0.0
  %623 = vmatmul.mubr.f32.gmra.mrb[0].mxu0 %v503
  %v624 = vpop.f32.mrb[0].mxu0
  %v625 = vadd.f32 %v450, %v624
  %v626 = vpop.f32.mrb[0].mxu0
  %627 = vmatprep.mubr.f32.mxu0 0.0
  %628 = vmatmul.mubr.f32.gmra.mrb[0].mxu0 %v506
  %v629 = vpop.f32.mrb[0].mxu0
  %v630 = vadd.f32 %v452, %v629
  %v631 = vpop.f32.mrb[0].mxu0
  %632 = vmatprep.mubr.f32.mxu0 0.0
  %633 = vmatmul.mubr.f32.gmra.mrb[0].mxu0 %v509
  %v634 = vpop.f32.mrb[0].mxu0
  %v635 = vadd.f32 %v454, %v634
  %v636 = vpop.f32.mrb[0].mxu0
  %637 = vmatprep.mubr.f32.mxu0 0.0
  %638 = vmatmul.mubr.f32.gmra.mrb[0].mxu0 %v512
  %v639 = vpop.f32.mrb[0].mxu0
  %v640 = vadd.f32 %v456, %v639
  %v641 = vpop.f32.mrb[0].mxu0
  %642 = vmatprep.mubr.f32.mxu0 0.0
  %643 = vmatmul.mubr.f32.gmra.mrb[0].mxu0 %v515
  %v644 = vpop.f32.mrb[0].mxu0
  %v645 = vadd.f32 %v458, %v644
  %v646 = vpop.f32.mrb[0].mxu0
  %647 = vmatprep.mubr.f32.mxu0 0.0
  %648 = vmatmul.mubr.f32.gmra.mrb[0].mxu0 %v518
  %v649 = vpop.f32.mrb[0].mxu0
  %v650 = vadd.f32 %v460, %v649
  %v651 = vpop.f32.mrb[0].mxu0
  %652 = vmatprep.mubr.f32.mxu0 0.0
  %653 = vmatmul.mubr.f32.gmra.mrb[0].mxu0 %v521
  %v654 = vpop.f32.mrb[0].mxu0
  %v655 = vadd.f32 %v462, %v654
  %v656 = vpop.f32.mrb[0].mxu0
  %657 = vmatprep.mubr.f32.mxu0 0.0
  %658 = vmatmul.mubr.f32.gmra.mrb[0].mxu0 %v524
  %v659 = vpop.f32.mrb[0].mxu0
  %v660 = vadd.f32 %v464, %v659
  %v661 = vpop.f32.mrb[0].mxu0
  %662 = vmatprep.mubr.f32.mxu0 0.0
  %663 = vmatmul.mubr.f32.gmra.mrb[0].mxu0 %v527
  %v664 = vpop.f32.mrb[0].mxu0
  %v665 = vadd.f32 %v466, %v664
  %v666 = vpop.f32.mrb[0].mxu0
  %667 = vmatprep.mubr.f32.mxu0 0.0
  %668 = vmatmul.mubr.f32.gmra.mrb[0].mxu0 %v530
  %v669 = vpop.f32.mrb[0].mxu0
  %v670 = vadd.f32 %v468, %v669
  %v671 = vpop.f32.mrb[0].mxu0
  %672 = vmatprep.mubr.f32.mxu0 0.0
  %673 = vmatmul.mubr.f32.gmra.mrb[0].mxu0 %v533
  %v674 = vpop.f32.mrb[0].mxu0
  %v675 = vadd.f32 %v470, %v674
  %v676 = vpop.f32.mrb[0].mxu0
  %677 = vmatprep.mubr.f32.mxu0 0.0
  %678 = vmatmul.mubr.f32.gmra.mrb[0].mxu0 %v536
  %v679 = vpop.f32.mrb[0].mxu0
  %v680 = vadd.f32 %v472, %v679
  %v681 = vpop.f32.mrb[0].mxu0
  %682 = vdwg.mxu0
  %v683 = vxor.u32 %v605, 2147483648
  %v684 = vxor.u32 %v610, 2147483648
  %v685 = vxor.u32 %v615, 2147483648
  %v686 = vxor.u32 %v620, 2147483648
  %v687 = vmul.f32 %v683, 1.442695
  %v688 = vpow.pop %v687
  %v689 = vmul.f32 %v684, 1.442695
  %v690 = vpow.pop %v689
  %v691 = vmul.f32 %v685, 1.442695
  %v692 = vpow.pop %v691
  %v693 = vmul.f32 %v686, 1.442695
  %v694 = vpow.pop %v693
  %v695 = vadd.f32 %v688, 1.0
  %v696 = vadd.f32 %v690, 1.0
  %v697 = vadd.f32 %v692, 1.0
  %v698 = vadd.f32 %v694, 1.0
  %v699 = vrcp.pop %v695
  %v700 = vmul.f32 1.0, %v699
  %v701 = vrcp.pop %v696
  %v702 = vmul.f32 1.0, %v701
  %v703 = vrcp.pop %v697
  %v704 = vmul.f32 1.0, %v703
  %v705 = vrcp.pop %v698
  %v706 = vmul.f32 1.0, %v705
  %v707 = vxor.u32 %v625, 2147483648
  %v708 = vxor.u32 %v630, 2147483648
  %v709 = vxor.u32 %v635, 2147483648
  %v710 = vxor.u32 %v640, 2147483648
  %v711 = vmul.f32 %v707, 1.442695
  %v712 = vpow.pop %v711
  %v713 = vmul.f32 %v708, 1.442695
  %v714 = vpow.pop %v713
  %v715 = vmul.f32 %v709, 1.442695
  %v716 = vpow.pop %v715
  %v717 = vmul.f32 %v710, 1.442695
  %v718 = vpow.pop %v717
  %v719 = vadd.f32 %v712, 1.0
  %v720 = vadd.f32 %v714, 1.0
  %v721 = vadd.f32 %v716, 1.0
  %v722 = vadd.f32 %v718, 1.0
  %v723 = vrcp.pop %v719
  %v724 = vmul.f32 1.0, %v723
  %v725 = vrcp.pop %v720
  %v726 = vmul.f32 1.0, %v725
  %v727 = vrcp.pop %v721
  %v728 = vmul.f32 1.0, %v727
  %v729 = vrcp.pop %v722
  %v730 = vmul.f32 1.0, %v729
  %v731 = vtanh.pop %v645
  %v732 = vtanh.pop %v650
  %v733 = vtanh.pop %v655
  %v734 = vtanh.pop %v660
  %v735 = vxor.u32 %v665, 2147483648
  %v736 = vxor.u32 %v670, 2147483648
  %v737 = vxor.u32 %v675, 2147483648
  %v738 = vxor.u32 %v680, 2147483648
  %v739 = vmul.f32 %v735, 1.442695
  %v740 = vpow.pop %v739
  %v741 = vmul.f32 %v736, 1.442695
  %v742 = vpow.pop %v741
  %v743 = vmul.f32 %v737, 1.442695
  %v744 = vpow.pop %v743
  %v745 = vmul.f32 %v738, 1.442695
  %v746 = vpow.pop %v745
  %v747 = vadd.f32 %v740, 1.0
  %v748 = vadd.f32 %v742, 1.0
  %v749 = vadd.f32 %v744, 1.0
  %v750 = vadd.f32 %v746, 1.0
  %v751 = vrcp.pop %v747
  %v752 = vmul.f32 1.0, %v751
  %v753 = vrcp.pop %v748
  %v754 = vmul.f32 1.0, %v753
  %v755 = vrcp.pop %v749
  %v756 = vmul.f32 1.0, %v755
  %v757 = vrcp.pop %v750
  %v758 = vmul.f32 1.0, %v757
  %v759 = vmul.f32 %v724, %v408
  %v760 = vmul.f32 %v726, %v409
  %v761 = vmul.f32 %v728, %v410
  %v762 = vmul.f32 %v730, %v411
  %v763 = vmul.f32 %v700, %v731
  %v764 = vmul.f32 %v702, %v732
  %v765 = vmul.f32 %v704, %v733
  %v766 = vmul.f32 %v706, %v734
  %v767 = vadd.f32 %v759, %v763
  %v768 = vadd.f32 %v760, %v764
  %v769 = vadd.f32 %v761, %v765
  %v770 = vadd.f32 %v762, %v766
  %v771 = vtanh.pop %v767
  %v772 = vtanh.pop %v768
  %v773 = vtanh.pop %v769
  %v774 = vtanh.pop %v770
  %v775 = vmul.f32 %v752, %v771
  %v776 = vmul.f32 %v754, %v772
  %v777 = vmul.f32 %v756, %v773
  %v778 = vmul.f32 %v758, %v774
  %783 = vrot.lane.b32.xlu0 %v775, 2
  %v784 = vpop.permute.xlu0 %783
  %785 = vrot.lane.b32.xlu0 %v776, 2
  %v786 = vpop.permute.xlu0 %785
  %787 = vrot.lane.b32.xlu0 %v777, 2
  %v788 = vpop.permute.xlu0 %787
  %789 = vrot.lane.b32.xlu0 %v778, 2
  %v790 = vpop.permute.xlu0 %789
  %vm795 = vcmask 31760
  %796 = vst.msk [vmem:[#allocation2] sm:$0xff] %vm795, %v784
  %797 = vst.msk [vmem:[#allocation2 + $0x8] sm:$0xff] %vm795, %v786
  %798 = vst.msk [vmem:[#allocation2 + $0x10] sm:$0xff] %vm795, %v788
  %799 = vst.msk [vmem:[#allocation2 + $0x18] sm:$0xff] %vm795, %v790
  %800 = vrot.lane.b32.xlu0 %v262, 124
  %v801 = vpop.permute.xlu0 %800
  %802 = vrot.lane.b32.xlu0 %v267, 124
  %v803 = vpop.permute.xlu0 %802
  %804 = vrot.lane.b32.xlu0 %v272, 124
  %v805 = vpop.permute.xlu0 %804
  %806 = vrot.lane.b32.xlu0 %v277, 124
  %v807 = vpop.permute.xlu0 %806
  %808 = vrot.lane.b32.xlu0 %v282, 124
  %v809 = vpop.permute.xlu0 %808
  %810 = vrot.lane.b32.xlu0 %v287, 124
  %v811 = vpop.permute.xlu0 %810
  %812 = vrot.lane.b32.xlu0 %v292, 124
  %v813 = vpop.permute.xlu0 %812
  %814 = vrot.lane.b32.xlu0 %v297, 124
  %v815 = vpop.permute.xlu0 %814
  %816 = vrot.lane.b32.xlu0 %v302, 124
  %v817 = vpop.permute.xlu0 %816
  %818 = vrot.lane.b32.xlu0 %v307, 124
  %v819 = vpop.permute.xlu0 %818
  %820 = vrot.lane.b32.xlu0 %v312, 124
  %v821 = vpop.permute.xlu0 %820
  %822 = vrot.lane.b32.xlu0 %v317, 124
  %v823 = vpop.permute.xlu0 %822
  %824 = vrot.lane.b32.xlu0 %v322, 124
  %v825 = vpop.permute.xlu0 %824
  %826 = vrot.lane.b32.xlu0 %v327, 124
  %v827 = vpop.permute.xlu0 %826
  %828 = vrot.lane.b32.xlu0 %v332, 124
  %v829 = vpop.permute.xlu0 %828
  %830 = vrot.lane.b32.xlu0 %v337, 124
  %v831 = vpop.permute.xlu0 %830
  %848 = vmatprep.subr.mxu0 0.0
  %849 = vmatpush1.msra.mxu0 %v775
  %850 = vmatprep.subr.mxu0 0.0
  %851 = vmatpush1.msra.mxu0 %v776
  %852 = vmatprep.subr.mxu0 0.0
  %853 = vmatpush1.msra.mxu0 %v777
  %854 = vmatprep.subr.mxu0 0.0
  %855 = vmatpush1.msra.mxu0 %v778
  %856 = vmatprep.subr.mxu0 0.0
  %857 = vmatpush1.msra.mxu0 0.0
  %858 = vmatprep.subr.mxu0 0.0
  %859 = vmatpush1.msra.mxu0 0.0
  %860 = vmatprep.subr.mxu0 0.0
  %861 = vmatpush1.msra.mxu0 0.0
  %862 = vmatprep.subr.mxu0 0.0
  %863 = vmatpush1.msra.mxu0 0.0
  %864 = vmatprep.subr.mxu0 0.0
  %865 = vmatpush1.msra.mxu0 0.0
  %866 = vmatprep.subr.mxu0 0.0
  %867 = vmatpush1.msra.mxu0 0.0
  %868 = vmatprep.subr.mxu0 0.0
  %869 = vmatpush1.msra.mxu0 0.0
  %870 = vmatprep.subr.mxu0 0.0
  %871 = vmatpush1.msra.mxu0 0.0
  %872 = vmatprep.subr.mxu0 0.0
  %873 = vmatpush1.msra.mxu0 0.0
  %874 = vmatprep.subr.mxu0 0.0
  %875 = vmatpush1.msra.mxu0 0.0
  %876 = vmatprep.subr.mxu0 0.0
  %877 = vmatpush1.msra.mxu0 0.0
  %878 = vmatprep.subr.mxu0 0.0
  %879 = vmatpush1.msra.mxu0 0.0
  %880 = vmatprep.subr.mxu0 0.0
  %881 = vmatpush1.msra.mxu0 0.0
  %882 = vmatprep.subr.mxu0 0.0
  %883 = vmatpush1.msra.mxu0 0.0
  %884 = vmatprep.subr.mxu0 0.0
  %885 = vmatpush1.msra.mxu0 0.0
  %886 = vmatprep.subr.mxu0 0.0
  %887 = vmatpush1.msra.mxu0 0.0
  %888 = vmatprep.subr.mxu0 0.0
  %889 = vmatpush1.msra.mxu0 0.0
  %890 = vmatprep.subr.mxu0 0.0
  %891 = vmatpush1.msra.mxu0 0.0
  %892 = vmatprep.subr.mxu0 0.0
  %893 = vmatpush1.msra.mxu0 0.0
  %894 = vmatprep.subr.mxu0 0.0
  %895 = vmatpush1.msra.mxu0 0.0
  %896 = vmatprep.subr.mxu0 0.0
  %897 = vmatpush1.msra.mxu0 0.0
  %898 = vmatprep.subr.mxu0 0.0
  %899 = vmatpush1.msra.mxu0 0.0
  %900 = vmatprep.subr.mxu0 0.0
  %901 = vmatpush1.msra.mxu0 0.0
  %902 = vmatprep.subr.mxu0 0.0
  %903 = vmatpush1.msra.mxu0 0.0
  %904 = vmatprep.subr.mxu0 0.0
  %905 = vmatpush1.msra.mxu0 0.0
  %906 = vmatprep.subr.mxu0 0.0
  %907 = vmatpush1.msra.mxu0 0.0
  %908 = vmatprep.subr.mxu0 0.0
  %909 = vmatpush1.msra.mxu0 0.0
  %910 = vmatprep.subr.mxu0 0.0
  %911 = vmatpush1.msra.mxu0 0.0
  %912 = vmatprep.mubr.f32.mxu0 0.0
  %913 = vmatmul.mubr.f32.gmra.mrb[0].mxu0 %v491
  %v914 = vpop.f32.mrb[0].mxu0
  %v915 = vadd.f32 %v801, %v914
  %v916 = vpop.f32.mrb[0].mxu0
  %917 = vmatprep.mubr.f32.mxu0 0.0
  %918 = vmatmul.mubr.f32.gmra.mrb[0].mxu0 %v494
  %v919 = vpop.f32.mrb[0].mxu0
  %v920 = vadd.f32 %v803, %v919
  %v921 = vpop.f32.mrb[0].mxu0
  %922 = vmatprep.mubr.f32.mxu0 0.0
  %923 = vmatmul.mubr.f32.gmra.mrb[0].mxu0 %v497
  %v924 = vpop.f32.mrb[0].mxu0
  %v925 = vadd.f32 %v805, %v924
  %v926 = vpop.f32.mrb[0].mxu0
  %927 = vmatprep.mubr.f32.mxu0 0.0
  %928 = vmatmul.mubr.f32.gmra.mrb[0].mxu0 %v500
  %v929 = vpop.f32.mrb[0].mxu0
  %v930 = vadd.f32 %v807, %v929
  %v931 = vpop.f32.mrb[0].mxu0
  %932 = vmatprep.mubr.f32.mxu0 0.0
  %933 = vmatmul.mubr.f32.gmra.mrb[0].mxu0 %v503
  %v934 = vpop.f32.mrb[0].mxu0
  %v935 = vadd.f32 %v809, %v934
  %v936 = vpop.f32.mrb[0].mxu0
  %937 = vmatprep.mubr.f32.mxu0 0.0
  %938 = vmatmul.mubr.f32.gmra.mrb[0].mxu0 %v506
  %v939 = vpop.f32.mrb[0].mxu0
  %v940 = vadd.f32 %v811, %v939
  %v941 = vpop.f32.mrb[0].mxu0
  %942 = vmatprep.mubr.f32.mxu0 0.0
  %943 = vmatmul.mubr.f32.gmra.mrb[0].mxu0 %v509
  %v944 = vpop.f32.mrb[0].mxu0
  %v945 = vadd.f32 %v813, %v944
  %v946 = vpop.f32.mrb[0].mxu0
  %947 = vmatprep.mubr.f32.mxu0 0.0
  %948 = vmatmul.mubr.f32.gmra.mrb[0].mxu0 %v512
  %v949 = vpop.f32.mrb[0].mxu0
  %v950 = vadd.f32 %v815, %v949
  %v951 = vpop.f32.mrb[0].mxu0
  %952 = vmatprep.mubr.f32.mxu0 0.0
  %953 = vmatmul.mubr.f32.gmra.mrb[0].mxu0 %v515
  %v954 = vpop.f32.mrb[0].mxu0
  %v955 = vadd.f32 %v817, %v954
  %v956 = vpop.f32.mrb[0].mxu0
  %957 = vmatprep.mubr.f32.mxu0 0.0
  %958 = vmatmul.mubr.f32.gmra.mrb[0].mxu0 %v518
  %v959 = vpop.f32.mrb[0].mxu0
  %v960 = vadd.f32 %v819, %v959
  %v961 = vpop.f32.mrb[0].mxu0
  %962 = vmatprep.mubr.f32.mxu0 0.0
  %963 = vmatmul.mubr.f32.gmra.mrb[0].mxu0 %v521
  %v964 = vpop.f32.mrb[0].mxu0
  %v965 = vadd.f32 %v821, %v964
  %v966 = vpop.f32.mrb[0].mxu0
  %967 = vmatprep.mubr.f32.mxu0 0.0
  %968 = vmatmul.mubr.f32.gmra.mrb[0].mxu0 %v524
  %v969 = vpop.f32.mrb[0].mxu0
  %v970 = vadd.f32 %v823, %v969
  %v971 = vpop.f32.mrb[0].mxu0
  %972 = vmatprep.mubr.f32.mxu0 0.0
  %973 = vmatmul.mubr.f32.gmra.mrb[0].mxu0 %v527
  %v974 = vpop.f32.mrb[0].mxu0
  %v975 = vadd.f32 %v825, %v974
  %v976 = vpop.f32.mrb[0].mxu0
  %977 = vmatprep.mubr.f32.mxu0 0.0
  %978 = vmatmul.mubr.f32.gmra.mrb[0].mxu0 %v530
  %v979 = vpop.f32.mrb[0].mxu0
  %v980 = vadd.f32 %v827, %v979
  %v981 = vpop.f32.mrb[0].mxu0
  %982 = vmatprep.mubr.f32.mxu0 0.0
  %983 = vmatmul.mubr.f32.gmra.mrb[0].mxu0 %v533
  %v984 = vpop.f32.mrb[0].mxu0
  %v985 = vadd.f32 %v829, %v984
  %v986 = vpop.f32.mrb[0].mxu0
  %987 = vmatprep.mubr.f32.mxu0 0.0
  %988 = vmatmul.mubr.f32.gmra.mrb[0].mxu0 %v536
  %v989 = vpop.f32.mrb[0].mxu0
  %v990 = vadd.f32 %v831, %v989
  %v991 = vpop.f32.mrb[0].mxu0
  %992 = vdwg.mxu0
  %v993 = vxor.u32 %v915, 2147483648
  %v994 = vxor.u32 %v920, 2147483648
  %v995 = vxor.u32 %v925, 2147483648
  %v996 = vxor.u32 %v930, 2147483648
  %v997 = vmul.f32 %v993, 1.442695
  %v998 = vpow.pop %v997
  %v999 = vmul.f32 %v994, 1.442695
  %v1000 = vpow.pop %v999
  %v1001 = vmul.f32 %v995, 1.442695
  %v1002 = vpow.pop %v1001
  %v1003 = vmul.f32 %v996, 1.442695
  %v1004 = vpow.pop %v1003
  %v1005 = vadd.f32 %v998, 1.0
  %v1006 = vadd.f32 %v1000, 1.0
  %v1007 = vadd.f32 %v1002, 1.0
  %v1008 = vadd.f32 %v1004, 1.0
  %v1009 = vrcp.pop %v1005
  %v1010 = vmul.f32 1.0, %v1009
  %v1011 = vrcp.pop %v1006
  %v1012 = vmul.f32 1.0, %v1011
  %v1013 = vrcp.pop %v1007
  %v1014 = vmul.f32 1.0, %v1013
  %v1015 = vrcp.pop %v1008
  %v1016 = vmul.f32 1.0, %v1015
  %v1017 = vxor.u32 %v935, 2147483648
  %v1018 = vxor.u32 %v940, 2147483648
  %v1019 = vxor.u32 %v945, 2147483648
  %v1020 = vxor.u32 %v950, 2147483648
  %v1021 = vmul.f32 %v1017, 1.442695
  %v1022 = vpow.pop %v1021
  %v1023 = vmul.f32 %v1018, 1.442695
  %v1024 = vpow.pop %v1023
  %v1025 = vmul.f32 %v1019, 1.442695
  %v1026 = vpow.pop %v1025
  %v1027 = vmul.f32 %v1020, 1.442695
  %v1028 = vpow.pop %v1027
  %v1029 = vadd.f32 %v1022, 1.0
  %v1030 = vadd.f32 %v1024, 1.0
  %v1031 = vadd.f32 %v1026, 1.0
  %v1032 = vadd.f32 %v1028, 1.0
  %v1033 = vrcp.pop %v1029
  %v1034 = vmul.f32 1.0, %v1033
  %v1035 = vrcp.pop %v1030
  %v1036 = vmul.f32 1.0, %v1035
  %v1037 = vrcp.pop %v1031
  %v1038 = vmul.f32 1.0, %v1037
  %v1039 = vrcp.pop %v1032
  %v1040 = vmul.f32 1.0, %v1039
  %v1041 = vtanh.pop %v955
  %v1042 = vtanh.pop %v960
  %v1043 = vtanh.pop %v965
  %v1044 = vtanh.pop %v970
  %v1045 = vxor.u32 %v975, 2147483648
  %v1046 = vxor.u32 %v980, 2147483648
  %v1047 = vxor.u32 %v985, 2147483648
  %v1048 = vxor.u32 %v990, 2147483648
  %v1049 = vmul.f32 %v1045, 1.442695
  %v1050 = vpow.pop %v1049
  %v1051 = vmul.f32 %v1046, 1.442695
  %v1052 = vpow.pop %v1051
  %v1053 = vmul.f32 %v1047, 1.442695
  %v1054 = vpow.pop %v1053
  %v1055 = vmul.f32 %v1048, 1.442695
  %v1056 = vpow.pop %v1055
  %v1057 = vadd.f32 %v1050, 1.0
  %v1058 = vadd.f32 %v1052, 1.0
  %v1059 = vadd.f32 %v1054, 1.0
  %v1060 = vadd.f32 %v1056, 1.0
  %v1061 = vrcp.pop %v1057
  %v1062 = vmul.f32 1.0, %v1061
  %v1063 = vrcp.pop %v1058
  %v1064 = vmul.f32 1.0, %v1063
  %v1065 = vrcp.pop %v1059
  %v1066 = vmul.f32 1.0, %v1065
  %v1067 = vrcp.pop %v1060
  %v1068 = vmul.f32 1.0, %v1067
  %v1069 = vmul.f32 %v1034, %v767
  %v1070 = vmul.f32 %v1036, %v768
  %v1071 = vmul.f32 %v1038, %v769
  %v1072 = vmul.f32 %v1040, %v770
  %v1073 = vmul.f32 %v1010, %v1041
  %v1074 = vmul.f32 %v1012, %v1042
  %v1075 = vmul.f32 %v1014, %v1043
  %v1076 = vmul.f32 %v1016, %v1044
  %v1077 = vadd.f32 %v1069, %v1073
  %v1078 = vadd.f32 %v1070, %v1074
  %v1079 = vadd.f32 %v1071, %v1075
  %v1080 = vadd.f32 %v1072, %v1076
  %v1081 = vtanh.pop %v1077
  %v1082 = vtanh.pop %v1078
  %v1083 = vtanh.pop %v1079
  %v1084 = vtanh.pop %v1080
  %v1085 = vmul.f32 %v1062, %v1081
  %v1086 = vmul.f32 %v1064, %v1082
  %v1087 = vmul.f32 %v1066, %v1083
  %v1088 = vmul.f32 %v1068, %v1084
  %1093 = vrot.lane.b32.xlu0 %v1085, 4
  %v1094 = vpop.permute.xlu0 %1093
  %1095 = vrot.lane.b32.xlu0 %v1086, 4
  %v1096 = vpop.permute.xlu0 %1095
  %1097 = vrot.lane.b32.xlu0 %v1087, 4
  %v1098 = vpop.permute.xlu0 %1097
  %1099 = vrot.lane.b32.xlu0 %v1088, 4
  %v1100 = vpop.permute.xlu0 %1099
  %vm1105 = vcmask 48160
  %1106 = vst.msk [vmem:[#allocation2] sm:$0xff] %vm1105, %v1094
  %1107 = vst.msk [vmem:[#allocation2 + $0x8] sm:$0xff] %vm1105, %v1096
  %1108 = vst.msk [vmem:[#allocation2 + $0x10] sm:$0xff] %vm1105, %v1098
  %1109 = vst.msk [vmem:[#allocation2 + $0x18] sm:$0xff] %vm1105, %v1100
  %1110 = vrot.lane.b32.xlu0 %v262, 122
  %v1111 = vpop.permute.xlu0 %1110
  %1112 = vrot.lane.b32.xlu0 %v267, 122
  %v1113 = vpop.permute.xlu0 %1112
  %1114 = vrot.lane.b32.xlu0 %v272, 122
  %v1115 = vpop.permute.xlu0 %1114
  %1116 = vrot.lane.b32.xlu0 %v277, 122
  %v1117 = vpop.permute.xlu0 %1116
  %1118 = vrot.lane.b32.xlu0 %v282, 122
  %v1119 = vpop.permute.xlu0 %1118
  %1120 = vrot.lane.b32.xlu0 %v287, 122
  %v1121 = vpop.permute.xlu0 %1120
  %1122 = vrot.lane.b32.xlu0 %v292, 122
  %v1123 = vpop.permute.xlu0 %1122
  %1124 = vrot.lane.b32.xlu0 %v297, 122
  %v1125 = vpop.permute.xlu0 %1124
  %1126 = vrot.lane.b32.xlu0 %v302, 122
  %v1127 = vpop.permute.xlu0 %1126
  %1128 = vrot.lane.b32.xlu0 %v307, 122
  %v1129 = vpop.permute.xlu0 %1128
  %1130 = vrot.lane.b32.xlu0 %v312, 122
  %v1131 = vpop.permute.xlu0 %1130
  %1132 = vrot.lane.b32.xlu0 %v317, 122
  %v1133 = vpop.permute.xlu0 %1132
  %1134 = vrot.lane.b32.xlu0 %v322, 122
  %v1135 = vpop.permute.xlu0 %1134
  %1136 = vrot.lane.b32.xlu0 %v327, 122
  %v1137 = vpop.permute.xlu0 %1136
  %1138 = vrot.lane.b32.xlu0 %v332, 122
  %v1139 = vpop.permute.xlu0 %1138
  %1140 = vrot.lane.b32.xlu0 %v337, 122
  %v1141 = vpop.permute.xlu0 %1140
  %1158 = vmatprep.subr.mxu0 0.0
  %1159 = vmatpush1.msra.mxu0 %v1085
  %1160 = vmatprep.subr.mxu0 0.0
  %1161 = vmatpush1.msra.mxu0 %v1086
  %1162 = vmatprep.subr.mxu0 0.0
  %1163 = vmatpush1.msra.mxu0 %v1087
  %1164 = vmatprep.subr.mxu0 0.0
  %1165 = vmatpush1.msra.mxu0 %v1088
  %1166 = vmatprep.subr.mxu0 0.0
  %1167 = vmatpush1.msra.mxu0 0.0
  %1168 = vmatprep.subr.mxu0 0.0
  %1169 = vmatpush1.msra.mxu0 0.0
  %1170 = vmatprep.subr.mxu0 0.0
  %1171 = vmatpush1.msra.mxu0 0.0
  %1172 = vmatprep.subr.mxu0 0.0
  %1173 = vmatpush1.msra.mxu0 0.0
  %1174 = vmatprep.subr.mxu0 0.0
  %1175 = vmatpush1.msra.mxu0 0.0
  %1176 = vmatprep.subr.mxu0 0.0
  %1177 = vmatpush1.msra.mxu0 0.0
  %1178 = vmatprep.subr.mxu0 0.0
  %1179 = vmatpush1.msra.mxu0 0.0
  %1180 = vmatprep.subr.mxu0 0.0
  %1181 = vmatpush1.msra.mxu0 0.0
  %1182 = vmatprep.subr.mxu0 0.0
  %1183 = vmatpush1.msra.mxu0 0.0
  %1184 = vmatprep.subr.mxu0 0.0
  %1185 = vmatpush1.msra.mxu0 0.0
  %1186 = vmatprep.subr.mxu0 0.0
  %1187 = vmatpush1.msra.mxu0 0.0
  %1188 = vmatprep.subr.mxu0 0.0
  %1189 = vmatpush1.msra.mxu0 0.0
  %1190 = vmatprep.subr.mxu0 0.0
  %1191 = vmatpush1.msra.mxu0 0.0
  %1192 = vmatprep.subr.mxu0 0.0
  %1193 = vmatpush1.msra.mxu0 0.0
  %1194 = vmatprep.subr.mxu0 0.0
  %1195 = vmatpush1.msra.mxu0 0.0
  %1196 = vmatprep.subr.mxu0 0.0
  %1197 = vmatpush1.msra.mxu0 0.0
  %1198 = vmatprep.subr.mxu0 0.0
  %1199 = vmatpush1.msra.mxu0 0.0
  %1200 = vmatprep.subr.mxu0 0.0
  %1201 = vmatpush1.msra.mxu0 0.0
  %1202 = vmatprep.subr.mxu0 0.0
  %1203 = vmatpush1.msra.mxu0 0.0
  %1204 = vmatprep.subr.mxu0 0.0
  %1205 = vmatpush1.msra.mxu0 0.0
  %1206 = vmatprep.subr.mxu0 0.0
  %1207 = vmatpush1.msra.mxu0 0.0
  %1208 = vmatprep.subr.mxu0 0.0
  %1209 = vmatpush1.msra.mxu0 0.0
  %1210 = vmatprep.subr.mxu0 0.0
  %1211 = vmatpush1.msra.mxu0 0.0
  %1212 = vmatprep.subr.mxu0 0.0
  %1213 = vmatpush1.msra.mxu0 0.0
  %1214 = vmatprep.subr.mxu0 0.0
  %1215 = vmatpush1.msra.mxu0 0.0
  %1216 = vmatprep.subr.mxu0 0.0
  %1217 = vmatpush1.msra.mxu0 0.0
  %1218 = vmatprep.subr.mxu0 0.0
  %1219 = vmatpush1.msra.mxu0 0.0
  %1220 = vmatprep.subr.mxu0 0.0
  %1221 = vmatpush1.msra.mxu0 0.0
  %1222 = vmatprep.mubr.f32.mxu0 0.0
  %1223 = vmatmul.mubr.f32.gmra.mrb[0].mxu0 %v491
  %v1224 = vpop.f32.mrb[0].mxu0
  %v1225 = vadd.f32 %v1111, %v1224
  %v1226 = vpop.f32.mrb[0].mxu0
  %1227 = vmatprep.mubr.f32.mxu0 0.0
  %1228 = vmatmul.mubr.f32.gmra.mrb[0].mxu0 %v494
  %v1229 = vpop.f32.mrb[0].mxu0
  %v1230 = vadd.f32 %v1113, %v1229
  %v1231 = vpop.f32.mrb[0].mxu0
  %1232 = vmatprep.mubr.f32.mxu0 0.0
  %1233 = vmatmul.mubr.f32.gmra.mrb[0].mxu0 %v497
  %v1234 = vpop.f32.mrb[0].mxu0
  %v1235 = vadd.f32 %v1115, %v1234
  %v1236 = vpop.f32.mrb[0].mxu0
  %1237 = vmatprep.mubr.f32.mxu0 0.0
  %1238 = vmatmul.mubr.f32.gmra.mrb[0].mxu0 %v500
  %v1239 = vpop.f32.mrb[0].mxu0
  %v1240 = vadd.f32 %v1117, %v1239
  %v1241 = vpop.f32.mrb[0].mxu0
  %1242 = vmatprep.mubr.f32.mxu0 0.0
  %1243 = vmatmul.mubr.f32.gmra.mrb[0].mxu0 %v503
  %v1244 = vpop.f32.mrb[0].mxu0
  %v1245 = vadd.f32 %v1119, %v1244
  %v1246 = vpop.f32.mrb[0].mxu0
  %1247 = vmatprep.mubr.f32.mxu0 0.0
  %1248 = vmatmul.mubr.f32.gmra.mrb[0].mxu0 %v506
  %v1249 = vpop.f32.mrb[0].mxu0
  %v1250 = vadd.f32 %v1121, %v1249
  %v1251 = vpop.f32.mrb[0].mxu0
  %1252 = vmatprep.mubr.f32.mxu0 0.0
  %1253 = vmatmul.mubr.f32.gmra.mrb[0].mxu0 %v509
  %v1254 = vpop.f32.mrb[0].mxu0
  %v1255 = vadd.f32 %v1123, %v1254
  %v1256 = vpop.f32.mrb[0].mxu0
  %1257 = vmatprep.mubr.f32.mxu0 0.0
  %1258 = vmatmul.mubr.f32.gmra.mrb[0].mxu0 %v512
  %v1259 = vpop.f32.mrb[0].mxu0
  %v1260 = vadd.f32 %v1125, %v1259
  %v1261 = vpop.f32.mrb[0].mxu0
  %1262 = vmatprep.mubr.f32.mxu0 0.0
  %1263 = vmatmul.mubr.f32.gmra.mrb[0].mxu0 %v515
  %v1264 = vpop.f32.mrb[0].mxu0
  %v1265 = vadd.f32 %v1127, %v1264
  %v1266 = vpop.f32.mrb[0].mxu0
  %1267 = vmatprep.mubr.f32.mxu0 0.0
  %1268 = vmatmul.mubr.f32.gmra.mrb[0].mxu0 %v518
  %v1269 = vpop.f32.mrb[0].mxu0
  %v1270 = vadd.f32 %v1129, %v1269
  %v1271 = vpop.f32.mrb[0].mxu0
  %1272 = vmatprep.mubr.f32.mxu0 0.0
  %1273 = vmatmul.mubr.f32.gmra.mrb[0].mxu0 %v521
  %v1274 = vpop.f32.mrb[0].mxu0
  %v1275 = vadd.f32 %v1131, %v1274
  %v1276 = vpop.f32.mrb[0].mxu0
  %1277 = vmatprep.mubr.f32.mxu0 0.0
  %1278 = vmatmul.mubr.f32.gmra.mrb[0].mxu0 %v524
  %v1279 = vpop.f32.mrb[0].mxu0
  %v1280 = vadd.f32 %v1133, %v1279
  %v1281 = vpop.f32.mrb[0].mxu0
  %1282 = vmatprep.mubr.f32.mxu0 0.0
  %1283 = vmatmul.mubr.f32.gmra.mrb[0].mxu0 %v527
  %v1284 = vpop.f32.mrb[0].mxu0
  %v1285 = vadd.f32 %v1135, %v1284
  %v1286 = vpop.f32.mrb[0].mxu0
  %1287 = vmatprep.mubr.f32.mxu0 0.0
  %1288 = vmatmul.mubr.f32.gmra.mrb[0].mxu0 %v530
  %v1289 = vpop.f32.mrb[0].mxu0
  %v1290 = vadd.f32 %v1137, %v1289
  %v1291 = vpop.f32.mrb[0].mxu0
  %1292 = vmatprep.mubr.f32.mxu0 0.0
  %1293 = vmatmul.mubr.f32.gmra.mrb[0].mxu0 %v533
  %v1294 = vpop.f32.mrb[0].mxu0
  %v1295 = vadd.f32 %v1139, %v1294
  %v1296 = vpop.f32.mrb[0].mxu0
  %1297 = vmatprep.mubr.f32.mxu0 0.0
  %1298 = vmatmul.mubr.f32.gmra.mrb[0].mxu0 %v536
  %v1299 = vpop.f32.mrb[0].mxu0
  %v1300 = vadd.f32 %v1141, %v1299
  %v1301 = vpop.f32.mrb[0].mxu0
  %1302 = vdwg.mxu0
  %v1303 = vxor.u32 %v1225, 2147483648
  %v1304 = vxor.u32 %v1230, 2147483648
  %v1305 = vxor.u32 %v1235, 2147483648
  %v1306 = vxor.u32 %v1240, 2147483648
  %v1307 = vmul.f32 %v1303, 1.442695
  %v1308 = vpow.pop %v1307
  %v1309 = vmul.f32 %v1304, 1.442695
  %v1310 = vpow.pop %v1309
  %v1311 = vmul.f32 %v1305, 1.442695
  %v1312 = vpow.pop %v1311
  %v1313 = vmul.f32 %v1306, 1.442695
  %v1314 = vpow.pop %v1313
  %v1315 = vadd.f32 %v1308, 1.0
  %v1316 = vadd.f32 %v1310, 1.0
  %v1317 = vadd.f32 %v1312, 1.0
  %v1318 = vadd.f32 %v1314, 1.0
  %v1319 = vrcp.pop %v1315
  %v1320 = vmul.f32 1.0, %v1319
  %v1321 = vrcp.pop %v1316
  %v1322 = vmul.f32 1.0, %v1321
  %v1323 = vrcp.pop %v1317
  %v1324 = vmul.f32 1.0, %v1323
  %v1325 = vrcp.pop %v1318
  %v1326 = vmul.f32 1.0, %v1325
  %v1327 = vxor.u32 %v1245, 2147483648
  %v1328 = vxor.u32 %v1250, 2147483648
  %v1329 = vxor.u32 %v1255, 2147483648
  %v1330 = vxor.u32 %v1260, 2147483648
  %v1331 = vmul.f32 %v1327, 1.442695
  %v1332 = vpow.pop %v1331
  %v1333 = vmul.f32 %v1328, 1.442695
  %v1334 = vpow.pop %v1333
  %v1335 = vmul.f32 %v1329, 1.442695
  %v1336 = vpow.pop %v1335
  %v1337 = vmul.f32 %v1330, 1.442695
  %v1338 = vpow.pop %v1337
  %v1339 = vadd.f32 %v1332, 1.0
  %v1340 = vadd.f32 %v1334, 1.0
  %v1341 = vadd.f32 %v1336, 1.0
  %v1342 = vadd.f32 %v1338, 1.0
  %v1343 = vrcp.pop %v1339
  %v1344 = vmul.f32 1.0, %v1343
  %v1345 = vrcp.pop %v1340
  %v1346 = vmul.f32 1.0, %v1345
  %v1347 = vrcp.pop %v1341
  %v1348 = vmul.f32 1.0, %v1347
  %v1349 = vrcp.pop %v1342
  %v1350 = vmul.f32 1.0, %v1349
  %v1351 = vtanh.pop %v1265
  %v1352 = vtanh.pop %v1270
  %v1353 = vtanh.pop %v1275
  %v1354 = vtanh.pop %v1280
  %v1355 = vxor.u32 %v1285, 2147483648
  %v1356 = vxor.u32 %v1290, 2147483648
  %v1357 = vxor.u32 %v1295, 2147483648
  %v1358 = vxor.u32 %v1300, 2147483648
  %v1359 = vmul.f32 %v1355, 1.442695
  %v1360 = vpow.pop %v1359
  %v1361 = vmul.f32 %v1356, 1.442695
  %v1362 = vpow.pop %v1361
  %v1363 = vmul.f32 %v1357, 1.442695
  %v1364 = vpow.pop %v1363
  %v1365 = vmul.f32 %v1358, 1.442695
  %v1366 = vpow.pop %v1365
  %v1367 = vadd.f32 %v1360, 1.0
  %v1368 = vadd.f32 %v1362, 1.0
  %v1369 = vadd.f32 %v1364, 1.0
  %v1370 = vadd.f32 %v1366, 1.0
  %v1371 = vrcp.pop %v1367
  %v1372 = vmul.f32 1.0, %v1371
  %v1373 = vrcp.pop %v1368
  %v1374 = vmul.f32 1.0, %v1373
  %v1375 = vrcp.pop %v1369
  %v1376 = vmul.f32 1.0, %v1375
  %v1377 = vrcp.pop %v1370
  %v1378 = vmul.f32 1.0, %v1377
  %v1379 = vmul.f32 %v1344, %v1077
  %v1380 = vmul.f32 %v1346, %v1078
  %v1381 = vmul.f32 %v1348, %v1079
  %v1382 = vmul.f32 %v1350, %v1080
  %v1383 = vmul.f32 %v1320, %v1351
  %v1384 = vmul.f32 %v1322, %v1352
  %v1385 = vmul.f32 %v1324, %v1353
  %v1386 = vmul.f32 %v1326, %v1354
  %v1387 = vadd.f32 %v1379, %v1383
  %v1388 = vadd.f32 %v1380, %v1384
  %v1389 = vadd.f32 %v1381, %v1385
  %v1390 = vadd.f32 %v1382, %v1386
  %v1391 = vtanh.pop %v1387
  %v1392 = vtanh.pop %v1388
  %v1393 = vtanh.pop %v1389
  %v1394 = vtanh.pop %v1390
  %v1395 = vmul.f32 %v1372, %v1391
  %v1396 = vmul.f32 %v1374, %v1392
  %v1397 = vmul.f32 %v1376, %v1393
  %v1398 = vmul.f32 %v1378, %v1394
  %1403 = vrot.lane.b32.xlu0 %v1395, 6
  %v1404 = vpop.permute.xlu0 %1403
  %1405 = vrot.lane.b32.xlu0 %v1396, 6
  %v1406 = vpop.permute.xlu0 %1405
  %1407 = vrot.lane.b32.xlu0 %v1397, 6
  %v1408 = vpop.permute.xlu0 %1407
  %1409 = vrot.lane.b32.xlu0 %v1398, 6
  %v1410 = vpop.permute.xlu0 %1409
  %vm1415 = vcmask 64560
  %1416 = vst.msk [vmem:[#allocation2] sm:$0xff] %vm1415, %v1404
  %1417 = vst.msk [vmem:[#allocation2 + $0x8] sm:$0xff] %vm1415, %v1406
  %1418 = vst.msk [vmem:[#allocation2 + $0x10] sm:$0xff] %vm1415, %v1408
  %1419 = vst.msk [vmem:[#allocation2 + $0x18] sm:$0xff] %vm1415, %v1410
  %1420 = vrot.lane.b32.xlu0 %v262, 120
  %v1421 = vpop.permute.xlu0 %1420
  %1422 = vrot.lane.b32.xlu0 %v267, 120
  %v1423 = vpop.permute.xlu0 %1422
  %1424 = vrot.lane.b32.xlu0 %v272, 120
  %v1425 = vpop.permute.xlu0 %1424
  %1426 = vrot.lane.b32.xlu0 %v277, 120
  %v1427 = vpop.permute.xlu0 %1426
  %1428 = vrot.lane.b32.xlu0 %v282, 120
  %v1429 = vpop.permute.xlu0 %1428
  %1430 = vrot.lane.b32.xlu0 %v287, 120
  %v1431 = vpop.permute.xlu0 %1430
  %1432 = vrot.lane.b32.xlu0 %v292, 120
  %v1433 = vpop.permute.xlu0 %1432
  %1434 = vrot.lane.b32.xlu0 %v297, 120
  %v1435 = vpop.permute.xlu0 %1434
  %1436 = vrot.lane.b32.xlu0 %v302, 120
  %v1437 = vpop.permute.xlu0 %1436
  %1438 = vrot.lane.b32.xlu0 %v307, 120
  %v1439 = vpop.permute.xlu0 %1438
  %1440 = vrot.lane.b32.xlu0 %v312, 120
  %v1441 = vpop.permute.xlu0 %1440
  %1442 = vrot.lane.b32.xlu0 %v317, 120
  %v1443 = vpop.permute.xlu0 %1442
  %1444 = vrot.lane.b32.xlu0 %v322, 120
  %v1445 = vpop.permute.xlu0 %1444
  %1446 = vrot.lane.b32.xlu0 %v327, 120
  %v1447 = vpop.permute.xlu0 %1446
  %1448 = vrot.lane.b32.xlu0 %v332, 120
  %v1449 = vpop.permute.xlu0 %1448
  %1450 = vrot.lane.b32.xlu0 %v337, 120
  %v1451 = vpop.permute.xlu0 %1450
  %1468 = vmatprep.subr.mxu0 0.0
  %1469 = vmatpush1.msra.mxu0 %v1395
  %1470 = vmatprep.subr.mxu0 0.0
  %1471 = vmatpush1.msra.mxu0 %v1396
  %1472 = vmatprep.subr.mxu0 0.0
  %1473 = vmatpush1.msra.mxu0 %v1397
  %1474 = vmatprep.subr.mxu0 0.0
  %1475 = vmatpush1.msra.mxu0 %v1398
  %1476 = vmatprep.subr.mxu0 0.0
  %1477 = vmatpush1.msra.mxu0 0.0
  %1478 = vmatprep.subr.mxu0 0.0
  %1479 = vmatpush1.msra.mxu0 0.0
  %1480 = vmatprep.subr.mxu0 0.0
  %1481 = vmatpush1.msra.mxu0 0.0
  %1482 = vmatprep.subr.mxu0 0.0
  %1483 = vmatpush1.msra.mxu0 0.0
  %1484 = vmatprep.subr.mxu0 0.0
  %1485 = vmatpush1.msra.mxu0 0.0
  %1486 = vmatprep.subr.mxu0 0.0
  %1487 = vmatpush1.msra.mxu0 0.0
  %1488 = vmatprep.subr.mxu0 0.0
  %1489 = vmatpush1.msra.mxu0 0.0
  %1490 = vmatprep.subr.mxu0 0.0
  %1491 = vmatpush1.msra.mxu0 0.0
  %1492 = vmatprep.subr.mxu0 0.0
  %1493 = vmatpush1.msra.mxu0 0.0
  %1494 = vmatprep.subr.mxu0 0.0
  %1495 = vmatpush1.msra.mxu0 0.0
  %1496 = vmatprep.subr.mxu0 0.0
  %1497 = vmatpush1.msra.mxu0 0.0
  %1498 = vmatprep.subr.mxu0 0.0
  %1499 = vmatpush1.msra.mxu0 0.0
  %1500 = vmatprep.subr.mxu0 0.0
  %1501 = vmatpush1.msra.mxu0 0.0
  %1502 = vmatprep.subr.mxu0 0.0
  %1503 = vmatpush1.msra.mxu0 0.0
  %1504 = vmatprep.subr.mxu0 0.0
  %1505 = vmatpush1.msra.mxu0 0.0
  %1506 = vmatprep.subr.mxu0 0.0
  %1507 = vmatpush1.msra.mxu0 0.0
  %1508 = vmatprep.subr.mxu0 0.0
  %1509 = vmatpush1.msra.mxu0 0.0
  %1510 = vmatprep.subr.mxu0 0.0
  %1511 = vmatpush1.msra.mxu0 0.0
  %1512 = vmatprep.subr.mxu0 0.0
  %1513 = vmatpush1.msra.mxu0 0.0
  %1514 = vmatprep.subr.mxu0 0.0
  %1515 = vmatpush1.msra.mxu0 0.0
  %1516 = vmatprep.subr.mxu0 0.0
  %1517 = vmatpush1.msra.mxu0 0.0
  %1518 = vmatprep.subr.mxu0 0.0
  %1519 = vmatpush1.msra.mxu0 0.0
  %1520 = vmatprep.subr.mxu0 0.0
  %1521 = vmatpush1.msra.mxu0 0.0
  %1522 = vmatprep.subr.mxu0 0.0
  %1523 = vmatpush1.msra.mxu0 0.0
  %1524 = vmatprep.subr.mxu0 0.0
  %1525 = vmatpush1.msra.mxu0 0.0
  %1526 = vmatprep.subr.mxu0 0.0
  %1527 = vmatpush1.msra.mxu0 0.0
  %1528 = vmatprep.subr.mxu0 0.0
  %1529 = vmatpush1.msra.mxu0 0.0
  %1530 = vmatprep.subr.mxu0 0.0
  %1531 = vmatpush1.msra.mxu0 0.0
  %1532 = vmatprep.mubr.f32.mxu0 0.0
  %1533 = vmatmul.mubr.f32.gmra.mrb[0].mxu0 %v491
  %v1534 = vpop.f32.mrb[0].mxu0
  %v1535 = vadd.f32 %v1421, %v1534
  %v1536 = vpop.f32.mrb[0].mxu0
  %1537 = vmatprep.mubr.f32.mxu0 0.0
  %1538 = vmatmul.mubr.f32.gmra.mrb[0].mxu0 %v494
  %v1539 = vpop.f32.mrb[0].mxu0
  %v1540 = vadd.f32 %v1423, %v1539
  %v1541 = vpop.f32.mrb[0].mxu0
  %1542 = vmatprep.mubr.f32.mxu0 0.0
  %1543 = vmatmul.mubr.f32.gmra.mrb[0].mxu0 %v497
  %v1544 = vpop.f32.mrb[0].mxu0
  %v1545 = vadd.f32 %v1425, %v1544
  %v1546 = vpop.f32.mrb[0].mxu0
  %1547 = vmatprep.mubr.f32.mxu0 0.0
  %1548 = vmatmul.mubr.f32.gmra.mrb[0].mxu0 %v500
  %v1549 = vpop.f32.mrb[0].mxu0
  %v1550 = vadd.f32 %v1427, %v1549
  %v1551 = vpop.f32.mrb[0].mxu0
  %1552 = vmatprep.mubr.f32.mxu0 0.0
  %1553 = vmatmul.mubr.f32.gmra.mrb[0].mxu0 %v503
  %v1554 = vpop.f32.mrb[0].mxu0
  %v1555 = vadd.f32 %v1429, %v1554
  %v1556 = vpop.f32.mrb[0].mxu0
  %1557 = vmatprep.mubr.f32.mxu0 0.0
  %1558 = vmatmul.mubr.f32.gmra.mrb[0].mxu0 %v506
  %v1559 = vpop.f32.mrb[0].mxu0
  %v1560 = vadd.f32 %v1431, %v1559
  %v1561 = vpop.f32.mrb[0].mxu0
  %1562 = vmatprep.mubr.f32.mxu0 0.0
  %1563 = vmatmul.mubr.f32.gmra.mrb[0].mxu0 %v509
  %v1564 = vpop.f32.mrb[0].mxu0
  %v1565 = vadd.f32 %v1433, %v1564
  %v1566 = vpop.f32.mrb[0].mxu0
  %1567 = vmatprep.mubr.f32.mxu0 0.0
  %1568 = vmatmul.mubr.f32.gmra.mrb[0].mxu0 %v512
  %v1569 = vpop.f32.mrb[0].mxu0
  %v1570 = vadd.f32 %v1435, %v1569
  %v1571 = vpop.f32.mrb[0].mxu0
  %1572 = vmatprep.mubr.f32.mxu0 0.0
  %1573 = vmatmul.mubr.f32.gmra.mrb[0].mxu0 %v515
  %v1574 = vpop.f32.mrb[0].mxu0
  %v1575 = vadd.f32 %v1437, %v1574
  %v1576 = vpop.f32.mrb[0].mxu0
  %1577 = vmatprep.mubr.f32.mxu0 0.0
  %1578 = vmatmul.mubr.f32.gmra.mrb[0].mxu0 %v518
  %v1579 = vpop.f32.mrb[0].mxu0
  %v1580 = vadd.f32 %v1439, %v1579
  %v1581 = vpop.f32.mrb[0].mxu0
  %1582 = vmatprep.mubr.f32.mxu0 0.0
  %1583 = vmatmul.mubr.f32.gmra.mrb[0].mxu0 %v521
  %v1584 = vpop.f32.mrb[0].mxu0
  %v1585 = vadd.f32 %v1441, %v1584
  %v1586 = vpop.f32.mrb[0].mxu0
  %1587 = vmatprep.mubr.f32.mxu0 0.0
  %1588 = vmatmul.mubr.f32.gmra.mrb[0].mxu0 %v524
  %v1589 = vpop.f32.mrb[0].mxu0
  %v1590 = vadd.f32 %v1443, %v1589
  %v1591 = vpop.f32.mrb[0].mxu0
  %1592 = vmatprep.mubr.f32.mxu0 0.0
  %1593 = vmatmul.mubr.f32.gmra.mrb[0].mxu0 %v527
  %v1594 = vpop.f32.mrb[0].mxu0
  %v1595 = vadd.f32 %v1445, %v1594
  %v1596 = vpop.f32.mrb[0].mxu0
  %1597 = vmatprep.mubr.f32.mxu0 0.0
  %1598 = vmatmul.mubr.f32.gmra.mrb[0].mxu0 %v530
  %v1599 = vpop.f32.mrb[0].mxu0
  %v1600 = vadd.f32 %v1447, %v1599
  %v1601 = vpop.f32.mrb[0].mxu0
  %1602 = vmatprep.mubr.f32.mxu0 0.0
  %1603 = vmatmul.mubr.f32.gmra.mrb[0].mxu0 %v533
  %v1604 = vpop.f32.mrb[0].mxu0
  %v1605 = vadd.f32 %v1449, %v1604
  %v1606 = vpop.f32.mrb[0].mxu0
  %1607 = vmatprep.mubr.f32.mxu0 0.0
  %1608 = vmatmul.mubr.f32.gmra.mrb[0].mxu0 %v536
  %v1609 = vpop.f32.mrb[0].mxu0
  %v1610 = vadd.f32 %v1451, %v1609
  %v1611 = vpop.f32.mrb[0].mxu0
  %1612 = vdwg.mxu0
  %v1613 = vxor.u32 %v1535, 2147483648
  %v1614 = vxor.u32 %v1540, 2147483648
  %v1615 = vxor.u32 %v1545, 2147483648
  %v1616 = vxor.u32 %v1550, 2147483648
  %v1617 = vmul.f32 %v1613, 1.442695
  %v1618 = vpow.pop %v1617
  %v1619 = vmul.f32 %v1614, 1.442695
  %v1620 = vpow.pop %v1619
  %v1621 = vmul.f32 %v1615, 1.442695
  %v1622 = vpow.pop %v1621
  %v1623 = vmul.f32 %v1616, 1.442695
  %v1624 = vpow.pop %v1623
  %v1625 = vadd.f32 %v1618, 1.0
  %v1626 = vadd.f32 %v1620, 1.0
  %v1627 = vadd.f32 %v1622, 1.0
  %v1628 = vadd.f32 %v1624, 1.0
  %v1629 = vrcp.pop %v1625
  %v1630 = vmul.f32 1.0, %v1629
  %v1631 = vrcp.pop %v1626
  %v1632 = vmul.f32 1.0, %v1631
  %v1633 = vrcp.pop %v1627
  %v1634 = vmul.f32 1.0, %v1633
  %v1635 = vrcp.pop %v1628
  %v1636 = vmul.f32 1.0, %v1635
  %v1637 = vxor.u32 %v1555, 2147483648
  %v1638 = vxor.u32 %v1560, 2147483648
  %v1639 = vxor.u32 %v1565, 2147483648
  %v1640 = vxor.u32 %v1570, 2147483648
  %v1641 = vmul.f32 %v1637, 1.442695
  %v1642 = vpow.pop %v1641
  %v1643 = vmul.f32 %v1638, 1.442695
  %v1644 = vpow.pop %v1643
  %v1645 = vmul.f32 %v1639, 1.442695
  %v1646 = vpow.pop %v1645
  %v1647 = vmul.f32 %v1640, 1.442695
  %v1648 = vpow.pop %v1647
  %v1649 = vadd.f32 %v1642, 1.0
  %v1650 = vadd.f32 %v1644, 1.0
  %v1651 = vadd.f32 %v1646, 1.0
  %v1652 = vadd.f32 %v1648, 1.0
  %v1653 = vrcp.pop %v1649
  %v1654 = vmul.f32 1.0, %v1653
  %v1655 = vrcp.pop %v1650
  %v1656 = vmul.f32 1.0, %v1655
  %v1657 = vrcp.pop %v1651
  %v1658 = vmul.f32 1.0, %v1657
  %v1659 = vrcp.pop %v1652
  %v1660 = vmul.f32 1.0, %v1659
  %v1661 = vtanh.pop %v1575
  %v1662 = vtanh.pop %v1580
  %v1663 = vtanh.pop %v1585
  %v1664 = vtanh.pop %v1590
  %v1665 = vxor.u32 %v1595, 2147483648
  %v1666 = vxor.u32 %v1600, 2147483648
  %v1667 = vxor.u32 %v1605, 2147483648
  %v1668 = vxor.u32 %v1610, 2147483648
  %v1669 = vmul.f32 %v1665, 1.442695
  %v1670 = vpow.pop %v1669
  %v1671 = vmul.f32 %v1666, 1.442695
  %v1672 = vpow.pop %v1671
  %v1673 = vmul.f32 %v1667, 1.442695
  %v1674 = vpow.pop %v1673
  %v1675 = vmul.f32 %v1668, 1.442695
  %v1676 = vpow.pop %v1675
  %v1677 = vadd.f32 %v1670, 1.0
  %v1678 = vadd.f32 %v1672, 1.0
  %v1679 = vadd.f32 %v1674, 1.0
  %v1680 = vadd.f32 %v1676, 1.0
  %v1681 = vrcp.pop %v1677
  %v1682 = vmul.f32 1.0, %v1681
  %v1683 = vrcp.pop %v1678
  %v1684 = vmul.f32 1.0, %v1683
  %v1685 = vrcp.pop %v1679
  %v1686 = vmul.f32 1.0, %v1685
  %v1687 = vrcp.pop %v1680
  %v1688 = vmul.f32 1.0, %v1687
  %v1689 = vmul.f32 %v1654, %v1387
  %v1690 = vmul.f32 %v1656, %v1388
  %v1691 = vmul.f32 %v1658, %v1389
  %v1692 = vmul.f32 %v1660, %v1390
  %v1693 = vmul.f32 %v1630, %v1661
  %v1694 = vmul.f32 %v1632, %v1662
  %v1695 = vmul.f32 %v1634, %v1663
  %v1696 = vmul.f32 %v1636, %v1664
  %v1697 = vadd.f32 %v1689, %v1693
  %v1698 = vadd.f32 %v1690, %v1694
  %v1699 = vadd.f32 %v1691, %v1695
  %v1700 = vadd.f32 %v1692, %v1696
  %v1701 = vtanh.pop %v1697
  %v1702 = vtanh.pop %v1698
  %v1703 = vtanh.pop %v1699
  %v1704 = vtanh.pop %v1700
  %v1705 = vmul.f32 %v1682, %v1701
  %v1706 = vmul.f32 %v1684, %v1702
  %v1707 = vmul.f32 %v1686, %v1703
  %v1708 = vmul.f32 %v1688, %v1704
  %1713 = vrot.lane.b32.xlu0 %v1705, 8
  %v1714 = vpop.permute.xlu0 %1713
  %1715 = vrot.lane.b32.xlu0 %v1706, 8
  %v1716 = vpop.permute.xlu0 %1715
  %1717 = vrot.lane.b32.xlu0 %v1707, 8
  %v1718 = vpop.permute.xlu0 %1717
  %1719 = vrot.lane.b32.xlu0 %v1708, 8
  %v1720 = vpop.permute.xlu0 %1719
  %vm1725 = vcmask 80960
  %1726 = vst.msk [vmem:[#allocation2] sm:$0xff] %vm1725, %v1714
  %1727 = vst.msk [vmem:[#allocation2 + $0x8] sm:$0xff] %vm1725, %v1716
  %1728 = vst.msk [vmem:[#allocation2 + $0x10] sm:$0xff] %vm1725, %v1718
  %1729 = vst.msk [vmem:[#allocation2 + $0x18] sm:$0xff] %vm1725, %v1720
  %1730 = vrot.lane.b32.xlu0 %v262, 118
  %v1731 = vpop.permute.xlu0 %1730
  %1732 = vrot.lane.b32.xlu0 %v267, 118
  %v1733 = vpop.permute.xlu0 %1732
  %1734 = vrot.lane.b32.xlu0 %v272, 118
  %v1735 = vpop.permute.xlu0 %1734
  %1736 = vrot.lane.b32.xlu0 %v277, 118
  %v1737 = vpop.permute.xlu0 %1736
  %1738 = vrot.lane.b32.xlu0 %v282, 118
  %v1739 = vpop.permute.xlu0 %1738
  %1740 = vrot.lane.b32.xlu0 %v287, 118
  %v1741 = vpop.permute.xlu0 %1740
  %1742 = vrot.lane.b32.xlu0 %v292, 118
  %v1743 = vpop.permute.xlu0 %1742
  %1744 = vrot.lane.b32.xlu0 %v297, 118
  %v1745 = vpop.permute.xlu0 %1744
  %1746 = vrot.lane.b32.xlu0 %v302, 118
  %v1747 = vpop.permute.xlu0 %1746
  %1748 = vrot.lane.b32.xlu0 %v307, 118
  %v1749 = vpop.permute.xlu0 %1748
  %1750 = vrot.lane.b32.xlu0 %v312, 118
  %v1751 = vpop.permute.xlu0 %1750
  %1752 = vrot.lane.b32.xlu0 %v317, 118
  %v1753 = vpop.permute.xlu0 %1752
  %1754 = vrot.lane.b32.xlu0 %v322, 118
  %v1755 = vpop.permute.xlu0 %1754
  %1756 = vrot.lane.b32.xlu0 %v327, 118
  %v1757 = vpop.permute.xlu0 %1756
  %1758 = vrot.lane.b32.xlu0 %v332, 118
  %v1759 = vpop.permute.xlu0 %1758
  %1760 = vrot.lane.b32.xlu0 %v337, 118
  %v1761 = vpop.permute.xlu0 %1760
  %1778 = vmatprep.subr.mxu0 0.0
  %1779 = vmatpush1.msra.mxu0 %v1705
  %1780 = vmatprep.subr.mxu0 0.0
  %1781 = vmatpush1.msra.mxu0 %v1706
  %1782 = vmatprep.subr.mxu0 0.0
  %1783 = vmatpush1.msra.mxu0 %v1707
  %1784 = vmatprep.subr.mxu0 0.0
  %1785 = vmatpush1.msra.mxu0 %v1708
  %1786 = vmatprep.subr.mxu0 0.0
  %1787 = vmatpush1.msra.mxu0 0.0
  %1788 = vmatprep.subr.mxu0 0.0
  %1789 = vmatpush1.msra.mxu0 0.0
  %1790 = vmatprep.subr.mxu0 0.0
  %1791 = vmatpush1.msra.mxu0 0.0
  %1792 = vmatprep.subr.mxu0 0.0
  %1793 = vmatpush1.msra.mxu0 0.0
  %1794 = vmatprep.subr.mxu0 0.0
  %1795 = vmatpush1.msra.mxu0 0.0
  %1796 = vmatprep.subr.mxu0 0.0
  %1797 = vmatpush1.msra.mxu0 0.0
  %1798 = vmatprep.subr.mxu0 0.0
  %1799 = vmatpush1.msra.mxu0 0.0
  %1800 = vmatprep.subr.mxu0 0.0
  %1801 = vmatpush1.msra.mxu0 0.0
  %1802 = vmatprep.subr.mxu0 0.0
  %1803 = vmatpush1.msra.mxu0 0.0
  %1804 = vmatprep.subr.mxu0 0.0
  %1805 = vmatpush1.msra.mxu0 0.0
  %1806 = vmatprep.subr.mxu0 0.0
  %1807 = vmatpush1.msra.mxu0 0.0
  %1808 = vmatprep.subr.mxu0 0.0
  %1809 = vmatpush1.msra.mxu0 0.0
  %1810 = vmatprep.subr.mxu0 0.0
  %1811 = vmatpush1.msra.mxu0 0.0
  %1812 = vmatprep.subr.mxu0 0.0
  %1813 = vmatpush1.msra.mxu0 0.0
  %1814 = vmatprep.subr.mxu0 0.0
  %1815 = vmatpush1.msra.mxu0 0.0
  %1816 = vmatprep.subr.mxu0 0.0
  %1817 = vmatpush1.msra.mxu0 0.0
  %1818 = vmatprep.subr.mxu0 0.0
  %1819 = vmatpush1.msra.mxu0 0.0
  %1820 = vmatprep.subr.mxu0 0.0
  %1821 = vmatpush1.msra.mxu0 0.0
  %1822 = vmatprep.subr.mxu0 0.0
  %1823 = vmatpush1.msra.mxu0 0.0
  %1824 = vmatprep.subr.mxu0 0.0
  %1825 = vmatpush1.msra.mxu0 0.0
  %1826 = vmatprep.subr.mxu0 0.0
  %1827 = vmatpush1.msra.mxu0 0.0
  %1828 = vmatprep.subr.mxu0 0.0
  %1829 = vmatpush1.msra.mxu0 0.0
  %1830 = vmatprep.subr.mxu0 0.0
  %1831 = vmatpush1.msra.mxu0 0.0
  %1832 = vmatprep.subr.mxu0 0.0
  %1833 = vmatpush1.msra.mxu0 0.0
  %1834 = vmatprep.subr.mxu0 0.0
  %1835 = vmatpush1.msra.mxu0 0.0
  %1836 = vmatprep.subr.mxu0 0.0
  %1837 = vmatpush1.msra.mxu0 0.0
  %1838 = vmatprep.subr.mxu0 0.0
  %1839 = vmatpush1.msra.mxu0 0.0
  %1840 = vmatprep.subr.mxu0 0.0
  %1841 = vmatpush1.msra.mxu0 0.0
  %1842 = vmatprep.mubr.f32.mxu0 0.0
  %1843 = vmatmul.mubr.f32.gmra.mrb[0].mxu0 %v491
  %v1844 = vpop.f32.mrb[0].mxu0
  %v1845 = vadd.f32 %v1731, %v1844
  %v1846 = vpop.f32.mrb[0].mxu0
  %1847 = vmatprep.mubr.f32.mxu0 0.0
  %1848 = vmatmul.mubr.f32.gmra.mrb[0].mxu0 %v494
  %v1849 = vpop.f32.mrb[0].mxu0
  %v1850 = vadd.f32 %v1733, %v1849
  %v1851 = vpop.f32.mrb[0].mxu0
  %1852 = vmatprep.mubr.f32.mxu0 0.0
  %1853 = vmatmul.mubr.f32.gmra.mrb[0].mxu0 %v497
  %v1854 = vpop.f32.mrb[0].mxu0
  %v1855 = vadd.f32 %v1735, %v1854
  %v1856 = vpop.f32.mrb[0].mxu0
  %1857 = vmatprep.mubr.f32.mxu0 0.0
  %1858 = vmatmul.mubr.f32.gmra.mrb[0].mxu0 %v500
  %v1859 = vpop.f32.mrb[0].mxu0
  %v1860 = vadd.f32 %v1737, %v1859
  %v1861 = vpop.f32.mrb[0].mxu0
  %1862 = vmatprep.mubr.f32.mxu0 0.0
  %1863 = vmatmul.mubr.f32.gmra.mrb[0].mxu0 %v503
  %v1864 = vpop.f32.mrb[0].mxu0
  %v1865 = vadd.f32 %v1739, %v1864
  %v1866 = vpop.f32.mrb[0].mxu0
  %1867 = vmatprep.mubr.f32.mxu0 0.0
  %1868 = vmatmul.mubr.f32.gmra.mrb[0].mxu0 %v506
  %v1869 = vpop.f32.mrb[0].mxu0
  %v1870 = vadd.f32 %v1741, %v1869
  %v1871 = vpop.f32.mrb[0].mxu0
  %1872 = vmatprep.mubr.f32.mxu0 0.0
  %1873 = vmatmul.mubr.f32.gmra.mrb[0].mxu0 %v509
  %v1874 = vpop.f32.mrb[0].mxu0
  %v1875 = vadd.f32 %v1743, %v1874
  %v1876 = vpop.f32.mrb[0].mxu0
  %1877 = vmatprep.mubr.f32.mxu0 0.0
  %1878 = vmatmul.mubr.f32.gmra.mrb[0].mxu0 %v512
  %v1879 = vpop.f32.mrb[0].mxu0
  %v1880 = vadd.f32 %v1745, %v1879
  %v1881 = vpop.f32.mrb[0].mxu0
  %1882 = vmatprep.mubr.f32.mxu0 0.0
  %1883 = vmatmul.mubr.f32.gmra.mrb[0].mxu0 %v515
  %v1884 = vpop.f32.mrb[0].mxu0
  %v1885 = vadd.f32 %v1747, %v1884
  %v1886 = vpop.f32.mrb[0].mxu0
  %1887 = vmatprep.mubr.f32.mxu0 0.0
  %1888 = vmatmul.mubr.f32.gmra.mrb[0].mxu0 %v518
  %v1889 = vpop.f32.mrb[0].mxu0
  %v1890 = vadd.f32 %v1749, %v1889
  %v1891 = vpop.f32.mrb[0].mxu0
  %1892 = vmatprep.mubr.f32.mxu0 0.0
  %1893 = vmatmul.mubr.f32.gmra.mrb[0].mxu0 %v521
  %v1894 = vpop.f32.mrb[0].mxu0
  %v1895 = vadd.f32 %v1751, %v1894
  %v1896 = vpop.f32.mrb[0].mxu0
  %1897 = vmatprep.mubr.f32.mxu0 0.0
  %1898 = vmatmul.mubr.f32.gmra.mrb[0].mxu0 %v524
  %v1899 = vpop.f32.mrb[0].mxu0
  %v1900 = vadd.f32 %v1753, %v1899
  %v1901 = vpop.f32.mrb[0].mxu0
  %1902 = vmatprep.mubr.f32.mxu0 0.0
  %1903 = vmatmul.mubr.f32.gmra.mrb[0].mxu0 %v527
  %v1904 = vpop.f32.mrb[0].mxu0
  %v1905 = vadd.f32 %v1755, %v1904
  %v1906 = vpop.f32.mrb[0].mxu0
  %1907 = vmatprep.mubr.f32.mxu0 0.0
  %1908 = vmatmul.mubr.f32.gmra.mrb[0].mxu0 %v530
  %v1909 = vpop.f32.mrb[0].mxu0
  %v1910 = vadd.f32 %v1757, %v1909
  %v1911 = vpop.f32.mrb[0].mxu0
  %1912 = vmatprep.mubr.f32.mxu0 0.0
  %1913 = vmatmul.mubr.f32.gmra.mrb[0].mxu0 %v533
  %v1914 = vpop.f32.mrb[0].mxu0
  %v1915 = vadd.f32 %v1759, %v1914
  %v1916 = vpop.f32.mrb[0].mxu0
  %1917 = vmatprep.mubr.f32.mxu0 0.0
  %1918 = vmatmul.mubr.f32.gmra.mrb[0].mxu0 %v536
  %v1919 = vpop.f32.mrb[0].mxu0
  %v1920 = vadd.f32 %v1761, %v1919
  %v1921 = vpop.f32.mrb[0].mxu0
  %1922 = vdwg.mxu0
  %v1923 = vxor.u32 %v1845, 2147483648
  %v1924 = vxor.u32 %v1850, 2147483648
  %v1925 = vxor.u32 %v1855, 2147483648
  %v1926 = vxor.u32 %v1860, 2147483648
  %v1927 = vmul.f32 %v1923, 1.442695
  %v1928 = vpow.pop %v1927
  %v1929 = vmul.f32 %v1924, 1.442695
  %v1930 = vpow.pop %v1929
  %v1931 = vmul.f32 %v1925, 1.442695
  %v1932 = vpow.pop %v1931
  %v1933 = vmul.f32 %v1926, 1.442695
  %v1934 = vpow.pop %v1933
  %v1935 = vadd.f32 %v1928, 1.0
  %v1936 = vadd.f32 %v1930, 1.0
  %v1937 = vadd.f32 %v1932, 1.0
  %v1938 = vadd.f32 %v1934, 1.0
  %v1939 = vrcp.pop %v1935
  %v1940 = vmul.f32 1.0, %v1939
  %v1941 = vrcp.pop %v1936
  %v1942 = vmul.f32 1.0, %v1941
  %v1943 = vrcp.pop %v1937
  %v1944 = vmul.f32 1.0, %v1943
  %v1945 = vrcp.pop %v1938
  %v1946 = vmul.f32 1.0, %v1945
  %v1947 = vxor.u32 %v1865, 2147483648
  %v1948 = vxor.u32 %v1870, 2147483648
  %v1949 = vxor.u32 %v1875, 2147483648
  %v1950 = vxor.u32 %v1880, 2147483648
  %v1951 = vmul.f32 %v1947, 1.442695
  %v1952 = vpow.pop %v1951
  %v1953 = vmul.f32 %v1948, 1.442695
  %v1954 = vpow.pop %v1953
  %v1955 = vmul.f32 %v1949, 1.442695
  %v1956 = vpow.pop %v1955
  %v1957 = vmul.f32 %v1950, 1.442695
  %v1958 = vpow.pop %v1957
  %v1959 = vadd.f32 %v1952, 1.0
  %v1960 = vadd.f32 %v1954, 1.0
  %v1961 = vadd.f32 %v1956, 1.0
  %v1962 = vadd.f32 %v1958, 1.0
  %v1963 = vrcp.pop %v1959
  %v1964 = vmul.f32 1.0, %v1963
  %v1965 = vrcp.pop %v1960
  %v1966 = vmul.f32 1.0, %v1965
  %v1967 = vrcp.pop %v1961
  %v1968 = vmul.f32 1.0, %v1967
  %v1969 = vrcp.pop %v1962
  %v1970 = vmul.f32 1.0, %v1969
  %v1971 = vtanh.pop %v1885
  %v1972 = vtanh.pop %v1890
  %v1973 = vtanh.pop %v1895
  %v1974 = vtanh.pop %v1900
  %v1975 = vxor.u32 %v1905, 2147483648
  %v1976 = vxor.u32 %v1910, 2147483648
  %v1977 = vxor.u32 %v1915, 2147483648
  %v1978 = vxor.u32 %v1920, 2147483648
  %v1979 = vmul.f32 %v1975, 1.442695
  %v1980 = vpow.pop %v1979
  %v1981 = vmul.f32 %v1976, 1.442695
  %v1982 = vpow.pop %v1981
  %v1983 = vmul.f32 %v1977, 1.442695
  %v1984 = vpow.pop %v1983
  %v1985 = vmul.f32 %v1978, 1.442695
  %v1986 = vpow.pop %v1985
  %v1987 = vadd.f32 %v1980, 1.0
  %v1988 = vadd.f32 %v1982, 1.0
  %v1989 = vadd.f32 %v1984, 1.0
  %v1990 = vadd.f32 %v1986, 1.0
  %v1991 = vrcp.pop %v1987
  %v1992 = vmul.f32 1.0, %v1991
  %v1993 = vrcp.pop %v1988
  %v1994 = vmul.f32 1.0, %v1993
  %v1995 = vrcp.pop %v1989
  %v1996 = vmul.f32 1.0, %v1995
  %v1997 = vrcp.pop %v1990
  %v1998 = vmul.f32 1.0, %v1997
  %v1999 = vmul.f32 %v1964, %v1697
  %v2000 = vmul.f32 %v1966, %v1698
  %v2001 = vmul.f32 %v1968, %v1699
  %v2002 = vmul.f32 %v1970, %v1700
  %v2003 = vmul.f32 %v1940, %v1971
  %v2004 = vmul.f32 %v1942, %v1972
  %v2005 = vmul.f32 %v1944, %v1973
  %v2006 = vmul.f32 %v1946, %v1974
  %v2007 = vadd.f32 %v1999, %v2003
  %v2008 = vadd.f32 %v2000, %v2004
  %v2009 = vadd.f32 %v2001, %v2005
  %v2010 = vadd.f32 %v2002, %v2006
  %v2011 = vtanh.pop %v2007
  %v2012 = vtanh.pop %v2008
  %v2013 = vtanh.pop %v2009
  %v2014 = vtanh.pop %v2010
  %v2015 = vmul.f32 %v1992, %v2011
  %v2016 = vmul.f32 %v1994, %v2012
  %v2017 = vmul.f32 %v1996, %v2013
  %v2018 = vmul.f32 %v1998, %v2014
  %2023 = vrot.lane.b32.xlu0 %v2015, 10
  %v2024 = vpop.permute.xlu0 %2023
  %2025 = vrot.lane.b32.xlu0 %v2016, 10
  %v2026 = vpop.permute.xlu0 %2025
  %2027 = vrot.lane.b32.xlu0 %v2017, 10
  %v2028 = vpop.permute.xlu0 %2027
  %2029 = vrot.lane.b32.xlu0 %v2018, 10
  %v2030 = vpop.permute.xlu0 %2029
  %vm2035 = vcmask 97360
  %2036 = vst.msk [vmem:[#allocation2] sm:$0xff] %vm2035, %v2024
  %2037 = vst.msk [vmem:[#allocation2 + $0x8] sm:$0xff] %vm2035, %v2026
  %2038 = vst.msk [vmem:[#allocation2 + $0x10] sm:$0xff] %vm2035, %v2028
  %2039 = vst.msk [vmem:[#allocation2 + $0x18] sm:$0xff] %vm2035, %v2030
  %2040 = vrot.lane.b32.xlu0 %v262, 116
  %v2041 = vpop.permute.xlu0 %2040
  %2042 = vrot.lane.b32.xlu0 %v267, 116
  %v2043 = vpop.permute.xlu0 %2042
  %2044 = vrot.lane.b32.xlu0 %v272, 116
  %v2045 = vpop.permute.xlu0 %2044
  %2046 = vrot.lane.b32.xlu0 %v277, 116
  %v2047 = vpop.permute.xlu0 %2046
  %2048 = vrot.lane.b32.xlu0 %v282, 116
  %v2049 = vpop.permute.xlu0 %2048
  %2050 = vrot.lane.b32.xlu0 %v287, 116
  %v2051 = vpop.permute.xlu0 %2050
  %2052 = vrot.lane.b32.xlu0 %v292, 116
  %v2053 = vpop.permute.xlu0 %2052
  %2054 = vrot.lane.b32.xlu0 %v297, 116
  %v2055 = vpop.permute.xlu0 %2054
  %2056 = vrot.lane.b32.xlu0 %v302, 116
  %v2057 = vpop.permute.xlu0 %2056
  %2058 = vrot.lane.b32.xlu0 %v307, 116
  %v2059 = vpop.permute.xlu0 %2058
  %2060 = vrot.lane.b32.xlu0 %v312, 116
  %v2061 = vpop.permute.xlu0 %2060
  %2062 = vrot.lane.b32.xlu0 %v317, 116
  %v2063 = vpop.permute.xlu0 %2062
  %2064 = vrot.lane.b32.xlu0 %v322, 116
  %v2065 = vpop.permute.xlu0 %2064
  %2066 = vrot.lane.b32.xlu0 %v327, 116
  %v2067 = vpop.permute.xlu0 %2066
  %2068 = vrot.lane.b32.xlu0 %v332, 116
  %v2069 = vpop.permute.xlu0 %2068
  %2070 = vrot.lane.b32.xlu0 %v337, 116
  %v2071 = vpop.permute.xlu0 %2070
  %2088 = vmatprep.subr.mxu0 0.0
  %2089 = vmatpush1.msra.mxu0 %v2015
  %2090 = vmatprep.subr.mxu0 0.0
  %2091 = vmatpush1.msra.mxu0 %v2016
  %2092 = vmatprep.subr.mxu0 0.0
  %2093 = vmatpush1.msra.mxu0 %v2017
  %2094 = vmatprep.subr.mxu0 0.0
  %2095 = vmatpush1.msra.mxu0 %v2018
  %2096 = vmatprep.subr.mxu0 0.0
  %2097 = vmatpush1.msra.mxu0 0.0
  %2098 = vmatprep.subr.mxu0 0.0
  %2099 = vmatpush1.msra.mxu0 0.0
  %2100 = vmatprep.subr.mxu0 0.0
  %2101 = vmatpush1.msra.mxu0 0.0
  %2102 = vmatprep.subr.mxu0 0.0
  %2103 = vmatpush1.msra.mxu0 0.0
  %2104 = vmatprep.subr.mxu0 0.0
  %2105 = vmatpush1.msra.mxu0 0.0
  %2106 = vmatprep.subr.mxu0 0.0
  %2107 = vmatpush1.msra.mxu0 0.0
  %2108 = vmatprep.subr.mxu0 0.0
  %2109 = vmatpush1.msra.mxu0 0.0
  %2110 = vmatprep.subr.mxu0 0.0
  %2111 = vmatpush1.msra.mxu0 0.0
  %2112 = vmatprep.subr.mxu0 0.0
  %2113 = vmatpush1.msra.mxu0 0.0
  %2114 = vmatprep.subr.mxu0 0.0
  %2115 = vmatpush1.msra.mxu0 0.0
  %2116 = vmatprep.subr.mxu0 0.0
  %2117 = vmatpush1.msra.mxu0 0.0
  %2118 = vmatprep.subr.mxu0 0.0
  %2119 = vmatpush1.msra.mxu0 0.0
  %2120 = vmatprep.subr.mxu0 0.0
  %2121 = vmatpush1.msra.mxu0 0.0
  %2122 = vmatprep.subr.mxu0 0.0
  %2123 = vmatpush1.msra.mxu0 0.0
  %2124 = vmatprep.subr.mxu0 0.0
  %2125 = vmatpush1.msra.mxu0 0.0
  %2126 = vmatprep.subr.mxu0 0.0
  %2127 = vmatpush1.msra.mxu0 0.0
  %2128 = vmatprep.subr.mxu0 0.0
  %2129 = vmatpush1.msra.mxu0 0.0
  %2130 = vmatprep.subr.mxu0 0.0
  %2131 = vmatpush1.msra.mxu0 0.0
  %2132 = vmatprep.subr.mxu0 0.0
  %2133 = vmatpush1.msra.mxu0 0.0
  %2134 = vmatprep.subr.mxu0 0.0
  %2135 = vmatpush1.msra.mxu0 0.0
  %2136 = vmatprep.subr.mxu0 0.0
  %2137 = vmatpush1.msra.mxu0 0.0
  %2138 = vmatprep.subr.mxu0 0.0
  %2139 = vmatpush1.msra.mxu0 0.0
  %2140 = vmatprep.subr.mxu0 0.0
  %2141 = vmatpush1.msra.mxu0 0.0
  %2142 = vmatprep.subr.mxu0 0.0
  %2143 = vmatpush1.msra.mxu0 0.0
  %2144 = vmatprep.subr.mxu0 0.0
  %2145 = vmatpush1.msra.mxu0 0.0
  %2146 = vmatprep.subr.mxu0 0.0
  %2147 = vmatpush1.msra.mxu0 0.0
  %2148 = vmatprep.subr.mxu0 0.0
  %2149 = vmatpush1.msra.mxu0 0.0
  %2150 = vmatprep.subr.mxu0 0.0
  %2151 = vmatpush1.msra.mxu0 0.0
  %2152 = vmatprep.mubr.f32.mxu0 0.0
  %2153 = vmatmul.mubr.f32.gmra.mrb[0].mxu0 %v491
  %v2154 = vpop.f32.mrb[0].mxu0
  %v2155 = vadd.f32 %v2041, %v2154
  %v2156 = vpop.f32.mrb[0].mxu0
  %2157 = vmatprep.mubr.f32.mxu0 0.0
  %2158 = vmatmul.mubr.f32.gmra.mrb[0].mxu0 %v494
  %v2159 = vpop.f32.mrb[0].mxu0
  %v2160 = vadd.f32 %v2043, %v2159
  %v2161 = vpop.f32.mrb[0].mxu0
  %2162 = vmatprep.mubr.f32.mxu0 0.0
  %2163 = vmatmul.mubr.f32.gmra.mrb[0].mxu0 %v497
  %v2164 = vpop.f32.mrb[0].mxu0
  %v2165 = vadd.f32 %v2045, %v2164
  %v2166 = vpop.f32.mrb[0].mxu0
  %2167 = vmatprep.mubr.f32.mxu0 0.0
  %2168 = vmatmul.mubr.f32.gmra.mrb[0].mxu0 %v500
  %v2169 = vpop.f32.mrb[0].mxu0
  %v2170 = vadd.f32 %v2047, %v2169
  %v2171 = vpop.f32.mrb[0].mxu0
  %2172 = vmatprep.mubr.f32.mxu0 0.0
  %2173 = vmatmul.mubr.f32.gmra.mrb[0].mxu0 %v503
  %v2174 = vpop.f32.mrb[0].mxu0
  %v2175 = vadd.f32 %v2049, %v2174
  %v2176 = vpop.f32.mrb[0].mxu0
  %2177 = vmatprep.mubr.f32.mxu0 0.0
  %2178 = vmatmul.mubr.f32.gmra.mrb[0].mxu0 %v506
  %v2179 = vpop.f32.mrb[0].mxu0
  %v2180 = vadd.f32 %v2051, %v2179
  %v2181 = vpop.f32.mrb[0].mxu0
  %2182 = vmatprep.mubr.f32.mxu0 0.0
  %2183 = vmatmul.mubr.f32.gmra.mrb[0].mxu0 %v509
  %v2184 = vpop.f32.mrb[0].mxu0
  %v2185 = vadd.f32 %v2053, %v2184
  %v2186 = vpop.f32.mrb[0].mxu0
  %2187 = vmatprep.mubr.f32.mxu0 0.0
  %2188 = vmatmul.mubr.f32.gmra.mrb[0].mxu0 %v512
  %v2189 = vpop.f32.mrb[0].mxu0
  %v2190 = vadd.f32 %v2055, %v2189
  %v2191 = vpop.f32.mrb[0].mxu0
  %2192 = vmatprep.mubr.f32.mxu0 0.0
  %2193 = vmatmul.mubr.f32.gmra.mrb[0].mxu0 %v515
  %v2194 = vpop.f32.mrb[0].mxu0
  %v2195 = vadd.f32 %v2057, %v2194
  %v2196 = vpop.f32.mrb[0].mxu0
  %2197 = vmatprep.mubr.f32.mxu0 0.0
  %2198 = vmatmul.mubr.f32.gmra.mrb[0].mxu0 %v518
  %v2199 = vpop.f32.mrb[0].mxu0
  %v2200 = vadd.f32 %v2059, %v2199
  %v2201 = vpop.f32.mrb[0].mxu0
  %2202 = vmatprep.mubr.f32.mxu0 0.0
  %2203 = vmatmul.mubr.f32.gmra.mrb[0].mxu0 %v521
  %v2204 = vpop.f32.mrb[0].mxu0
  %v2205 = vadd.f32 %v2061, %v2204
  %v2206 = vpop.f32.mrb[0].mxu0
  %2207 = vmatprep.mubr.f32.mxu0 0.0
  %2208 = vmatmul.mubr.f32.gmra.mrb[0].mxu0 %v524
  %v2209 = vpop.f32.mrb[0].mxu0
  %v2210 = vadd.f32 %v2063, %v2209
  %v2211 = vpop.f32.mrb[0].mxu0
  %2212 = vmatprep.mubr.f32.mxu0 0.0
  %2213 = vmatmul.mubr.f32.gmra.mrb[0].mxu0 %v527
  %v2214 = vpop.f32.mrb[0].mxu0
  %v2215 = vadd.f32 %v2065, %v2214
  %v2216 = vpop.f32.mrb[0].mxu0
  %2217 = vmatprep.mubr.f32.mxu0 0.0
  %2218 = vmatmul.mubr.f32.gmra.mrb[0].mxu0 %v530
  %v2219 = vpop.f32.mrb[0].mxu0
  %v2220 = vadd.f32 %v2067, %v2219
  %v2221 = vpop.f32.mrb[0].mxu0
  %2222 = vmatprep.mubr.f32.mxu0 0.0
  %2223 = vmatmul.mubr.f32.gmra.mrb[0].mxu0 %v533
  %v2224 = vpop.f32.mrb[0].mxu0
  %v2225 = vadd.f32 %v2069, %v2224
  %v2226 = vpop.f32.mrb[0].mxu0
  %2227 = vmatprep.mubr.f32.mxu0 0.0
  %2228 = vmatmul.mubr.f32.gmra.mrb[0].mxu0 %v536
  %v2229 = vpop.f32.mrb[0].mxu0
  %v2230 = vadd.f32 %v2071, %v2229
  %v2231 = vpop.f32.mrb[0].mxu0
  %2232 = vdwg.mxu0
  %v2233 = vxor.u32 %v2155, 2147483648
  %v2234 = vxor.u32 %v2160, 2147483648
  %v2235 = vxor.u32 %v2165, 2147483648
  %v2236 = vxor.u32 %v2170, 2147483648
  %v2237 = vmul.f32 %v2233, 1.442695
  %v2238 = vpow.pop %v2237
  %v2239 = vmul.f32 %v2234, 1.442695
  %v2240 = vpow.pop %v2239
  %v2241 = vmul.f32 %v2235, 1.442695
  %v2242 = vpow.pop %v2241
  %v2243 = vmul.f32 %v2236, 1.442695
  %v2244 = vpow.pop %v2243
  %v2245 = vadd.f32 %v2238, 1.0
  %v2246 = vadd.f32 %v2240, 1.0
  %v2247 = vadd.f32 %v2242, 1.0
  %v2248 = vadd.f32 %v2244, 1.0
  %v2249 = vrcp.pop %v2245
  %v2250 = vmul.f32 1.0, %v2249
  %v2251 = vrcp.pop %v2246
  %v2252 = vmul.f32 1.0, %v2251
  %v2253 = vrcp.pop %v2247
  %v2254 = vmul.f32 1.0, %v2253
  %v2255 = vrcp.pop %v2248
  %v2256 = vmul.f32 1.0, %v2255
  %v2257 = vxor.u32 %v2175, 2147483648
  %v2258 = vxor.u32 %v2180, 2147483648
  %v2259 = vxor.u32 %v2185, 2147483648
  %v2260 = vxor.u32 %v2190, 2147483648
  %v2261 = vmul.f32 %v2257, 1.442695
  %v2262 = vpow.pop %v2261
  %v2263 = vmul.f32 %v2258, 1.442695
  %v2264 = vpow.pop %v2263
  %v2265 = vmul.f32 %v2259, 1.442695
  %v2266 = vpow.pop %v2265
  %v2267 = vmul.f32 %v2260, 1.442695
  %v2268 = vpow.pop %v2267
  %v2269 = vadd.f32 %v2262, 1.0
  %v2270 = vadd.f32 %v2264, 1.0
  %v2271 = vadd.f32 %v2266, 1.0
  %v2272 = vadd.f32 %v2268, 1.0
  %v2273 = vrcp.pop %v2269
  %v2274 = vmul.f32 1.0, %v2273
  %v2275 = vrcp.pop %v2270
  %v2276 = vmul.f32 1.0, %v2275
  %v2277 = vrcp.pop %v2271
  %v2278 = vmul.f32 1.0, %v2277
  %v2279 = vrcp.pop %v2272
  %v2280 = vmul.f32 1.0, %v2279
  %v2281 = vtanh.pop %v2195
  %v2282 = vtanh.pop %v2200
  %v2283 = vtanh.pop %v2205
  %v2284 = vtanh.pop %v2210
  %v2285 = vxor.u32 %v2215, 2147483648
  %v2286 = vxor.u32 %v2220, 2147483648
  %v2287 = vxor.u32 %v2225, 2147483648
  %v2288 = vxor.u32 %v2230, 2147483648
  %v2289 = vmul.f32 %v2285, 1.442695
  %v2290 = vpow.pop %v2289
  %v2291 = vmul.f32 %v2286, 1.442695
  %v2292 = vpow.pop %v2291
  %v2293 = vmul.f32 %v2287, 1.442695
  %v2294 = vpow.pop %v2293
  %v2295 = vmul.f32 %v2288, 1.442695
  %v2296 = vpow.pop %v2295
  %v2297 = vadd.f32 %v2290, 1.0
  %v2298 = vadd.f32 %v2292, 1.0
  %v2299 = vadd.f32 %v2294, 1.0
  %v2300 = vadd.f32 %v2296, 1.0
  %v2301 = vrcp.pop %v2297
  %v2302 = vmul.f32 1.0, %v2301
  %v2303 = vrcp.pop %v2298
  %v2304 = vmul.f32 1.0, %v2303
  %v2305 = vrcp.pop %v2299
  %v2306 = vmul.f32 1.0, %v2305
  %v2307 = vrcp.pop %v2300
  %v2308 = vmul.f32 1.0, %v2307
  %v2309 = vmul.f32 %v2274, %v2007
  %v2310 = vmul.f32 %v2276, %v2008
  %v2311 = vmul.f32 %v2278, %v2009
  %v2312 = vmul.f32 %v2280, %v2010
  %v2313 = vmul.f32 %v2250, %v2281
  %v2314 = vmul.f32 %v2252, %v2282
  %v2315 = vmul.f32 %v2254, %v2283
  %v2316 = vmul.f32 %v2256, %v2284
  %v2317 = vadd.f32 %v2309, %v2313
  %v2318 = vadd.f32 %v2310, %v2314
  %v2319 = vadd.f32 %v2311, %v2315
  %v2320 = vadd.f32 %v2312, %v2316
  %v2321 = vtanh.pop %v2317
  %v2322 = vtanh.pop %v2318
  %v2323 = vtanh.pop %v2319
  %v2324 = vtanh.pop %v2320
  %v2325 = vmul.f32 %v2302, %v2321
  %v2326 = vmul.f32 %v2304, %v2322
  %v2327 = vmul.f32 %v2306, %v2323
  %v2328 = vmul.f32 %v2308, %v2324
  %2333 = vrot.lane.b32.xlu0 %v2325, 12
  %v2334 = vpop.permute.xlu0 %2333
  %2335 = vrot.lane.b32.xlu0 %v2326, 12
  %v2336 = vpop.permute.xlu0 %2335
  %2337 = vrot.lane.b32.xlu0 %v2327, 12
  %v2338 = vpop.permute.xlu0 %2337
  %2339 = vrot.lane.b32.xlu0 %v2328, 12
  %v2340 = vpop.permute.xlu0 %2339
  %vm2345 = vcmask 113760
  %2346 = vst.msk [vmem:[#allocation2] sm:$0xff] %vm2345, %v2334
  %2347 = vst.msk [vmem:[#allocation2 + $0x8] sm:$0xff] %vm2345, %v2336
  %2348 = vst.msk [vmem:[#allocation2 + $0x10] sm:$0xff] %vm2345, %v2338
  %2349 = vst.msk [vmem:[#allocation2 + $0x18] sm:$0xff] %vm2345, %v2340
  %2350 = vrot.lane.b32.xlu0 %v262, 114
  %v2351 = vpop.permute.xlu0 %2350
  %2352 = vrot.lane.b32.xlu0 %v267, 114
  %v2353 = vpop.permute.xlu0 %2352
  %2354 = vrot.lane.b32.xlu0 %v272, 114
  %v2355 = vpop.permute.xlu0 %2354
  %2356 = vrot.lane.b32.xlu0 %v277, 114
  %v2357 = vpop.permute.xlu0 %2356
  %2358 = vrot.lane.b32.xlu0 %v282, 114
  %v2359 = vpop.permute.xlu0 %2358
  %2360 = vrot.lane.b32.xlu0 %v287, 114
  %v2361 = vpop.permute.xlu0 %2360
  %2362 = vrot.lane.b32.xlu0 %v292, 114
  %v2363 = vpop.permute.xlu0 %2362
  %2364 = vrot.lane.b32.xlu0 %v297, 114
  %v2365 = vpop.permute.xlu0 %2364
  %2366 = vrot.lane.b32.xlu0 %v302, 114
  %v2367 = vpop.permute.xlu0 %2366
  %2368 = vrot.lane.b32.xlu0 %v307, 114
  %v2369 = vpop.permute.xlu0 %2368
  %2370 = vrot.lane.b32.xlu0 %v312, 114
  %v2371 = vpop.permute.xlu0 %2370
  %2372 = vrot.lane.b32.xlu0 %v317, 114
  %v2373 = vpop.permute.xlu0 %2372
  %2374 = vrot.lane.b32.xlu0 %v322, 114
  %v2375 = vpop.permute.xlu0 %2374
  %2376 = vrot.lane.b32.xlu0 %v327, 114
  %v2377 = vpop.permute.xlu0 %2376
  %2378 = vrot.lane.b32.xlu0 %v332, 114
  %v2379 = vpop.permute.xlu0 %2378
  %2380 = vrot.lane.b32.xlu0 %v337, 114
  %v2381 = vpop.permute.xlu0 %2380
  %2398 = vmatprep.subr.mxu0 0.0
  %2399 = vmatpush1.msra.mxu0 %v2325
  %2400 = vmatprep.subr.mxu0 0.0
  %2401 = vmatpush1.msra.mxu0 %v2326
  %2402 = vmatprep.subr.mxu0 0.0
  %2403 = vmatpush1.msra.mxu0 %v2327
  %2404 = vmatprep.subr.mxu0 0.0
  %2405 = vmatpush1.msra.mxu0 %v2328
  %2406 = vmatprep.subr.mxu0 0.0
  %2407 = vmatpush1.msra.mxu0 0.0
  %2408 = vmatprep.subr.mxu0 0.0
  %2409 = vmatpush1.msra.mxu0 0.0
  %2410 = vmatprep.subr.mxu0 0.0
  %2411 = vmatpush1.msra.mxu0 0.0
  %2412 = vmatprep.subr.mxu0 0.0
  %2413 = vmatpush1.msra.mxu0 0.0
  %2414 = vmatprep.subr.mxu0 0.0
  %2415 = vmatpush1.msra.mxu0 0.0
  %2416 = vmatprep.subr.mxu0 0.0
  %2417 = vmatpush1.msra.mxu0 0.0
  %2418 = vmatprep.subr.mxu0 0.0
  %2419 = vmatpush1.msra.mxu0 0.0
  %2420 = vmatprep.subr.mxu0 0.0
  %2421 = vmatpush1.msra.mxu0 0.0
  %2422 = vmatprep.subr.mxu0 0.0
  %2423 = vmatpush1.msra.mxu0 0.0
  %2424 = vmatprep.subr.mxu0 0.0
  %2425 = vmatpush1.msra.mxu0 0.0
  %2426 = vmatprep.subr.mxu0 0.0
  %2427 = vmatpush1.msra.mxu0 0.0
  %2428 = vmatprep.subr.mxu0 0.0
  %2429 = vmatpush1.msra.mxu0 0.0
  %2430 = vmatprep.subr.mxu0 0.0
  %2431 = vmatpush1.msra.mxu0 0.0
  %2432 = vmatprep.subr.mxu0 0.0
  %2433 = vmatpush1.msra.mxu0 0.0
  %2434 = vmatprep.subr.mxu0 0.0
  %2435 = vmatpush1.msra.mxu0 0.0
  %2436 = vmatprep.subr.mxu0 0.0
  %2437 = vmatpush1.msra.mxu0 0.0
  %2438 = vmatprep.subr.mxu0 0.0
  %2439 = vmatpush1.msra.mxu0 0.0
  %2440 = vmatprep.subr.mxu0 0.0
  %2441 = vmatpush1.msra.mxu0 0.0
  %2442 = vmatprep.subr.mxu0 0.0
  %2443 = vmatpush1.msra.mxu0 0.0
  %2444 = vmatprep.subr.mxu0 0.0
  %2445 = vmatpush1.msra.mxu0 0.0
  %2446 = vmatprep.subr.mxu0 0.0
  %2447 = vmatpush1.msra.mxu0 0.0
  %2448 = vmatprep.subr.mxu0 0.0
  %2449 = vmatpush1.msra.mxu0 0.0
  %2450 = vmatprep.subr.mxu0 0.0
  %2451 = vmatpush1.msra.mxu0 0.0
  %2452 = vmatprep.subr.mxu0 0.0
  %2453 = vmatpush1.msra.mxu0 0.0
  %2454 = vmatprep.subr.mxu0 0.0
  %2455 = vmatpush1.msra.mxu0 0.0
  %2456 = vmatprep.subr.mxu0 0.0
  %2457 = vmatpush1.msra.mxu0 0.0
  %2458 = vmatprep.subr.mxu0 0.0
  %2459 = vmatpush1.msra.mxu0 0.0
  %2460 = vmatprep.subr.mxu0 0.0
  %2461 = vmatpush1.msra.mxu0 0.0
  %2462 = vmatprep.mubr.f32.mxu0 0.0
  %2463 = vmatmul.mubr.f32.gmra.mrb[0].mxu0 %v491
  %v2464 = vpop.f32.mrb[0].mxu0
  %v2465 = vadd.f32 %v2351, %v2464
  %v2466 = vpop.f32.mrb[0].mxu0
  %2467 = vmatprep.mubr.f32.mxu0 0.0
  %2468 = vmatmul.mubr.f32.gmra.mrb[0].mxu0 %v494
  %v2469 = vpop.f32.mrb[0].mxu0
  %v2470 = vadd.f32 %v2353, %v2469
  %v2471 = vpop.f32.mrb[0].mxu0
  %2472 = vmatprep.mubr.f32.mxu0 0.0
  %2473 = vmatmul.mubr.f32.gmra.mrb[0].mxu0 %v497
  %v2474 = vpop.f32.mrb[0].mxu0
  %v2475 = vadd.f32 %v2355, %v2474
  %v2476 = vpop.f32.mrb[0].mxu0
  %2477 = vmatprep.mubr.f32.mxu0 0.0
  %2478 = vmatmul.mubr.f32.gmra.mrb[0].mxu0 %v500
  %v2479 = vpop.f32.mrb[0].mxu0
  %v2480 = vadd.f32 %v2357, %v2479
  %v2481 = vpop.f32.mrb[0].mxu0
  %2482 = vmatprep.mubr.f32.mxu0 0.0
  %2483 = vmatmul.mubr.f32.gmra.mrb[0].mxu0 %v503
  %v2484 = vpop.f32.mrb[0].mxu0
  %v2485 = vadd.f32 %v2359, %v2484
  %v2486 = vpop.f32.mrb[0].mxu0
  %2487 = vmatprep.mubr.f32.mxu0 0.0
  %2488 = vmatmul.mubr.f32.gmra.mrb[0].mxu0 %v506
  %v2489 = vpop.f32.mrb[0].mxu0
  %v2490 = vadd.f32 %v2361, %v2489
  %v2491 = vpop.f32.mrb[0].mxu0
  %2492 = vmatprep.mubr.f32.mxu0 0.0
  %2493 = vmatmul.mubr.f32.gmra.mrb[0].mxu0 %v509
  %v2494 = vpop.f32.mrb[0].mxu0
  %v2495 = vadd.f32 %v2363, %v2494
  %v2496 = vpop.f32.mrb[0].mxu0
  %2497 = vmatprep.mubr.f32.mxu0 0.0
  %2498 = vmatmul.mubr.f32.gmra.mrb[0].mxu0 %v512
  %v2499 = vpop.f32.mrb[0].mxu0
  %v2500 = vadd.f32 %v2365, %v2499
  %v2501 = vpop.f32.mrb[0].mxu0
  %2502 = vmatprep.mubr.f32.mxu0 0.0
  %2503 = vmatmul.mubr.f32.gmra.mrb[0].mxu0 %v515
  %v2504 = vpop.f32.mrb[0].mxu0
  %v2505 = vadd.f32 %v2367, %v2504
  %v2506 = vpop.f32.mrb[0].mxu0
  %2507 = vmatprep.mubr.f32.mxu0 0.0
  %2508 = vmatmul.mubr.f32.gmra.mrb[0].mxu0 %v518
  %v2509 = vpop.f32.mrb[0].mxu0
  %v2510 = vadd.f32 %v2369, %v2509
  %v2511 = vpop.f32.mrb[0].mxu0
  %2512 = vmatprep.mubr.f32.mxu0 0.0
  %2513 = vmatmul.mubr.f32.gmra.mrb[0].mxu0 %v521
  %v2514 = vpop.f32.mrb[0].mxu0
  %v2515 = vadd.f32 %v2371, %v2514
  %v2516 = vpop.f32.mrb[0].mxu0
  %2517 = vmatprep.mubr.f32.mxu0 0.0
  %2518 = vmatmul.mubr.f32.gmra.mrb[0].mxu0 %v524
  %v2519 = vpop.f32.mrb[0].mxu0
  %v2520 = vadd.f32 %v2373, %v2519
  %v2521 = vpop.f32.mrb[0].mxu0
  %2522 = vmatprep.mubr.f32.mxu0 0.0
  %2523 = vmatmul.mubr.f32.gmra.mrb[0].mxu0 %v527
  %v2524 = vpop.f32.mrb[0].mxu0
  %v2525 = vadd.f32 %v2375, %v2524
  %v2526 = vpop.f32.mrb[0].mxu0
  %2527 = vmatprep.mubr.f32.mxu0 0.0
  %2528 = vmatmul.mubr.f32.gmra.mrb[0].mxu0 %v530
  %v2529 = vpop.f32.mrb[0].mxu0
  %v2530 = vadd.f32 %v2377, %v2529
  %v2531 = vpop.f32.mrb[0].mxu0
  %2532 = vmatprep.mubr.f32.mxu0 0.0
  %2533 = vmatmul.mubr.f32.gmra.mrb[0].mxu0 %v533
  %v2534 = vpop.f32.mrb[0].mxu0
  %v2535 = vadd.f32 %v2379, %v2534
  %v2536 = vpop.f32.mrb[0].mxu0
  %2537 = vmatprep.mubr.f32.mxu0 0.0
  %2538 = vmatmul.mubr.f32.gmra.mrb[0].mxu0 %v536
  %v2539 = vpop.f32.mrb[0].mxu0
  %v2540 = vadd.f32 %v2381, %v2539
  %v2541 = vpop.f32.mrb[0].mxu0
  %2542 = vdwg.mxu0
  %v2543 = vxor.u32 %v2465, 2147483648
  %v2544 = vxor.u32 %v2470, 2147483648
  %v2545 = vxor.u32 %v2475, 2147483648
  %v2546 = vxor.u32 %v2480, 2147483648
  %v2547 = vmul.f32 %v2543, 1.442695
  %v2548 = vpow.pop %v2547
  %v2549 = vmul.f32 %v2544, 1.442695
  %v2550 = vpow.pop %v2549
  %v2551 = vmul.f32 %v2545, 1.442695
  %v2552 = vpow.pop %v2551
  %v2553 = vmul.f32 %v2546, 1.442695
  %v2554 = vpow.pop %v2553
  %v2555 = vadd.f32 %v2548, 1.0
  %v2556 = vadd.f32 %v2550, 1.0
  %v2557 = vadd.f32 %v2552, 1.0
  %v2558 = vadd.f32 %v2554, 1.0
  %v2559 = vrcp.pop %v2555
  %v2560 = vmul.f32 1.0, %v2559
  %v2561 = vrcp.pop %v2556
  %v2562 = vmul.f32 1.0, %v2561
  %v2563 = vrcp.pop %v2557
  %v2564 = vmul.f32 1.0, %v2563
  %v2565 = vrcp.pop %v2558
  %v2566 = vmul.f32 1.0, %v2565
  %v2567 = vxor.u32 %v2485, 2147483648
  %v2568 = vxor.u32 %v2490, 2147483648
  %v2569 = vxor.u32 %v2495, 2147483648
  %v2570 = vxor.u32 %v2500, 2147483648
  %v2571 = vmul.f32 %v2567, 1.442695
  %v2572 = vpow.pop %v2571
  %v2573 = vmul.f32 %v2568, 1.442695
  %v2574 = vpow.pop %v2573
  %v2575 = vmul.f32 %v2569, 1.442695
  %v2576 = vpow.pop %v2575
  %v2577 = vmul.f32 %v2570, 1.442695
  %v2578 = vpow.pop %v2577
  %v2579 = vadd.f32 %v2572, 1.0
  %v2580 = vadd.f32 %v2574, 1.0
  %v2581 = vadd.f32 %v2576, 1.0
  %v2582 = vadd.f32 %v2578, 1.0
  %v2583 = vrcp.pop %v2579
  %v2584 = vmul.f32 1.0, %v2583
  %v2585 = vrcp.pop %v2580
  %v2586 = vmul.f32 1.0, %v2585
  %v2587 = vrcp.pop %v2581
  %v2588 = vmul.f32 1.0, %v2587
  %v2589 = vrcp.pop %v2582
  %v2590 = vmul.f32 1.0, %v2589
  %v2591 = vtanh.pop %v2505
  %v2592 = vtanh.pop %v2510
  %v2593 = vtanh.pop %v2515
  %v2594 = vtanh.pop %v2520
  %v2595 = vxor.u32 %v2525, 2147483648
  %v2596 = vxor.u32 %v2530, 2147483648
  %v2597 = vxor.u32 %v2535, 2147483648
  %v2598 = vxor.u32 %v2540, 2147483648
  %v2599 = vmul.f32 %v2595, 1.442695
  %v2600 = vpow.pop %v2599
  %v2601 = vmul.f32 %v2596, 1.442695
  %v2602 = vpow.pop %v2601
  %v2603 = vmul.f32 %v2597, 1.442695
  %v2604 = vpow.pop %v2603
  %v2605 = vmul.f32 %v2598, 1.442695
  %v2606 = vpow.pop %v2605
  %v2607 = vadd.f32 %v2600, 1.0
  %v2608 = vadd.f32 %v2602, 1.0
  %v2609 = vadd.f32 %v2604, 1.0
  %v2610 = vadd.f32 %v2606, 1.0
  %v2611 = vrcp.pop %v2607
  %v2612 = vmul.f32 1.0, %v2611
  %v2613 = vrcp.pop %v2608
  %v2614 = vmul.f32 1.0, %v2613
  %v2615 = vrcp.pop %v2609
  %v2616 = vmul.f32 1.0, %v2615
  %v2617 = vrcp.pop %v2610
  %v2618 = vmul.f32 1.0, %v2617
  %v2619 = vmul.f32 %v2584, %v2317
  %v2620 = vmul.f32 %v2586, %v2318
  %v2621 = vmul.f32 %v2588, %v2319
  %v2622 = vmul.f32 %v2590, %v2320
  %v2623 = vmul.f32 %v2560, %v2591
  %v2624 = vmul.f32 %v2562, %v2592
  %v2625 = vmul.f32 %v2564, %v2593
  %v2626 = vmul.f32 %v2566, %v2594
  %v2627 = vadd.f32 %v2619, %v2623
  %v2628 = vadd.f32 %v2620, %v2624
  %v2629 = vadd.f32 %v2621, %v2625
  %v2630 = vadd.f32 %v2622, %v2626
  %v2631 = vtanh.pop %v2627
  %v2632 = vtanh.pop %v2628
  %v2633 = vtanh.pop %v2629
  %v2634 = vtanh.pop %v2630
  %v2635 = vmul.f32 %v2612, %v2631
  %v2636 = vmul.f32 %v2614, %v2632
  %v2637 = vmul.f32 %v2616, %v2633
  %v2638 = vmul.f32 %v2618, %v2634
  %2643 = vrot.lane.b32.xlu0 %v2635, 14
  %v2644 = vpop.permute.xlu0 %2643
  %2645 = vrot.lane.b32.xlu0 %v2636, 14
  %v2646 = vpop.permute.xlu0 %2645
  %2647 = vrot.lane.b32.xlu0 %v2637, 14
  %v2648 = vpop.permute.xlu0 %2647
  %2649 = vrot.lane.b32.xlu0 %v2638, 14
  %v2650 = vpop.permute.xlu0 %2649
  %vm2655 = vcmask 130160
  %2656 = vst.msk [vmem:[#allocation2] sm:$0xff] %vm2655, %v2644
  %2657 = vst.msk [vmem:[#allocation2 + $0x8] sm:$0xff] %vm2655, %v2646
  %2658 = vst.msk [vmem:[#allocation2 + $0x10] sm:$0xff] %vm2655, %v2648
  %2659 = vst.msk [vmem:[#allocation2 + $0x18] sm:$0xff] %vm2655, %v2650
  %v2660 = vld [vmem:[%s4] sm:$0xff]
  %v2661 = vld [vmem:[%s4 + $0x8] sm:$0xff]
  %v2662 = vld [vmem:[%s4 + $0x10] sm:$0xff]
  %v2663 = vld [vmem:[%s4 + $0x18] sm:$0xff]
  %v2664 = vld [vmem:[#allocation2] sm:$0xff]
  %v2665 = vld [vmem:[#allocation2 + $0x8] sm:$0xff]
  %v2666 = vld [vmem:[#allocation2 + $0x10] sm:$0xff]
  %v2667 = vld [vmem:[#allocation2 + $0x18] sm:$0xff]
  %v2668 = vld [vmem:[%s5] sm:$0xff]
  %v2669 = vld [vmem:[%s5 + $0x8] sm:$0xff]
  %v2670 = vld [vmem:[%s5 + $0x10] sm:$0xff]
  %v2671 = vld [vmem:[%s5 + $0x18] sm:$0xff]
  %2673 = vset.pattern.permute.xlu0 0
  %2674 = vperm.xlu0 %2673, %v2668
  %v2675 = vpop.permute.xlu0 %2674
  %2678 = vset.pattern.permute.xlu0 0
  %2679 = vperm.xlu0 %2678, %v2669
  %v2680 = vpop.permute.xlu0 %2679
  %2683 = vset.pattern.permute.xlu0 0
  %2684 = vperm.xlu0 %2683, %v2670
  %v2685 = vpop.permute.xlu0 %2684
  %2688 = vset.pattern.permute.xlu0 0
  %2689 = vperm.xlu0 %2688, %v2671
  %v2690 = vpop.permute.xlu0 %2689
  %v2693 = vsel %vm489, %v2660, 0
  %v2696 = vsel %vm489, %v2661, 0
  %v2699 = vsel %vm489, %v2662, 0
  %v2702 = vsel %vm489, %v2663, 0
  %2704 = vmatprep.subr.mxu0 0.0
  %2705 = vmatpush1.msra.mxu0 %v2664
  %2706 = vmatprep.subr.mxu0 0.0
  %2707 = vmatpush1.msra.mxu0 %v2665
  %2708 = vmatprep.subr.mxu0 0.0
  %2709 = vmatpush1.msra.mxu0 %v2666
  %2710 = vmatprep.subr.mxu0 0.0
  %2711 = vmatpush1.msra.mxu0 %v2667
  %2712 = vmatprep.subr.mxu0 0.0
  %2713 = vmatpush1.msra.mxu0 0.0
  %2714 = vmatprep.subr.mxu0 0.0
  %2715 = vmatpush1.msra.mxu0 0.0
  %2716 = vmatprep.subr.mxu0 0.0
  %2717 = vmatpush1.msra.mxu0 0.0
  %2718 = vmatprep.subr.mxu0 0.0
  %2719 = vmatpush1.msra.mxu0 0.0
  %2720 = vmatprep.subr.mxu0 0.0
  %2721 = vmatpush1.msra.mxu0 0.0
  %2722 = vmatprep.subr.mxu0 0.0
  %2723 = vmatpush1.msra.mxu0 0.0
  %2724 = vmatprep.subr.mxu0 0.0
  %2725 = vmatpush1.msra.mxu0 0.0
  %2726 = vmatprep.subr.mxu0 0.0
  %2727 = vmatpush1.msra.mxu0 0.0
  %2728 = vmatprep.subr.mxu0 0.0
  %2729 = vmatpush1.msra.mxu0 0.0
  %2730 = vmatprep.subr.mxu0 0.0
  %2731 = vmatpush1.msra.mxu0 0.0
  %2732 = vmatprep.subr.mxu0 0.0
  %2733 = vmatpush1.msra.mxu0 0.0
  %2734 = vmatprep.subr.mxu0 0.0
  %2735 = vmatpush1.msra.mxu0 0.0
  %2736 = vmatprep.subr.mxu0 0.0
  %2737 = vmatpush1.msra.mxu0 0.0
  %2738 = vmatprep.subr.mxu0 0.0
  %2739 = vmatpush1.msra.mxu0 0.0
  %2740 = vmatprep.subr.mxu0 0.0
  %2741 = vmatpush1.msra.mxu0 0.0
  %2742 = vmatprep.subr.mxu0 0.0
  %2743 = vmatpush1.msra.mxu0 0.0
  %2744 = vmatprep.subr.mxu0 0.0
  %2745 = vmatpush1.msra.mxu0 0.0
  %2746 = vmatprep.subr.mxu0 0.0
  %2747 = vmatpush1.msra.mxu0 0.0
  %2748 = vmatprep.subr.mxu0 0.0
  %2749 = vmatpush1.msra.mxu0 0.0
  %2750 = vmatprep.subr.mxu0 0.0
  %2751 = vmatpush1.msra.mxu0 0.0
  %2752 = vmatprep.subr.mxu0 0.0
  %2753 = vmatpush1.msra.mxu0 0.0
  %2754 = vmatprep.subr.mxu0 0.0
  %2755 = vmatpush1.msra.mxu0 0.0
  %2756 = vmatprep.subr.mxu0 0.0
  %2757 = vmatpush1.msra.mxu0 0.0
  %2758 = vmatprep.subr.mxu0 0.0
  %2759 = vmatpush1.msra.mxu0 0.0
  %2760 = vmatprep.subr.mxu0 0.0
  %2761 = vmatpush1.msra.mxu0 0.0
  %2762 = vmatprep.subr.mxu0 0.0
  %2763 = vmatpush1.msra.mxu0 0.0
  %2764 = vmatprep.subr.mxu0 0.0
  %2765 = vmatpush1.msra.mxu0 0.0
  %2766 = vmatprep.subr.mxu0 0.0
  %2767 = vmatpush1.msra.mxu0 0.0
  %2768 = vmatprep.mubr.f32.mxu0 0.0
  %2769 = vmatmul.mubr.f32.gmra.mrb[0].mxu0 %v2693
  %v2770 = vpop.f32.mrb[0].mxu0
  %v2771 = vadd.f32 %v2675, %v2770
  %v2772 = vpop.f32.mrb[0].mxu0
  %2773 = vmatprep.mubr.f32.mxu0 0.0
  %2774 = vmatmul.mubr.f32.gmra.mrb[0].mxu0 %v2696
  %v2775 = vpop.f32.mrb[0].mxu0
  %v2776 = vadd.f32 %v2680, %v2775
  %v2777 = vpop.f32.mrb[0].mxu0
  %2778 = vmatprep.mubr.f32.mxu0 0.0
  %2779 = vmatmul.mubr.f32.gmra.mrb[0].mxu0 %v2699
  %v2780 = vpop.f32.mrb[0].mxu0
  %v2781 = vadd.f32 %v2685, %v2780
  %v2782 = vpop.f32.mrb[0].mxu0
  %2783 = vmatprep.mubr.f32.mxu0 0.0
  %2784 = vmatmul.mubr.f32.gmra.mrb[0].mxu0 %v2702
  %v2785 = vpop.f32.mrb[0].mxu0
  %v2786 = vadd.f32 %v2690, %v2785
  %v2787 = vpop.f32.mrb[0].mxu0
  %2788 = vdwg.mxu0
  %2793 = vrot.lane.b32.xlu0 %v2771, 126
  %v2794 = vpop.permute.xlu0 %2793
  %2795 = vrot.lane.b32.xlu0 %v2776, 126
  %v2796 = vpop.permute.xlu0 %2795
  %2797 = vrot.lane.b32.xlu0 %v2781, 126
  %v2798 = vpop.permute.xlu0 %2797
  %2799 = vrot.lane.b32.xlu0 %v2786, 126
  %v2800 = vpop.permute.xlu0 %2799
  %v2805 = vmax.f32 %v2771, %v2794
  %v2806 = vmax.f32 %v2776, %v2796
  %v2807 = vmax.f32 %v2781, %v2798
  %v2808 = vmax.f32 %v2786, %v2800
  %2809 = vrot.lane.b32.xlu0 %v2771, 124
  %v2810 = vpop.permute.xlu0 %2809
  %2811 = vrot.lane.b32.xlu0 %v2776, 124
  %v2812 = vpop.permute.xlu0 %2811
  %2813 = vrot.lane.b32.xlu0 %v2781, 124
  %v2814 = vpop.permute.xlu0 %2813
  %2815 = vrot.lane.b32.xlu0 %v2786, 124
  %v2816 = vpop.permute.xlu0 %2815
  %v2821 = vmax.f32 %v2805, %v2810
  %v2822 = vmax.f32 %v2806, %v2812
  %v2823 = vmax.f32 %v2807, %v2814
  %v2824 = vmax.f32 %v2808, %v2816
  %2825 = vrot.lane.b32.xlu0 %v2771, 122
  %v2826 = vpop.permute.xlu0 %2825
  %2827 = vrot.lane.b32.xlu0 %v2776, 122
  %v2828 = vpop.permute.xlu0 %2827
  %2829 = vrot.lane.b32.xlu0 %v2781, 122
  %v2830 = vpop.permute.xlu0 %2829
  %2831 = vrot.lane.b32.xlu0 %v2786, 122
  %v2832 = vpop.permute.xlu0 %2831
  %v2837 = vmax.f32 %v2821, %v2826
  %v2838 = vmax.f32 %v2822, %v2828
  %v2839 = vmax.f32 %v2823, %v2830
  %v2840 = vmax.f32 %v2824, %v2832
  %2841 = vrot.lane.b32.xlu0 %v2771, 120
  %v2842 = vpop.permute.xlu0 %2841
  %2843 = vrot.lane.b32.xlu0 %v2776, 120
  %v2844 = vpop.permute.xlu0 %2843
  %2845 = vrot.lane.b32.xlu0 %v2781, 120
  %v2846 = vpop.permute.xlu0 %2845
  %2847 = vrot.lane.b32.xlu0 %v2786, 120
  %v2848 = vpop.permute.xlu0 %2847
  %v2853 = vmax.f32 %v2837, %v2842
  %v2854 = vmax.f32 %v2838, %v2844
  %v2855 = vmax.f32 %v2839, %v2846
  %v2856 = vmax.f32 %v2840, %v2848
  %2857 = vrot.lane.b32.xlu0 %v2771, 118
  %v2858 = vpop.permute.xlu0 %2857
  %2859 = vrot.lane.b32.xlu0 %v2776, 118
  %v2860 = vpop.permute.xlu0 %2859
  %2861 = vrot.lane.b32.xlu0 %v2781, 118
  %v2862 = vpop.permute.xlu0 %2861
  %2863 = vrot.lane.b32.xlu0 %v2786, 118
  %v2864 = vpop.permute.xlu0 %2863
  %v2869 = vmax.f32 %v2853, %v2858
  %v2870 = vmax.f32 %v2854, %v2860
  %v2871 = vmax.f32 %v2855, %v2862
  %v2872 = vmax.f32 %v2856, %v2864
  %2873 = vrot.lane.b32.xlu0 %v2771, 116
  %v2874 = vpop.permute.xlu0 %2873
  %2875 = vrot.lane.b32.xlu0 %v2776, 116
  %v2876 = vpop.permute.xlu0 %2875
  %2877 = vrot.lane.b32.xlu0 %v2781, 116
  %v2878 = vpop.permute.xlu0 %2877
  %2879 = vrot.lane.b32.xlu0 %v2786, 116
  %v2880 = vpop.permute.xlu0 %2879
  %v2885 = vmax.f32 %v2869, %v2874
  %v2886 = vmax.f32 %v2870, %v2876
  %v2887 = vmax.f32 %v2871, %v2878
  %v2888 = vmax.f32 %v2872, %v2880
  %2889 = vrot.lane.b32.xlu0 %v2771, 114
  %v2890 = vpop.permute.xlu0 %2889
  %2891 = vrot.lane.b32.xlu0 %v2776, 114
  %v2892 = vpop.permute.xlu0 %2891
  %2893 = vrot.lane.b32.xlu0 %v2781, 114
  %v2894 = vpop.permute.xlu0 %2893
  %2895 = vrot.lane.b32.xlu0 %v2786, 114
  %v2896 = vpop.permute.xlu0 %2895
  %v2901 = vmax.f32 %v2885, %v2890
  %v2902 = vmax.f32 %v2886, %v2892
  %v2903 = vmax.f32 %v2887, %v2894
  %v2904 = vmax.f32 %v2888, %v2896
  %v2905 = vsub.f32 %v2771, %v2901
  %v2906 = vsub.f32 %v2776, %v2902
  %v2907 = vsub.f32 %v2781, %v2903
  %v2908 = vsub.f32 %v2786, %v2904
  %v2909 = vmul.f32 %v2905, 1.442695
  %v2910 = vpow.pop %v2909
  %v2911 = vmul.f32 %v2906, 1.442695
  %v2912 = vpow.pop %v2911
  %v2913 = vmul.f32 %v2907, 1.442695
  %v2914 = vpow.pop %v2913
  %v2915 = vmul.f32 %v2908, 1.442695
  %v2916 = vpow.pop %v2915
  %2921 = vrot.lane.b32.xlu0 %v2901, 2
  %v2922 = vpop.permute.xlu0 %2921
  %2923 = vrot.lane.b32.xlu0 %v2902, 2
  %v2924 = vpop.permute.xlu0 %2923
  %2925 = vrot.lane.b32.xlu0 %v2903, 2
  %v2926 = vpop.permute.xlu0 %2925
  %2927 = vrot.lane.b32.xlu0 %v2904, 2
  %v2928 = vpop.permute.xlu0 %2927
  %v2933 = vsub.f32 %v2771, %v2922
  %v2934 = vsub.f32 %v2776, %v2924
  %v2935 = vsub.f32 %v2781, %v2926
  %v2936 = vsub.f32 %v2786, %v2928
  %v2937 = vmul.f32 %v2933, 1.442695
  %v2938 = vpow.pop %v2937
  %v2939 = vmul.f32 %v2934, 1.442695
  %v2940 = vpow.pop %v2939
  %v2941 = vmul.f32 %v2935, 1.442695
  %v2942 = vpow.pop %v2941
  %v2943 = vmul.f32 %v2936, 1.442695
  %v2944 = vpow.pop %v2943
  %2945 = vrot.lane.b32.xlu0 %v2901, 4
  %v2946 = vpop.permute.xlu0 %2945
  %2947 = vrot.lane.b32.xlu0 %v2902, 4
  %v2948 = vpop.permute.xlu0 %2947
  %2949 = vrot.lane.b32.xlu0 %v2903, 4
  %v2950 = vpop.permute.xlu0 %2949
  %2951 = vrot.lane.b32.xlu0 %v2904, 4
  %v2952 = vpop.permute.xlu0 %2951
  %v2957 = vsub.f32 %v2771, %v2946
  %v2958 = vsub.f32 %v2776, %v2948
  %v2959 = vsub.f32 %v2781, %v2950
  %v2960 = vsub.f32 %v2786, %v2952
  %v2961 = vmul.f32 %v2957, 1.442695
  %v2962 = vpow.pop %v2961
  %v2963 = vmul.f32 %v2958, 1.442695
  %v2964 = vpow.pop %v2963
  %v2965 = vmul.f32 %v2959, 1.442695
  %v2966 = vpow.pop %v2965
  %v2967 = vmul.f32 %v2960, 1.442695
  %v2968 = vpow.pop %v2967
  %2969 = vrot.lane.b32.xlu0 %v2901, 6
  %v2970 = vpop.permute.xlu0 %2969
  %2971 = vrot.lane.b32.xlu0 %v2902, 6
  %v2972 = vpop.permute.xlu0 %2971
  %2973 = vrot.lane.b32.xlu0 %v2903, 6
  %v2974 = vpop.permute.xlu0 %2973
  %2975 = vrot.lane.b32.xlu0 %v2904, 6
  %v2976 = vpop.permute.xlu0 %2975
  %v2981 = vsub.f32 %v2771, %v2970
  %v2982 = vsub.f32 %v2776, %v2972
  %v2983 = vsub.f32 %v2781, %v2974
  %v2984 = vsub.f32 %v2786, %v2976
  %v2985 = vmul.f32 %v2981, 1.442695
  %v2986 = vpow.pop %v2985
  %v2987 = vmul.f32 %v2982, 1.442695
  %v2988 = vpow.pop %v2987
  %v2989 = vmul.f32 %v2983, 1.442695
  %v2990 = vpow.pop %v2989
  %v2991 = vmul.f32 %v2984, 1.442695
  %v2992 = vpow.pop %v2991
  %2993 = vrot.lane.b32.xlu0 %v2901, 8
  %v2994 = vpop.permute.xlu0 %2993
  %2995 = vrot.lane.b32.xlu0 %v2902, 8
  %v2996 = vpop.permute.xlu0 %2995
  %2997 = vrot.lane.b32.xlu0 %v2903, 8
  %v2998 = vpop.permute.xlu0 %2997
  %2999 = vrot.lane.b32.xlu0 %v2904, 8
  %v3000 = vpop.permute.xlu0 %2999
  %v3005 = vsub.f32 %v2771, %v2994
  %v3006 = vsub.f32 %v2776, %v2996
  %v3007 = vsub.f32 %v2781, %v2998
  %v3008 = vsub.f32 %v2786, %v3000
  %v3009 = vmul.f32 %v3005, 1.442695
  %v3010 = vpow.pop %v3009
  %v3011 = vmul.f32 %v3006, 1.442695
  %v3012 = vpow.pop %v3011
  %v3013 = vmul.f32 %v3007, 1.442695
  %v3014 = vpow.pop %v3013
  %v3015 = vmul.f32 %v3008, 1.442695
  %v3016 = vpow.pop %v3015
  %3017 = vrot.lane.b32.xlu0 %v2901, 10
  %v3018 = vpop.permute.xlu0 %3017
  %3019 = vrot.lane.b32.xlu0 %v2902, 10
  %v3020 = vpop.permute.xlu0 %3019
  %3021 = vrot.lane.b32.xlu0 %v2903, 10
  %v3022 = vpop.permute.xlu0 %3021
  %3023 = vrot.lane.b32.xlu0 %v2904, 10
  %v3024 = vpop.permute.xlu0 %3023
  %v3029 = vsub.f32 %v2771, %v3018
  %v3030 = vsub.f32 %v2776, %v3020
  %v3031 = vsub.f32 %v2781, %v3022
  %v3032 = vsub.f32 %v2786, %v3024
  %v3033 = vmul.f32 %v3029, 1.442695
  %v3034 = vpow.pop %v3033
  %v3035 = vmul.f32 %v3030, 1.442695
  %v3036 = vpow.pop %v3035
  %v3037 = vmul.f32 %v3031, 1.442695
  %v3038 = vpow.pop %v3037
  %v3039 = vmul.f32 %v3032, 1.442695
  %v3040 = vpow.pop %v3039
  %3041 = vrot.lane.b32.xlu0 %v2901, 12
  %v3042 = vpop.permute.xlu0 %3041
  %3043 = vrot.lane.b32.xlu0 %v2902, 12
  %v3044 = vpop.permute.xlu0 %3043
  %3045 = vrot.lane.b32.xlu0 %v2903, 12
  %v3046 = vpop.permute.xlu0 %3045
  %3047 = vrot.lane.b32.xlu0 %v2904, 12
  %v3048 = vpop.permute.xlu0 %3047
  %v3053 = vsub.f32 %v2771, %v3042
  %v3054 = vsub.f32 %v2776, %v3044
  %v3055 = vsub.f32 %v2781, %v3046
  %v3056 = vsub.f32 %v2786, %v3048
  %v3057 = vmul.f32 %v3053, 1.442695
  %v3058 = vpow.pop %v3057
  %v3059 = vmul.f32 %v3054, 1.442695
  %v3060 = vpow.pop %v3059
  %v3061 = vmul.f32 %v3055, 1.442695
  %v3062 = vpow.pop %v3061
  %v3063 = vmul.f32 %v3056, 1.442695
  %v3064 = vpow.pop %v3063
  %3065 = vrot.lane.b32.xlu0 %v2901, 14
  %v3066 = vpop.permute.xlu0 %3065
  %3067 = vrot.lane.b32.xlu0 %v2902, 14
  %v3068 = vpop.permute.xlu0 %3067
  %3069 = vrot.lane.b32.xlu0 %v2903, 14
  %v3070 = vpop.permute.xlu0 %3069
  %3071 = vrot.lane.b32.xlu0 %v2904, 14
  %v3072 = vpop.permute.xlu0 %3071
  %v3077 = vsub.f32 %v2771, %v3066
  %v3078 = vsub.f32 %v2776, %v3068
  %v3079 = vsub.f32 %v2781, %v3070
  %v3080 = vsub.f32 %v2786, %v3072
  %v3081 = vmul.f32 %v3077, 1.442695
  %v3082 = vpow.pop %v3081
  %v3083 = vmul.f32 %v3078, 1.442695
  %v3084 = vpow.pop %v3083
  %v3085 = vmul.f32 %v3079, 1.442695
  %v3086 = vpow.pop %v3085
  %v3087 = vmul.f32 %v3080, 1.442695
  %v3088 = vpow.pop %v3087
  %3093 = vrot.lane.b32.xlu0 %v2938, 126
  %v3094 = vpop.permute.xlu0 %3093
  %3095 = vrot.lane.b32.xlu0 %v2940, 126
  %v3096 = vpop.permute.xlu0 %3095
  %3097 = vrot.lane.b32.xlu0 %v2942, 126
  %v3098 = vpop.permute.xlu0 %3097
  %3099 = vrot.lane.b32.xlu0 %v2944, 126
  %v3100 = vpop.permute.xlu0 %3099
  %v3105 = vadd.f32 %v2910, %v3094
  %v3106 = vadd.f32 %v2912, %v3096
  %v3107 = vadd.f32 %v2914, %v3098
  %v3108 = vadd.f32 %v2916, %v3100
  %3113 = vrot.lane.b32.xlu0 %v2962, 124
  %v3114 = vpop.permute.xlu0 %3113
  %3115 = vrot.lane.b32.xlu0 %v2964, 124
  %v3116 = vpop.permute.xlu0 %3115
  %3117 = vrot.lane.b32.xlu0 %v2966, 124
  %v3118 = vpop.permute.xlu0 %3117
  %3119 = vrot.lane.b32.xlu0 %v2968, 124
  %v3120 = vpop.permute.xlu0 %3119
  %v3125 = vadd.f32 %v3105, %v3114
  %v3126 = vadd.f32 %v3106, %v3116
  %v3127 = vadd.f32 %v3107, %v3118
  %v3128 = vadd.f32 %v3108, %v3120
  %3133 = vrot.lane.b32.xlu0 %v2986, 122
  %v3134 = vpop.permute.xlu0 %3133
  %3135 = vrot.lane.b32.xlu0 %v2988, 122
  %v3136 = vpop.permute.xlu0 %3135
  %3137 = vrot.lane.b32.xlu0 %v2990, 122
  %v3138 = vpop.permute.xlu0 %3137
  %3139 = vrot.lane.b32.xlu0 %v2992, 122
  %v3140 = vpop.permute.xlu0 %3139
  %v3145 = vadd.f32 %v3125, %v3134
  %v3146 = vadd.f32 %v3126, %v3136
  %v3147 = vadd.f32 %v3127, %v3138
  %v3148 = vadd.f32 %v3128, %v3140
  %3153 = vrot.lane.b32.xlu0 %v3010, 120
  %v3154 = vpop.permute.xlu0 %3153
  %3155 = vrot.lane.b32.xlu0 %v3012, 120
  %v3156 = vpop.permute.xlu0 %3155
  %3157 = vrot.lane.b32.xlu0 %v3014, 120
  %v3158 = vpop.permute.xlu0 %3157
  %3159 = vrot.lane.b32.xlu0 %v3016, 120
  %v3160 = vpop.permute.xlu0 %3159
  %v3165 = vadd.f32 %v3145, %v3154
  %v3166 = vadd.f32 %v3146, %v3156
  %v3167 = vadd.f32 %v3147, %v3158
  %v3168 = vadd.f32 %v3148, %v3160
  %3173 = vrot.lane.b32.xlu0 %v3034, 118
  %v3174 = vpop.permute.xlu0 %3173
  %3175 = vrot.lane.b32.xlu0 %v3036, 118
  %v3176 = vpop.permute.xlu0 %3175
  %3177 = vrot.lane.b32.xlu0 %v3038, 118
  %v3178 = vpop.permute.xlu0 %3177
  %3179 = vrot.lane.b32.xlu0 %v3040, 118
  %v3180 = vpop.permute.xlu0 %3179
  %v3185 = vadd.f32 %v3165, %v3174
  %v3186 = vadd.f32 %v3166, %v3176
  %v3187 = vadd.f32 %v3167, %v3178
  %v3188 = vadd.f32 %v3168, %v3180
  %3193 = vrot.lane.b32.xlu0 %v3058, 116
  %v3194 = vpop.permute.xlu0 %3193
  %3195 = vrot.lane.b32.xlu0 %v3060, 116
  %v3196 = vpop.permute.xlu0 %3195
  %3197 = vrot.lane.b32.xlu0 %v3062, 116
  %v3198 = vpop.permute.xlu0 %3197
  %3199 = vrot.lane.b32.xlu0 %v3064, 116
  %v3200 = vpop.permute.xlu0 %3199
  %v3205 = vadd.f32 %v3185, %v3194
  %v3206 = vadd.f32 %v3186, %v3196
  %v3207 = vadd.f32 %v3187, %v3198
  %v3208 = vadd.f32 %v3188, %v3200
  %3213 = vrot.lane.b32.xlu0 %v3082, 114
  %v3214 = vpop.permute.xlu0 %3213
  %3215 = vrot.lane.b32.xlu0 %v3084, 114
  %v3216 = vpop.permute.xlu0 %3215
  %3217 = vrot.lane.b32.xlu0 %v3086, 114
  %v3218 = vpop.permute.xlu0 %3217
  %3219 = vrot.lane.b32.xlu0 %v3088, 114
  %v3220 = vpop.permute.xlu0 %3219
  %v3225 = vadd.f32 %v3205, %v3214
  %v3226 = vadd.f32 %v3206, %v3216
  %v3227 = vadd.f32 %v3207, %v3218
  %v3228 = vadd.f32 %v3208, %v3220
  %v3229 = vrcp.pop %v3225
  %v3230 = vrcp.pop %v3226
  %v3231 = vrcp.pop %v3227
  %v3232 = vrcp.pop %v3228
  %v3233 = vmul.f32 %v2910, %v416
  %v3234 = vmul.f32 %v2912, %v417
  %v3235 = vmul.f32 %v2914, %v418
  %v3236 = vmul.f32 %v2916, %v419
  %v3237 = vmul.f32 %v2938, %v784
  %v3238 = vmul.f32 %v2940, %v786
  %v3239 = vmul.f32 %v2942, %v788
  %v3240 = vmul.f32 %v2944, %v790
  %3245 = vrot.lane.b32.xlu0 %v3237, 126
  %v3246 = vpop.permute.xlu0 %3245
  %3247 = vrot.lane.b32.xlu0 %v3238, 126
  %v3248 = vpop.permute.xlu0 %3247
  %3249 = vrot.lane.b32.xlu0 %v3239, 126
  %v3250 = vpop.permute.xlu0 %3249
  %3251 = vrot.lane.b32.xlu0 %v3240, 126
  %v3252 = vpop.permute.xlu0 %3251
  %v3257 = vadd.f32 %v3233, %v3246
  %v3258 = vadd.f32 %v3234, %v3248
  %v3259 = vadd.f32 %v3235, %v3250
  %v3260 = vadd.f32 %v3236, %v3252
  %v3261 = vmul.f32 %v2962, %v1094
  %v3262 = vmul.f32 %v2964, %v1096
  %v3263 = vmul.f32 %v2966, %v1098
  %v3264 = vmul.f32 %v2968, %v1100
  %3269 = vrot.lane.b32.xlu0 %v3261, 124
  %v3270 = vpop.permute.xlu0 %3269
  %3271 = vrot.lane.b32.xlu0 %v3262, 124
  %v3272 = vpop.permute.xlu0 %3271
  %3273 = vrot.lane.b32.xlu0 %v3263, 124
  %v3274 = vpop.permute.xlu0 %3273
  %3275 = vrot.lane.b32.xlu0 %v3264, 124
  %v3276 = vpop.permute.xlu0 %3275
  %v3281 = vadd.f32 %v3257, %v3270
  %v3282 = vadd.f32 %v3258, %v3272
  %v3283 = vadd.f32 %v3259, %v3274
  %v3284 = vadd.f32 %v3260, %v3276
  %v3285 = vmul.f32 %v2986, %v1404
  %v3286 = vmul.f32 %v2988, %v1406
  %v3287 = vmul.f32 %v2990, %v1408
  %v3288 = vmul.f32 %v2992, %v1410
  %3293 = vrot.lane.b32.xlu0 %v3285, 122
  %v3294 = vpop.permute.xlu0 %3293
  %3295 = vrot.lane.b32.xlu0 %v3286, 122
  %v3296 = vpop.permute.xlu0 %3295
  %3297 = vrot.lane.b32.xlu0 %v3287, 122
  %v3298 = vpop.permute.xlu0 %3297
  %3299 = vrot.lane.b32.xlu0 %v3288, 122
  %v3300 = vpop.permute.xlu0 %3299
  %v3305 = vadd.f32 %v3281, %v3294
  %v3306 = vadd.f32 %v3282, %v3296
  %v3307 = vadd.f32 %v3283, %v3298
  %v3308 = vadd.f32 %v3284, %v3300
  %v3309 = vmul.f32 %v3010, %v1714
  %v3310 = vmul.f32 %v3012, %v1716
  %v3311 = vmul.f32 %v3014, %v1718
  %v3312 = vmul.f32 %v3016, %v1720
  %3317 = vrot.lane.b32.xlu0 %v3309, 120
  %v3318 = vpop.permute.xlu0 %3317
  %3319 = vrot.lane.b32.xlu0 %v3310, 120
  %v3320 = vpop.permute.xlu0 %3319
  %3321 = vrot.lane.b32.xlu0 %v3311, 120
  %v3322 = vpop.permute.xlu0 %3321
  %3323 = vrot.lane.b32.xlu0 %v3312, 120
  %v3324 = vpop.permute.xlu0 %3323
  %v3329 = vadd.f32 %v3305, %v3318
  %v3330 = vadd.f32 %v3306, %v3320
  %v3331 = vadd.f32 %v3307, %v3322
  %v3332 = vadd.f32 %v3308, %v3324
  %v3333 = vmul.f32 %v3034, %v2024
  %v3334 = vmul.f32 %v3036, %v2026
  %v3335 = vmul.f32 %v3038, %v2028
  %v3336 = vmul.f32 %v3040, %v2030
  %3341 = vrot.lane.b32.xlu0 %v3333, 118
  %v3342 = vpop.permute.xlu0 %3341
  %3343 = vrot.lane.b32.xlu0 %v3334, 118
  %v3344 = vpop.permute.xlu0 %3343
  %3345 = vrot.lane.b32.xlu0 %v3335, 118
  %v3346 = vpop.permute.xlu0 %3345
  %3347 = vrot.lane.b32.xlu0 %v3336, 118
  %v3348 = vpop.permute.xlu0 %3347
  %v3353 = vadd.f32 %v3329, %v3342
  %v3354 = vadd.f32 %v3330, %v3344
  %v3355 = vadd.f32 %v3331, %v3346
  %v3356 = vadd.f32 %v3332, %v3348
  %v3357 = vmul.f32 %v3058, %v2334
  %v3358 = vmul.f32 %v3060, %v2336
  %v3359 = vmul.f32 %v3062, %v2338
  %v3360 = vmul.f32 %v3064, %v2340
  %3365 = vrot.lane.b32.xlu0 %v3357, 116
  %v3366 = vpop.permute.xlu0 %3365
  %3367 = vrot.lane.b32.xlu0 %v3358, 116
  %v3368 = vpop.permute.xlu0 %3367
  %3369 = vrot.lane.b32.xlu0 %v3359, 116
  %v3370 = vpop.permute.xlu0 %3369
  %3371 = vrot.lane.b32.xlu0 %v3360, 116
  %v3372 = vpop.permute.xlu0 %3371
  %v3377 = vadd.f32 %v3353, %v3366
  %v3378 = vadd.f32 %v3354, %v3368
  %v3379 = vadd.f32 %v3355, %v3370
  %v3380 = vadd.f32 %v3356, %v3372
  %v3381 = vmul.f32 %v3082, %v2644
  %v3382 = vmul.f32 %v3084, %v2646
  %v3383 = vmul.f32 %v3086, %v2648
  %v3384 = vmul.f32 %v3088, %v2650
  %3389 = vrot.lane.b32.xlu0 %v3381, 114
  %v3390 = vpop.permute.xlu0 %3389
  %3391 = vrot.lane.b32.xlu0 %v3382, 114
  %v3392 = vpop.permute.xlu0 %3391
  %3393 = vrot.lane.b32.xlu0 %v3383, 114
  %v3394 = vpop.permute.xlu0 %3393
  %3395 = vrot.lane.b32.xlu0 %v3384, 114
  %v3396 = vpop.permute.xlu0 %3395
  %v3401 = vadd.f32 %v3377, %v3390
  %v3402 = vadd.f32 %v3378, %v3392
  %v3403 = vadd.f32 %v3379, %v3394
  %v3404 = vadd.f32 %v3380, %v3396
  %v3405 = vmul.f32 %v3401, %v3229
  %v3406 = vmul.f32 %v3402, %v3230
  %v3407 = vmul.f32 %v3403, %v3231
  %v3408 = vmul.f32 %v3404, %v3232
  %v3409 = vld [vmem:[%s6] sm:$0x3f]
  %v3410 = vld [vmem:[%s7] sm:$0x3f]
  %3412 = vset.pattern.permute.xlu0 0
  %3413 = vperm.xlu0 %3412, %v3410
  %v3414 = vpop.permute.xlu0 %3413
  %v3417 = vsel %vm489, %v3409, 0
  %3419 = vmatprep.subr.mxu0 0.0
  %3420 = vmatpush1.msra.mxu0 %v3405
  %3421 = vmatprep.subr.mxu0 0.0
  %3422 = vmatpush1.msra.mxu0 %v3406
  %3423 = vmatprep.subr.mxu0 0.0
  %3424 = vmatpush1.msra.mxu0 %v3407
  %3425 = vmatprep.subr.mxu0 0.0
  %3426 = vmatpush1.msra.mxu0 %v3408
  %3427 = vmatprep.subr.mxu0 0.0
  %3428 = vmatpush1.msra.mxu0 0.0
  %3429 = vmatprep.subr.mxu0 0.0
  %3430 = vmatpush1.msra.mxu0 0.0
  %3431 = vmatprep.subr.mxu0 0.0
  %3432 = vmatpush1.msra.mxu0 0.0
  %3433 = vmatprep.subr.mxu0 0.0
  %3434 = vmatpush1.msra.mxu0 0.0
  %3435 = vmatprep.subr.mxu0 0.0
  %3436 = vmatpush1.msra.mxu0 0.0
  %3437 = vmatprep.subr.mxu0 0.0
  %3438 = vmatpush1.msra.mxu0 0.0
  %3439 = vmatprep.subr.mxu0 0.0
  %3440 = vmatpush1.msra.mxu0 0.0
  %3441 = vmatprep.subr.mxu0 0.0
  %3442 = vmatpush1.msra.mxu0 0.0
  %3443 = vmatprep.subr.mxu0 0.0
  %3444 = vmatpush1.msra.mxu0 0.0
  %3445 = vmatprep.subr.mxu0 0.0
  %3446 = vmatpush1.msra.mxu0 0.0
  %3447 = vmatprep.subr.mxu0 0.0
  %3448 = vmatpush1.msra.mxu0 0.0
  %3449 = vmatprep.subr.mxu0 0.0
  %3450 = vmatpush1.msra.mxu0 0.0
  %3451 = vmatprep.subr.mxu0 0.0
  %3452 = vmatpush1.msra.mxu0 0.0
  %3453 = vmatprep.subr.mxu0 0.0
  %3454 = vmatpush1.msra.mxu0 0.0
  %3455 = vmatprep.subr.mxu0 0.0
  %3456 = vmatpush1.msra.mxu0 0.0
  %3457 = vmatprep.subr.mxu0 0.0
  %3458 = vmatpush1.msra.mxu0 0.0
  %3459 = vmatprep.subr.mxu0 0.0
  %3460 = vmatpush1.msra.mxu0 0.0
  %3461 = vmatprep.subr.mxu0 0.0
  %3462 = vmatpush1.msra.mxu0 0.0
  %3463 = vmatprep.subr.mxu0 0.0
  %3464 = vmatpush1.msra.mxu0 0.0
  %3465 = vmatprep.subr.mxu0 0.0
  %3466 = vmatpush1.msra.mxu0 0.0
  %3467 = vmatprep.subr.mxu0 0.0
  %3468 = vmatpush1.msra.mxu0 0.0
  %3469 = vmatprep.subr.mxu0 0.0
  %3470 = vmatpush1.msra.mxu0 0.0
  %3471 = vmatprep.subr.mxu0 0.0
  %3472 = vmatpush1.msra.mxu0 0.0
  %3473 = vmatprep.subr.mxu0 0.0
  %3474 = vmatpush1.msra.mxu0 0.0
  %3475 = vmatprep.subr.mxu0 0.0
  %3476 = vmatpush1.msra.mxu0 0.0
  %3477 = vmatprep.subr.mxu0 0.0
  %3478 = vmatpush1.msra.mxu0 0.0
  %3479 = vmatprep.subr.mxu0 0.0
  %3480 = vmatpush1.msra.mxu0 0.0
  %3481 = vmatprep.subr.mxu0 0.0
  %3482 = vmatpush1.msra.mxu0 0.0
  %3483 = vmatprep.mubr.f32.mxu0 0.0
  %3484 = vmatmul.mubr.f32.gmra.mrb[0].mxu0 %v3417
  %v3485 = vpop.f32.mrb[0].mxu0
  %v3486 = vadd.f32 %v3414, %v3485
  %v3487 = vpop.f32.mrb[0].mxu0
  %3488 = vdwg.mxu0
  %vm3489 = vcmask 13312
  %3490 = vst.msk [vmem:[%s8] sm:$0x3f] %vm3489, %v3486
  // Predicated region
  $region34: #{tpu_custom_call.1} parent=0 // pred_check
    _
  $region35: #{tpu_custom_call.1} parent=0 // pred_check_branch
    %3492 = sbr.rel (0) target = $region37
  $region36: #{tpu_custom_call.1} parent=0 // pred_region
    _
  $region37: #{tpu_custom_call.1} parent=0 // pred_fallthru
    _
  // Predicated region
  $region38: #{tpu_custom_call.1} parent=0 // pred_check
    _
  $region39: #{tpu_custom_call.1} parent=0 // pred_check_branch
    %3494 = sbr.rel (0) target = $region41
  $region40: #{tpu_custom_call.1} parent=0 // pred_region
    _
  $region41: #{tpu_custom_call.1} parent=0 // pred_fallthru
    _

</llo_original>
